<compile_context>
chip_gen: v7x
topology: tpu7x:2x2x1
jax: 0.10.0
libtpu: 0.0.40
codegen_flags: <defaults>
</compile_context>

<pallas_src>
import functools

import jax
import jax.numpy as jnp
from jax.experimental import pallas as pl
from jax.experimental.pallas import tpu as pltpu


def _attention_kernel(x_ref, wqkv_ref, wo_ref, bo_ref, o_ref, *,
                      n_heads, d_qkv, compute_dtype):
    """One grid step = `Bt` batch elements, end to end.

    x_ref    : (Bt, N, C)
    wqkv_ref : (H, C, 3*D)   head-major fused [Wq*scale | Wk | Wv]
    wo_ref   : (H, D, C)
    bo_ref   : (1, C)        f32
    o_ref    : (Bt, N, C)
    """
    Bt, N, C = x_ref.shape
    H, D = n_heads, d_qkv
    M = Bt * N        # rows processed this step
    G = H * Bt        # batched (head, batch-element) attention problems

    # ---- head-batched fused Q/K/V projection (MXU, f32 accumulation) -------
    x2 = x_ref[...].reshape(M, C)                       # merge leading dims only
    xb = jnp.broadcast_to(x2, (H, M, C))                # leading-dim broadcast
    qkv = jnp.einsum('hmc,hcd->hmd', xb, wqkv_ref[...],
                     preferred_element_type=jnp.float32)          # (H, M, 3D)
    qkv = qkv.astype(compute_dtype)                     # bf16 operands downstream

    # Per-head lane split (softmax scale already folded into the q columns), then
    # row-major-compatible leading-dim reshape (H, Bt*N, D) -> (H*Bt, N, D).
    q = qkv[:, :, :D].reshape(G, N, D)
    k = qkv[:, :, D:2 * D].reshape(G, N, D)
    v = qkv[:, :, 2 * D:].reshape(G, N, D)

    # ---- attention core, batched over (head, batch element) ----------------
    s = jnp.einsum('gqd,gkd->gqk', q, k,
                   preferred_element_type=jnp.float32)            # (G, N, N) f32
    # Numerically stable softmax; max/exp/sum kept in f32.
    s = s - jnp.max(s, axis=-1, keepdims=True)
    e = jnp.exp(s)
    denom = jnp.sum(e, axis=-1, keepdims=True)                    # (G, N, 1) f32
    # attn_drop: identity in eval mode.
    ctx = jnp.einsum('gqk,gkd->gqd', e.astype(compute_dtype), v,
                     preferred_element_type=jnp.float32)          # (G, N, D) f32
    # Deferred normalization on the (N, D) context; EUP approx reciprocal.
    ctx = ctx * pl.reciprocal(denom, approx=True)

    # ---- feed_forward: sum_h ctx_h @ Wo_h + b (Dropout = identity) ---------
    ctx_h = ctx.reshape(H, M, D).astype(compute_dtype)
    outp = jnp.einsum('hmd,hdc->hmc', ctx_h, wo_ref[...],
                      preferred_element_type=jnp.float32)         # (H, M, C) f32
    out = outp[0]
    for h in range(1, H):                 # tiny static unroll; plain VPU adds
        out = out + outp[h]
    out = out + bo_ref[...]               # (M, C) + (1, C), f32
    o_ref[...] = out.reshape(Bt, N, C).astype(o_ref.dtype)


def _largest_divisor_at_most(n, m):
    for d in range(min(n, m), 0, -1):
        if n % d == 0:
            return d
    return 1


def attention_forward(x, wq, wk, wv, wo, bo, *, n_heads, d_qkv,
                      compute_dtype=jnp.bfloat16, block_batch=None):
    """Pallas forward of `Attention` (eval mode).

    compute_dtype: operand dtype for all matmuls (accumulation always f32).
      bf16 (default) runs the MXU at full rate on v5e/v6e/v7x; pass jnp.float32
      for a bit-tighter reference path.
    block_batch: batch elements per grid step (must divide B). Default keeps
      >=2 grid steps when B >= 2 (feeds both v7x TensorCores) while still
      batching rows for the projections.
    """
    B, N, C = x.shape
    H, D = n_heads, d_qkv
    HD = H * D
    assert wq.shape == (C, HD) and wk.shape == (C, HD) and wv.shape == (C, HD)
    assert wo.shape == (HD, C) and bo.shape == (1, C)

    out_dtype = x.dtype

    if block_batch is None:
        block_batch = _largest_divisor_at_most(B, max(1, B // 2))
    else:
        assert B % block_batch == 0, "block_batch must divide the batch size"
    Bt = block_batch
    grid = (B // Bt,)

    # Fold the softmax scale into Wq and repack the projections head-major:
    # wqkv[h] = [Wq_h * (1/sqrt(D)) | Wk_h | Wv_h], shape (H, C, 3D).
    wq_s = wq * (1.0 / float(D) ** 0.5)
    wqkv = jnp.stack(
        [jnp.concatenate([wq_s[:, h * D:(h + 1) * D],
                          wk[:, h * D:(h + 1) * D],
                          wv[:, h * D:(h + 1) * D]], axis=1)
         for h in range(H)], axis=0)                     # (H, C, 3D)
    wo3 = wo.reshape(H, D, C)                            # (H, D, C)

    x_c = x.astype(compute_dtype)
    wqkv = wqkv.astype(compute_dtype)
    wo3 = wo3.astype(compute_dtype)
    bo_f = bo.astype(jnp.float32)      # bias added after f32 accumulation

    kernel = functools.partial(_attention_kernel, n_heads=H, d_qkv=D,
                               compute_dtype=compute_dtype)

    # VMEM budget from the per-step working set (x2 slack), clamped 32..100 MiB.
    # v7x note: physical VMEM is 64 MiB; large N needs flash-style kv tiling (TODO).
    cb = jnp.dtype(compute_dtype).itemsize
    ob = jnp.dtype(out_dtype).itemsize
    M, G = Bt * N, H * Bt
    work = (
        2 * (Bt * N * C) * (cb + ob)            # x / out blocks (pipeline buffers)
        + H * M * C * cb                        # broadcast x operand
        + H * M * 3 * D * (4 + cb)              # qkv f32 + compute-dtype copy
        + 2 * G * N * N * 4                     # scores + exp, f32
        + G * N * D * (4 + cb)                  # ctx f32 + compute-dtype copy
        + H * M * C * 4                         # per-head projection partials, f32
        + 2 * (H * C * 3 * D + H * D * C) * cb + 4 * C   # weights
    )
    vmem_limit = int(min(100 * 2 ** 20, max(32 * 2 ** 20, 2 * work)))

    def build_and_run(single_buffer_weights):
        wkw = dict(pipeline_mode=pl.Buffered(1)) if single_buffer_weights else {}
        call = pl.pallas_call(
            kernel,
            out_shape=jax.ShapeDtypeStruct((B, N, C), out_dtype),
            grid=grid,
            in_specs=[
                pl.BlockSpec((Bt, N, C), lambda b: (b, 0, 0)),            # x block
                pl.BlockSpec((H, C, 3 * D), lambda b: (0, 0, 0), **wkw),  # fused Wqkv
                pl.BlockSpec((H, D, C), lambda b: (0, 0, 0), **wkw),      # Wo
                pl.BlockSpec((1, C), lambda b: (0, 0), **wkw),            # bias
            ],
            out_specs=pl.BlockSpec((Bt, N, C), lambda b: (b, 0, 0)),
            compiler_params=pltpu.CompilerParams(
                dimension_semantics=("parallel",),
                vmem_limit_bytes=vmem_limit,
            ),
        )
        return call(x_c, wqkv, wo3, bo_f)

    try:
        # Constant-index weights only need a single buffer (saves VMEM vs the
        # default double buffering).
        return build_and_run(True)
    except Exception:
        # TODO(synk): pl.Buffered(1) single-buffering not accepted by this jax
        # version; fall back to default double-buffered weight blocks.
        return build_and_run(False)


def reference_forward(x, wq, wk, wv, wo, bo, *, n_heads, d_qkv):
    """Pure-JAX reference mirroring the PyTorch forward (eval mode)."""
    B, N, C = x.shape
    q = jnp.einsum('bnc,ch->bnh', x, wq).reshape(B, N, n_heads, d_qkv).transpose(0, 2, 1, 3)
    k = jnp.einsum('bnc,ch->bnh', x, wk).reshape(B, N, n_heads, d_qkv).transpose(0, 2, 1, 3)
    v = jnp.einsum('bnc,ch->bnh', x, wv).reshape(B, N, n_heads, d_qkv).transpose(0, 2, 1, 3)
    s = jnp.einsum('bhnd,bhmd->bhnm', q, k) / (d_qkv ** 0.5)
    p = jax.nn.softmax(s, axis=-1)
    o = jnp.einsum('bhnm,bhmd->bhnd', p, v)
    o = o.transpose(0, 2, 1, 3).reshape(B, N, n_heads * d_qkv)
    return jnp.einsum('bnh,hc->bnc', o, wo) + bo[0]


if __name__ == "__main__":
    # Small shapes consistent with the module (B=4 exercises multi-batch blocks
    # while keeping >=2 parallel grid steps).
    B, N = 4, 8               # batch, num_features (sequence length)
    input_dim = 32
    n_heads = 4
    d_qkv = 16
    HD = n_heads * d_qkv

    key = jax.random.PRNGKey(0)
    kq, kk, kv, kw, kb, kx = jax.random.split(key, 6)

    # Deterministic "kaiming_uniform"-style init for Q/K/V embedding weights.
    bound_qkv = (6.0 / HD) ** 0.5
    wq = jax.random.uniform(kq, (input_dim, HD), jnp.float32, -bound_qkv, bound_qkv)
    wk = jax.random.uniform(kk, (input_dim, HD), jnp.float32, -bound_qkv, bound_qkv)
    wv = jax.random.uniform(kv, (input_dim, HD), jnp.float32, -bound_qkv, bound_qkv)

    # nn.Linear(HD -> input_dim) default init.
    bound_lin = 1.0 / (HD ** 0.5)
    wo = jax.random.uniform(kw, (HD, input_dim), jnp.float32, -bound_lin, bound_lin)
    bo = jax.random.uniform(kb, (1, input_dim), jnp.float32, -bound_lin, bound_lin)

    x = jax.random.normal(kx, (B, N, input_dim), jnp.float32)

    ref = reference_forward(x, wq, wk, wv, wo, bo, n_heads=n_heads, d_qkv=d_qkv)

    # f32-operand path: tight tolerance (only the EUP approx reciprocal differs).
    out_f32 = attention_forward(x, wq, wk, wv, wo, bo, n_heads=n_heads, d_qkv=d_qkv,
                                compute_dtype=jnp.float32)
    out_f32 = jax.block_until_ready(out_f32)
    assert out_f32.shape == (B, N, input_dim)
    assert jnp.allclose(out_f32, ref, atol=5e-3, rtol=5e-3), "f32 path mismatch vs JAX reference"

    # Default bf16-operand path (f32 accumulation) — the production configuration.
    out_bf16 = attention_forward(x, wq, wk, wv, wo, bo, n_heads=n_heads, d_qkv=d_qkv)
    out_bf16 = jax.block_until_ready(out_bf16)
    max_err = float(jnp.max(jnp.abs(out_bf16 - ref)))
    assert jnp.allclose(out_bf16, ref, atol=7e-2, rtol=7e-2), (
        f"bf16 path mismatch vs JAX reference (max abs err {max_err})")

    print("KERNEL_OK")
</pallas_src>

<mosaic_0001>
module attributes {stable_mosaic.version = 11 : i64} {
  func.func @_attention_kernel(%arg0: i32, %arg1: memref<2x8x32xf32, #tpu.memory_space<vmem>>, %arg2: memref<4x32x48xf32, #tpu.memory_space<vmem>>, %arg3: memref<4x16x32xf32, #tpu.memory_space<vmem>>, %arg4: memref<1x32xf32, #tpu.memory_space<vmem>>, %arg5: memref<2x8x32xf32, #tpu.memory_space<vmem>>) attributes {dimension_semantics = [#tpu.dimension_semantics<parallel>], iteration_bounds = array<i64: 2>, scalar_prefetch = 0 : i64, scratch_operands = 0 : i64, tpu.core_type = #tpu.core_type<tc>, window_params = [{transform_indices = @transform_0, window_bounds = array<i64: 2, 8, 32>}, {pipeline_mode = #tpu.pipeline_mode<synchronous>, transform_indices = @transform_1, window_bounds = array<i64: 4, 32, 48>}, {pipeline_mode = #tpu.pipeline_mode<synchronous>, transform_indices = @transform_2, window_bounds = array<i64: 4, 16, 32>}, {pipeline_mode = #tpu.pipeline_mode<synchronous>, transform_indices = @transform_3, window_bounds = array<i64: 1, 32>}, {transform_indices = @transform_4, window_bounds = array<i64: 2, 8, 32>}]} {
    %c0 = arith.constant 0 : index
    %c0_0 = arith.constant 0 : index
    %c0_1 = arith.constant 0 : index
    %0 = vector.load %arg1[%c0, %c0_0, %c0_1] : memref<2x8x32xf32, #tpu.memory_space<vmem>>, vector<2x8x32xf32>
    %1 = vector.shape_cast %0 : vector<2x8x32xf32> to vector<16x32xf32>
    %2 = vector.shape_cast %1 : vector<16x32xf32> to vector<1x16x32xf32>
    %3 = vector.broadcast %2 : vector<1x16x32xf32> to vector<4x16x32xf32>
    %c0_2 = arith.constant 0 : index
    %c0_3 = arith.constant 0 : index
    %c0_4 = arith.constant 0 : index
    %4 = vector.load %arg2[%c0_2, %c0_3, %c0_4] : memref<4x32x48xf32, #tpu.memory_space<vmem>>, vector<4x32x48xf32>
    "tpu.trace_start"() <{level = 10 : i32, message = "hmc,hcd->hmd"}> : () -> ()
    %cst = arith.constant dense<0.000000e+00> : vector<4x16x48xf32>
    %5 = tpu.matmul %3, %4, %cst {dimension_numbers = #tpu.dot_dimension_numbers<[2], [1], [1], [2], [0, 0, 0, 1, 1, 2], [0], [0]>} : vector<4x16x32xf32>, vector<4x32x48xf32>, vector<4x16x48xf32> -> vector<4x16x48xf32>
    "tpu.trace_stop"() : () -> ()
    %6 = vector.extract_strided_slice %5 {offsets = [0, 0, 0], sizes = [4, 16, 16], strides = [1, 1, 1]} : vector<4x16x48xf32> to vector<4x16x16xf32>
    %7 = vector.shape_cast %6 : vector<4x16x16xf32> to vector<8x8x16xf32>
    %8 = vector.extract_strided_slice %5 {offsets = [0, 0, 16], sizes = [4, 16, 16], strides = [1, 1, 1]} : vector<4x16x48xf32> to vector<4x16x16xf32>
    %9 = vector.shape_cast %8 : vector<4x16x16xf32> to vector<8x8x16xf32>
    %10 = vector.extract_strided_slice %5 {offsets = [0, 0, 32], sizes = [4, 16, 16], strides = [1, 1, 1]} : vector<4x16x48xf32> to vector<4x16x16xf32>
    %11 = vector.shape_cast %10 : vector<4x16x16xf32> to vector<8x8x16xf32>
    "tpu.trace_start"() <{level = 10 : i32, message = "gqd,gkd->gqk"}> : () -> ()
    %cst_5 = arith.constant dense<0.000000e+00> : vector<8x8x8xf32>
    %12 = tpu.matmul %7, %9, %cst_5 {dimension_numbers = #tpu.dot_dimension_numbers<[2], [2], [1], [1], [0, 0, 0, 1, 1, 1], [0], [0]>} : vector<8x8x16xf32>, vector<8x8x16xf32>, vector<8x8x8xf32> -> vector<8x8x8xf32>
    "tpu.trace_stop"() : () -> ()
    %cst_6 = arith.constant dense<0xFF800000> : vector<8x8xf32>
    %13 = vector.multi_reduction <maximumf>, %12, %cst_6 [2] : vector<8x8x8xf32> to vector<8x8xf32>
    %14 = vector.shape_cast %13 : vector<8x8xf32> to vector<8x8x1xf32>
    %15 = vector.broadcast %14 : vector<8x8x1xf32> to vector<8x8x8xf32>
    %16 = arith.subf %12, %15 : vector<8x8x8xf32>
    %17 = math.exp %16 : vector<8x8x8xf32>
    %cst_7 = arith.constant dense<0.000000e+00> : vector<8x8xf32>
    %18 = vector.multi_reduction <add>, %17, %cst_7 [2] : vector<8x8x8xf32> to vector<8x8xf32>
    %19 = vector.shape_cast %18 : vector<8x8xf32> to vector<8x8x1xf32>
    "tpu.trace_start"() <{level = 10 : i32, message = "gqk,gkd->gqd"}> : () -> ()
    %cst_8 = arith.constant dense<0.000000e+00> : vector<8x8x16xf32>
    %20 = tpu.matmul %17, %11, %cst_8 {dimension_numbers = #tpu.dot_dimension_numbers<[2], [1], [1], [2], [0, 0, 0, 1, 1, 2], [0], [0]>} : vector<8x8x8xf32>, vector<8x8x16xf32>, vector<8x8x16xf32> -> vector<8x8x16xf32>
    "tpu.trace_stop"() : () -> ()
    %21 = tpu.reciprocal %19 {approx = true} : vector<8x8x1xf32> -> vector<8x8x1xf32>
    %22 = vector.broadcast %21 : vector<8x8x1xf32> to vector<8x8x16xf32>
    %23 = arith.mulf %20, %22 : vector<8x8x16xf32>
    %24 = vector.shape_cast %23 : vector<8x8x16xf32> to vector<4x16x16xf32>
    %c0_9 = arith.constant 0 : index
    %c0_10 = arith.constant 0 : index
    %c0_11 = arith.constant 0 : index
    %25 = vector.load %arg3[%c0_9, %c0_10, %c0_11] : memref<4x16x32xf32, #tpu.memory_space<vmem>>, vector<4x16x32xf32>
    "tpu.trace_start"() <{level = 10 : i32, message = "hmd,hdc->hmc"}> : () -> ()
    %cst_12 = arith.constant dense<0.000000e+00> : vector<4x16x32xf32>
    %26 = tpu.matmul %24, %25, %cst_12 {dimension_numbers = #tpu.dot_dimension_numbers<[2], [1], [1], [2], [0, 0, 0, 1, 1, 2], [0], [0]>} : vector<4x16x16xf32>, vector<4x16x32xf32>, vector<4x16x32xf32> -> vector<4x16x32xf32>
    "tpu.trace_stop"() : () -> ()
    %27 = vector.extract_strided_slice %26 {offsets = [0, 0, 0], sizes = [1, 16, 32], strides = [1, 1, 1]} : vector<4x16x32xf32> to vector<1x16x32xf32>
    %28 = vector.shape_cast %27 : vector<1x16x32xf32> to vector<16x32xf32>
    %29 = vector.extract_strided_slice %26 {offsets = [1, 0, 0], sizes = [1, 16, 32], strides = [1, 1, 1]} : vector<4x16x32xf32> to vector<1x16x32xf32>
    %30 = vector.shape_cast %29 : vector<1x16x32xf32> to vector<16x32xf32>
    %31 = arith.addf %28, %30 : vector<16x32xf32>
    %32 = vector.extract_strided_slice %26 {offsets = [2, 0, 0], sizes = [1, 16, 32], strides = [1, 1, 1]} : vector<4x16x32xf32> to vector<1x16x32xf32>
    %33 = vector.shape_cast %32 : vector<1x16x32xf32> to vector<16x32xf32>
    %34 = arith.addf %31, %33 : vector<16x32xf32>
    %35 = vector.extract_strided_slice %26 {offsets = [3, 0, 0], sizes = [1, 16, 32], strides = [1, 1, 1]} : vector<4x16x32xf32> to vector<1x16x32xf32>
    %36 = vector.shape_cast %35 : vector<1x16x32xf32> to vector<16x32xf32>
    %37 = arith.addf %34, %36 : vector<16x32xf32>
    %c0_13 = arith.constant 0 : index
    %c0_14 = arith.constant 0 : index
    %38 = vector.load %arg4[%c0_13, %c0_14] : memref<1x32xf32, #tpu.memory_space<vmem>>, vector<1x32xf32>
    %39 = vector.broadcast %38 : vector<1x32xf32> to vector<16x32xf32>
    %40 = arith.addf %37, %39 : vector<16x32xf32>
    %41 = vector.shape_cast %40 : vector<16x32xf32> to vector<2x8x32xf32>
    %c0_15 = arith.constant 0 : index
    %c0_16 = arith.constant 0 : index
    %c0_17 = arith.constant 0 : index
    %42 = vector.load %arg5[%c0_15, %c0_16, %c0_17] : memref<2x8x32xf32, #tpu.memory_space<vmem>>, vector<2x8x32xf32>
    tpu.vector_store %arg5[%c0_15, %c0_16, %c0_17], %41 {strides = array<i32>} : memref<2x8x32xf32, #tpu.memory_space<vmem>>, vector<2x8x32xf32>,
    return
  }
  func.func @transform_0(%arg0: i32) -> (i32, i32, i32) {
    %c0_i32 = arith.constant 0 : i32
    %c0_i32_0 = arith.constant 0 : i32
    %c0_i32_1 = arith.constant 0 : i32
    return %arg0, %c0_i32, %c0_i32_0 : i32, i32, i32
  }
  func.func @transform_1(%arg0: i32) -> (i32, i32, i32) {
    %c0_i32 = arith.constant 0 : i32
    %c0_i32_0 = arith.constant 0 : i32
    %c0_i32_1 = arith.constant 0 : i32
    %c0_i32_2 = arith.constant 0 : i32
    return %c0_i32, %c0_i32_0, %c0_i32_1 : i32, i32, i32
  }
  func.func @transform_2(%arg0: i32) -> (i32, i32, i32) {
    %c0_i32 = arith.constant 0 : i32
    %c0_i32_0 = arith.constant 0 : i32
    %c0_i32_1 = arith.constant 0 : i32
    %c0_i32_2 = arith.constant 0 : i32
    return %c0_i32, %c0_i32_0, %c0_i32_1 : i32, i32, i32
  }
  func.func @transform_3(%arg0: i32) -> (i32, i32) {
    %c0_i32 = arith.constant 0 : i32
    %c0_i32_0 = arith.constant 0 : i32
    %c0_i32_1 = arith.constant 0 : i32
    return %c0_i32, %c0_i32_0 : i32, i32
  }
  func.func @transform_4(%arg0: i32) -> (i32, i32, i32) {
    %c0_i32 = arith.constant 0 : i32
    %c0_i32_0 = arith.constant 0 : i32
    %c0_i32_1 = arith.constant 0 : i32
    return %arg0, %c0_i32, %c0_i32_0 : i32, i32, i32
  }
}

module attributes {stable_mosaic.version = 11 : i64} {
  func.func @_attention_kernel(%arg0: i32, %arg1: memref<2x8x32xf32, #tpu.memory_space<vmem>>, %arg2: memref<4x32x48xf32, #tpu.memory_space<vmem>>, %arg3: memref<4x16x32xf32, #tpu.memory_space<vmem>>, %arg4: memref<1x32xf32, #tpu.memory_space<vmem>>, %arg5: memref<2x8x32xf32, #tpu.memory_space<vmem>>) attributes {dimension_semantics = [#tpu.dimension_semantics<parallel>], iteration_bounds = array<i64: 2>, scalar_prefetch = 0 : i64, scratch_operands = 0 : i64, tpu.core_type = #tpu.core_type<tc>, window_params = [{transform_indices = @transform_0, window_bounds = array<i64: 2, 8, 32>}, {pipeline_mode = #tpu.pipeline_mode<synchronous>, transform_indices = @transform_1, window_bounds = array<i64: 4, 32, 48>}, {pipeline_mode = #tpu.pipeline_mode<synchronous>, transform_indices = @transform_2, window_bounds = array<i64: 4, 16, 32>}, {pipeline_mode = #tpu.pipeline_mode<synchronous>, transform_indices = @transform_3, window_bounds = array<i64: 1, 32>}, {transform_indices = @transform_4, window_bounds = array<i64: 2, 8, 32>}]} {
    %c0 = arith.constant 0 : index
    %c0_0 = arith.constant 0 : index
    %c0_1 = arith.constant 0 : index
    %0 = vector.load %arg1[%c0, %c0_0, %c0_1] : memref<2x8x32xf32, #tpu.memory_space<vmem>>, vector<2x8x32xf32>
    %1 = vector.shape_cast %0 : vector<2x8x32xf32> to vector<16x32xf32>
    %2 = vector.shape_cast %1 : vector<16x32xf32> to vector<1x16x32xf32>
    %3 = vector.broadcast %2 : vector<1x16x32xf32> to vector<4x16x32xf32>
    %c0_2 = arith.constant 0 : index
    %c0_3 = arith.constant 0 : index
    %c0_4 = arith.constant 0 : index
    %4 = vector.load %arg2[%c0_2, %c0_3, %c0_4] : memref<4x32x48xf32, #tpu.memory_space<vmem>>, vector<4x32x48xf32>
    "tpu.trace_start"() <{level = 10 : i32, message = "hmc,hcd->hmd"}> : () -> ()
    %cst = arith.constant dense<0.000000e+00> : vector<4x16x48xf32>
    %5 = tpu.matmul %3, %4, %cst {dimension_numbers = #tpu.dot_dimension_numbers<[2], [1], [1], [2], [0, 0, 0, 1, 1, 2], [0], [0]>} : vector<4x16x32xf32>, vector<4x32x48xf32>, vector<4x16x48xf32> -> vector<4x16x48xf32>
    "tpu.trace_stop"() : () -> ()
    %6 = vector.extract_strided_slice %5 {offsets = [0, 0, 0], sizes = [4, 16, 16], strides = [1, 1, 1]} : vector<4x16x48xf32> to vector<4x16x16xf32>
    %7 = vector.shape_cast %6 : vector<4x16x16xf32> to vector<8x8x16xf32>
    %8 = vector.extract_strided_slice %5 {offsets = [0, 0, 16], sizes = [4, 16, 16], strides = [1, 1, 1]} : vector<4x16x48xf32> to vector<4x16x16xf32>
    %9 = vector.shape_cast %8 : vector<4x16x16xf32> to vector<8x8x16xf32>
    %10 = vector.extract_strided_slice %5 {offsets = [0, 0, 32], sizes = [4, 16, 16], strides = [1, 1, 1]} : vector<4x16x48xf32> to vector<4x16x16xf32>
    %11 = vector.shape_cast %10 : vector<4x16x16xf32> to vector<8x8x16xf32>
    "tpu.trace_start"() <{level = 10 : i32, message = "gqd,gkd->gqk"}> : () -> ()
    %cst_5 = arith.constant dense<0.000000e+00> : vector<8x8x8xf32>
    %12 = tpu.matmul %7, %9, %cst_5 {dimension_numbers = #tpu.dot_dimension_numbers<[2], [2], [1], [1], [0, 0, 0, 1, 1, 1], [0], [0]>} : vector<8x8x16xf32>, vector<8x8x16xf32>, vector<8x8x8xf32> -> vector<8x8x8xf32>
    "tpu.trace_stop"() : () -> ()
    %cst_6 = arith.constant dense<0xFF800000> : vector<8x8xf32>
    %13 = vector.multi_reduction <maximumf>, %12, %cst_6 [2] : vector<8x8x8xf32> to vector<8x8xf32>
    %14 = vector.shape_cast %13 : vector<8x8xf32> to vector<8x8x1xf32>
    %15 = vector.broadcast %14 : vector<8x8x1xf32> to vector<8x8x8xf32>
    %16 = arith.subf %12, %15 : vector<8x8x8xf32>
    %17 = math.exp %16 : vector<8x8x8xf32>
    %cst_7 = arith.constant dense<0.000000e+00> : vector<8x8xf32>
    %18 = vector.multi_reduction <add>, %17, %cst_7 [2] : vector<8x8x8xf32> to vector<8x8xf32>
    %19 = vector.shape_cast %18 : vector<8x8xf32> to vector<8x8x1xf32>
    "tpu.trace_start"() <{level = 10 : i32, message = "gqk,gkd->gqd"}> : () -> ()
    %cst_8 = arith.constant dense<0.000000e+00> : vector<8x8x16xf32>
    %20 = tpu.matmul %17, %11, %cst_8 {dimension_numbers = #tpu.dot_dimension_numbers<[2], [1], [1], [2], [0, 0, 0, 1, 1, 2], [0], [0]>} : vector<8x8x8xf32>, vector<8x8x16xf32>, vector<8x8x16xf32> -> vector<8x8x16xf32>
    "tpu.trace_stop"() : () -> ()
    %21 = tpu.reciprocal %19 {approx = true} : vector<8x8x1xf32> -> vector<8x8x1xf32>
    %22 = vector.broadcast %21 : vector<8x8x1xf32> to vector<8x8x16xf32>
    %23 = arith.mulf %20, %22 : vector<8x8x16xf32>
    %24 = vector.shape_cast %23 : vector<8x8x16xf32> to vector<4x16x16xf32>
    %c0_9 = arith.constant 0 : index
    %c0_10 = arith.constant 0 : index
    %c0_11 = arith.constant 0 : index
    %25 = vector.load %arg3[%c0_9, %c0_10, %c0_11] : memref<4x16x32xf32, #tpu.memory_space<vmem>>, vector<4x16x32xf32>
    "tpu.trace_start"() <{level = 10 : i32, message = "hmd,hdc->hmc"}> : () -> ()
    %cst_12 = arith.constant dense<0.000000e+00> : vector<4x16x32xf32>
    %26 = tpu.matmul %24, %25, %cst_12 {dimension_numbers = #tpu.dot_dimension_numbers<[2], [1], [1], [2], [0, 0, 0, 1, 1, 2], [0], [0]>} : vector<4x16x16xf32>, vector<4x16x32xf32>, vector<4x16x32xf32> -> vector<4x16x32xf32>
    "tpu.trace_stop"() : () -> ()
    %27 = vector.extract_strided_slice %26 {offsets = [0, 0, 0], sizes = [1, 16, 32], strides = [1, 1, 1]} : vector<4x16x32xf32> to vector<1x16x32xf32>
    %28 = vector.shape_cast %27 : vector<1x16x32xf32> to vector<16x32xf32>
    %29 = vector.extract_strided_slice %26 {offsets = [1, 0, 0], sizes = [1, 16, 32], strides = [1, 1, 1]} : vector<4x16x32xf32> to vector<1x16x32xf32>
    %30 = vector.shape_cast %29 : vector<1x16x32xf32> to vector<16x32xf32>
    %31 = arith.addf %28, %30 : vector<16x32xf32>
    %32 = vector.extract_strided_slice %26 {offsets = [2, 0, 0], sizes = [1, 16, 32], strides = [1, 1, 1]} : vector<4x16x32xf32> to vector<1x16x32xf32>
    %33 = vector.shape_cast %32 : vector<1x16x32xf32> to vector<16x32xf32>
    %34 = arith.addf %31, %33 : vector<16x32xf32>
    %35 = vector.extract_strided_slice %26 {offsets = [3, 0, 0], sizes = [1, 16, 32], strides = [1, 1, 1]} : vector<4x16x32xf32> to vector<1x16x32xf32>
    %36 = vector.shape_cast %35 : vector<1x16x32xf32> to vector<16x32xf32>
    %37 = arith.addf %34, %36 : vector<16x32xf32>
    %c0_13 = arith.constant 0 : index
    %c0_14 = arith.constant 0 : index
    %38 = vector.load %arg4[%c0_13, %c0_14] : memref<1x32xf32, #tpu.memory_space<vmem>>, vector<1x32xf32>
    %39 = vector.broadcast %38 : vector<1x32xf32> to vector<16x32xf32>
    %40 = arith.addf %37, %39 : vector<16x32xf32>
    %41 = vector.shape_cast %40 : vector<16x32xf32> to vector<2x8x32xf32>
    %c0_15 = arith.constant 0 : index
    %c0_16 = arith.constant 0 : index
    %c0_17 = arith.constant 0 : index
    %42 = vector.load %arg5[%c0_15, %c0_16, %c0_17] : memref<2x8x32xf32, #tpu.memory_space<vmem>>, vector<2x8x32xf32>
    tpu.vector_store %arg5[%c0_15, %c0_16, %c0_17], %41 {strides = array<i32>} : memref<2x8x32xf32, #tpu.memory_space<vmem>>, vector<2x8x32xf32>,
    return
  }
  func.func @transform_0(%arg0: i32) -> (i32, i32, i32) {
    %c0_i32 = arith.constant 0 : i32
    %c0_i32_0 = arith.constant 0 : i32
    %c0_i32_1 = arith.constant 0 : i32
    return %arg0, %c0_i32, %c0_i32_0 : i32, i32, i32
  }
  func.func @transform_1(%arg0: i32) -> (i32, i32, i32) {
    %c0_i32 = arith.constant 0 : i32
    %c0_i32_0 = arith.constant 0 : i32
    %c0_i32_1 = arith.constant 0 : i32
    %c0_i32_2 = arith.constant 0 : i32
    return %c0_i32, %c0_i32_0, %c0_i32_1 : i32, i32, i32
  }
  func.func @transform_2(%arg0: i32) -> (i32, i32, i32) {
    %c0_i32 = arith.constant 0 : i32
    %c0_i32_0 = arith.constant 0 : i32
    %c0_i32_1 = arith.constant 0 : i32
    %c0_i32_2 = arith.constant 0 : i32
    return %c0_i32, %c0_i32_0, %c0_i32_1 : i32, i32, i32
  }
  func.func @transform_3(%arg0: i32) -> (i32, i32) {
    %c0_i32 = arith.constant 0 : i32
    %c0_i32_0 = arith.constant 0 : i32
    %c0_i32_1 = arith.constant 0 : i32
    return %c0_i32, %c0_i32_0 : i32, i32
  }
  func.func @transform_4(%arg0: i32) -> (i32, i32, i32) {
    %c0_i32 = arith.constant 0 : i32
    %c0_i32_0 = arith.constant 0 : i32
    %c0_i32_1 = arith.constant 0 : i32
    return %arg0, %c0_i32, %c0_i32_0 : i32, i32, i32
  }
}

</mosaic_0001>

<llo_original>
// kernel: tpu_custom_call.1
$region0: #{tpu_custom_call.1}
  #allocation0 [shape = 'u32[]', space=smem, size = 0x4, offset = 0x4, fixed_abs, tag = 'smem constant byte address 0x4 - core index']
  #allocation1 [shape = 'u32[144,128]{1,0:T(1,128)}', space=vmem, size = 0x12000, scoped, tag = 'internal scratch']
  %s0 = inlined_call_operand.hbm [shape: f32[4,8,32], index: 0, kind: input, shape index: {}]
  %s1 = inlined_call_operand.hbm [shape: f32[4,32,48], index: 1, kind: input, shape index: {}]
  %s2 = inlined_call_operand.hbm [shape: f32[4,16,32], index: 2, kind: input, shape index: {}]
  %s3 = inlined_call_operand.vmem [shape: f32[1,32], index: 3, kind: input, shape index: {}]
  %s4 = inlined_call_operand.hbm [shape: f32[4,8,32], index: 4, kind: output, shape index: {}]
  %s5 = sld [smem:[#allocation0]]
  $region61: #{tpu_custom_call.1} parent=0
    _
  %s7 = ssub.s32 1, %s5
  %s8 = scalar_select 0, %s7, %s5
  $region1: #{tpu_custom_call.1} parent=0
    #allocation2 [shape = 'u8[16384]{0}', space=vmem, size = 0x4000, scoped, tag = 'input window, operand 0']
    #allocation3 [shape = 's32[2]{0}', space=sflag, size = 0x8, scoped, tag = 'scoped memory for tpu_custom_call.1']
    #allocation4 [shape = 's32[2]{0}', space=sflag, size = 0x8, scoped, tag = 'scoped memory for tpu_custom_call.1']
    #allocation5 [shape = 'u8[65536]{0}', space=vmem, size = 0x10000, scoped, tag = 'input window, operand 1, single buffered']
    #allocation6 [shape = 's32[1]{0}', space=sflag, size = 0x4, scoped, tag = 'scoped memory for tpu_custom_call.1']
    #allocation7 [shape = 'u8[32768]{0}', space=vmem, size = 0x8000, scoped, tag = 'input window, operand 2, single buffered']
    #allocation8 [shape = 'u8[16384]{0}', space=vmem, size = 0x4000, scoped, tag = 'output window, operand 0']
    %9 = vsyncpa [#allocation3], 0
    %s10 = scalar_lea.sflag [#allocation3], 1
    %11 = vsyncpa %s10, 0
    %12 = vsyncpa [#allocation6], 0
    %13 = vsyncpa [#allocation4], 0
    %s14 = scalar_lea.sflag [#allocation4], 1
    %15 = vsyncpa %s14, 0
    loop: start=0, step=1, limit=4
    $region2: #{tpu_custom_call.1} parent=1 // loop_pre_header
      _
    $region3: #{tpu_custom_call.1} parent=1 // loop_header
      %s17 = sphi 0, %s21
      %p18 = scmp.ge.s32.totalorder %s17, 4
      %s27 = sphi 0, %s29
      %s30 = sphi 0, %s27
      %s31 = sphi 0, %s30
      %s47 = sphi 0, %s31
      %s51 = sphi 0, %s51
      %s53 = sphi 0, %s51
      %s54 = sphi 0, %s53
      %s68 = sphi 0, %s54
      %s72 = sphi 0, %s72
      %s74 = sphi 0, %s72
      %s75 = sphi 0, %s74
      %s89 = sphi 0, %s75
      %s93 = sphi 0, %s93
      %s95 = sphi 0, %s93
      %s96 = sphi 0, %s95
      %s110 = sphi 0, %s96
      %s116 = sphi 0, %s118
      %s119 = sphi 0, %s116
      %s120 = sphi 0, %s119
      %s136 = sphi 0, %s120
    $region4: #{tpu_custom_call.1} parent=1 // loop_header_branch
      %20 = sbr.rel (%p18) target = $region8
    $region5: #{tpu_custom_call.1} parent=1 // loop_body
      %s22 = ssub.s32 %s17, 1
      %s23 = ssub.s32 %s17, 2
      %s24 = sadd.s32 %s17, 1
      %s25 = ssub.s32 %s17, %s24
      %p26 = scmp.eq.s32.totalorder %s25, 0
      %s28 = sadd.s32 %s27, 1
      %s29 = scalar_select %p26, %s27, %s28
      %p32 = pneg %p26
      %p33 = scmp.eq.s32.totalorder %s17, 1
      %p34 = por %p32, %p33
      %p35 = scmp.ne.s32.totalorder %s27, %s30
      %p36 = scmp.eq.s32.totalorder %s17, 0
      %p37 = por %p35, %p36
      %p38 = scmp.ne.s32.totalorder %s27, %s30
      %p39 = scmp.eq.s32.totalorder %s22, 1
      %p40 = por %p38, %p39
      %p41 = scmp.ne.s32.totalorder %s30, %s31
      %p42 = scmp.eq.s32.totalorder %s22, 0
      %p43 = por %p41, %p42
      %p44 = scmp.ne.s32.totalorder %s30, %s31
      %p45 = scmp.eq.s32.totalorder %s23, 1
      %p46 = por %p44, %p45
      %p48 = scmp.ne.s32.totalorder %s31, %s47
      %p49 = scmp.eq.s32.totalorder %s23, 0
      %p50 = por %p48, %p49
      %s52 = sadd.s32 %s51, 1
      %p55 = scmp.eq.s32.totalorder %s17, 1
      %p56 = scmp.ne.s32.totalorder %s51, %s53
      %p57 = scmp.eq.s32.totalorder %s17, 0
      %p58 = por %p56, %p57
      %p59 = scmp.ne.s32.totalorder %s51, %s53
      %p60 = scmp.eq.s32.totalorder %s22, 1
      %p61 = por %p59, %p60
      %p62 = scmp.ne.s32.totalorder %s53, %s54
      %p63 = scmp.eq.s32.totalorder %s22, 0
      %p64 = por %p62, %p63
      %p65 = scmp.ne.s32.totalorder %s53, %s54
      %p66 = scmp.eq.s32.totalorder %s23, 1
      %p67 = por %p65, %p66
      %p69 = scmp.ne.s32.totalorder %s54, %s68
      %p70 = scmp.eq.s32.totalorder %s23, 0
      %p71 = por %p69, %p70
      %s73 = sadd.s32 %s72, 1
      %p76 = scmp.eq.s32.totalorder %s17, 1
      %p77 = scmp.ne.s32.totalorder %s72, %s74
      %p78 = scmp.eq.s32.totalorder %s17, 0
      %p79 = por %p77, %p78
      %p80 = scmp.ne.s32.totalorder %s72, %s74
      %p81 = scmp.eq.s32.totalorder %s22, 1
      %p82 = por %p80, %p81
      %p83 = scmp.ne.s32.totalorder %s74, %s75
      %p84 = scmp.eq.s32.totalorder %s22, 0
      %p85 = por %p83, %p84
      %p86 = scmp.ne.s32.totalorder %s74, %s75
      %p87 = scmp.eq.s32.totalorder %s23, 1
      %p88 = por %p86, %p87
      %p90 = scmp.ne.s32.totalorder %s75, %s89
      %p91 = scmp.eq.s32.totalorder %s23, 0
      %p92 = por %p90, %p91
      %s94 = sadd.s32 %s93, 1
      %p97 = scmp.eq.s32.totalorder %s17, 1
      %p98 = scmp.ne.s32.totalorder %s93, %s95
      %p99 = scmp.eq.s32.totalorder %s17, 0
      %p100 = por %p98, %p99
      %p101 = scmp.ne.s32.totalorder %s93, %s95
      %p102 = scmp.eq.s32.totalorder %s22, 1
      %p103 = por %p101, %p102
      %p104 = scmp.ne.s32.totalorder %s95, %s96
      %p105 = scmp.eq.s32.totalorder %s22, 0
      %p106 = por %p104, %p105
      %p107 = scmp.ne.s32.totalorder %s95, %s96
      %p108 = scmp.eq.s32.totalorder %s23, 1
      %p109 = por %p107, %p108
      %p111 = scmp.ne.s32.totalorder %s96, %s110
      %p112 = scmp.eq.s32.totalorder %s23, 0
      %p113 = por %p111, %p112
      %s114 = ssub.s32 %s17, %s24
      %p115 = scmp.eq.s32.totalorder %s114, 0
      %s117 = sadd.s32 %s116, 1
      %s118 = scalar_select %p115, %s116, %s117
      %p121 = pneg %p115
      %p122 = scmp.eq.s32.totalorder %s17, 1
      %p123 = por %p121, %p122
      %p124 = scmp.ne.s32.totalorder %s116, %s119
      %p125 = scmp.eq.s32.totalorder %s17, 0
      %p126 = por %p124, %p125
      %p127 = scmp.ne.s32.totalorder %s116, %s119
      %p128 = scmp.eq.s32.totalorder %s22, 1
      %p129 = por %p127, %p128
      %p130 = scmp.ne.s32.totalorder %s119, %s120
      %p131 = scmp.eq.s32.totalorder %s22, 0
      %p132 = por %p130, %p131
      %p133 = scmp.ne.s32.totalorder %s119, %s120
      %p134 = scmp.eq.s32.totalorder %s23, 1
      %p135 = por %p133, %p134
      %p137 = scmp.ne.s32.totalorder %s120, %s136
      %p138 = scmp.eq.s32.totalorder %s23, 0
      %p139 = por %p137, %p138
      %p140 = scmp.le.s32.totalorder 1, %s17
      %p141 = scmp.lt.s32.totalorder %s17, 3
      %p142 = pnand %p140, %p141
      %p143 = pneg %p142
      // Predicated region
      $region9: #{tpu_custom_call.1} parent=5 // pred_check
        _
      $region10: #{tpu_custom_call.1} parent=5 // pred_check_branch
        %145 = sbr.rel (%p142) target = $region12
      $region11: #{tpu_custom_call.1} parent=5 // pred_region
        %s146 = ssub.s32 %s17, 1
        // Predicated region
        $region13: #{tpu_custom_call.1} parent=11 // pred_check
          %p147 = pneg %p64
        $region14: #{tpu_custom_call.1} parent=11 // pred_check_branch
          %149 = sbr.rel (%p147) target = $region16
        $region15: #{tpu_custom_call.1} parent=11 // pred_region
          %s151 = ssub.s32 2048, 2048
          %152 = vsyncadd [#allocation6], %s151
          %s153 = sshll.u32 [#allocation5], 4
          %s154 = int_to_ptr.vmem [resolvable:$true] %s153
          %159 = dma.hbm_to_vmem [thread:$0]  %s1, 2048, %s154, [#allocation6], 128, 128, 8
        $region16: #{tpu_custom_call.1} parent=11 // pred_fallthru
          _
        // Predicated region
        $region17: #{tpu_custom_call.1} parent=11 // pred_check
          %p160 = pneg %p85
        $region18: #{tpu_custom_call.1} parent=11 // pred_check_branch
          %162 = sbr.rel (%p160) target = $region20
        $region19: #{tpu_custom_call.1} parent=11 // pred_region
          %s164 = ssub.s32 1024, 1024
          %165 = vsyncadd [#allocation6], %s164
          %s166 = sshll.u32 [#allocation7], 4
          %s167 = int_to_ptr.vmem [resolvable:$true] %s166
          %172 = dma.hbm_to_vmem [thread:$0]  %s2, 1024, %s167, [#allocation6], 128, 128, 8
        $region20: #{tpu_custom_call.1} parent=11 // pred_fallthru
          _
        // Predicated region
        $region21: #{tpu_custom_call.1} parent=11 // pred_check
          %p173 = pneg %p106
        $region22: #{tpu_custom_call.1} parent=11 // pred_check_branch
          %175 = sbr.rel (%p173) target = $region24
        $region23: #{tpu_custom_call.1} parent=11 // pred_region
          _
        $region24: #{tpu_custom_call.1} parent=11 // pred_fallthru
          _
      $region12: #{tpu_custom_call.1} parent=5 // pred_fallthru
        _
      %p176 = scmp.lt.s32.totalorder %s17, 2
      // Predicated region
      $region25: #{tpu_custom_call.1} parent=5 // pred_check
        %p177 = pneg %p176
      $region26: #{tpu_custom_call.1} parent=5 // pred_check_branch
        %179 = sbr.rel (%p177) target = $region28
      $region27: #{tpu_custom_call.1} parent=5 // pred_region
        // Predicated region
        $region29: #{tpu_custom_call.1} parent=27 // pred_check
          %p180 = pneg %p37
        $region30: #{tpu_custom_call.1} parent=27 // pred_check_branch
          %182 = sbr.rel (%p180) target = $region32
        $region31: #{tpu_custom_call.1} parent=27 // pred_region
          %s183 = sand.u32 %s27, 1
          %s184 = scalar_lea.sflag [#allocation3], %s183
          %s185 = sand.u32 %s27, 1
          %s186 = smul.addr %s185, 16
          %s187 = scalar_lea.vmem [#allocation2], %s186
          %s188 = smul.u32 2, %s17
          %s190 = ssub.s32 256, 256
          %191 = vsyncadd %s184, %s190
          %s192 = smul.addr %s188, 128
          %s193 = scalar_lea.hbm %s0, %s192
          %s194 = sshll.u32 %s187, 4
          %s195 = int_to_ptr.vmem [resolvable:$true] %s194
          %200 = dma.hbm_to_vmem [thread:$0]  %s193, 256, %s195, %s184, 128, 128, 8
        $region32: #{tpu_custom_call.1} parent=27 // pred_fallthru
          _
      $region28: #{tpu_custom_call.1} parent=5 // pred_fallthru
        _
      %p201 = scmp.le.s32.totalorder 1, %s17
      %p202 = scmp.lt.s32.totalorder %s17, 3
      %p203 = pnand %p201, %p202
      %p204 = pneg %p203
      // Predicated region
      $region33: #{tpu_custom_call.1} parent=5 // pred_check
        _
      $region34: #{tpu_custom_call.1} parent=5 // pred_check_branch
        %206 = sbr.rel (%p203) target = $region36
      $region35: #{tpu_custom_call.1} parent=5 // pred_region
        %s207 = ssub.s32 %s17, 1
        %s208 = sand.u32 %s30, 1
        %s209 = scalar_lea.sflag [#allocation3], %s208
        %s210 = sand.u32 %s30, 1
        %s211 = smul.addr %s210, 16
        %s212 = scalar_lea.vmem [#allocation2], %s211
        // Predicated region
        $region37: #{tpu_custom_call.1} parent=35 // pred_check
          %p213 = pneg %p43
        $region38: #{tpu_custom_call.1} parent=35 // pred_check_branch
          %215 = sbr.rel (%p213) target = $region40
        $region39: #{tpu_custom_call.1} parent=35 // pred_region
          %216 = dma.done %s209, 256
        $region40: #{tpu_custom_call.1} parent=35 // pred_fallthru
          _
        // Predicated region
        $region41: #{tpu_custom_call.1} parent=35 // pred_check
          %p217 = pneg %p64
        $region42: #{tpu_custom_call.1} parent=35 // pred_check_branch
          %219 = sbr.rel (%p217) target = $region44
        $region43: #{tpu_custom_call.1} parent=35 // pred_region
          %220 = dma.done [#allocation6], 2048
        $region44: #{tpu_custom_call.1} parent=35 // pred_fallthru
          _
        // Predicated region
        $region45: #{tpu_custom_call.1} parent=35 // pred_check
          %p221 = pneg %p85
        $region46: #{tpu_custom_call.1} parent=35 // pred_check_branch
          %223 = sbr.rel (%p221) target = $region48
        $region47: #{tpu_custom_call.1} parent=35 // pred_region
          %224 = dma.done [#allocation6], 1024
        $region48: #{tpu_custom_call.1} parent=35 // pred_fallthru
          _
        %s225 = sand.u32 %s30, 1
        %s226 = scalar_lea.sflag [#allocation3], %s225
        %s227 = sand.u32 %s30, 1
        %s228 = smul.addr %s227, 16
        %s229 = scalar_lea.vmem [#allocation2], %s228
        %p230 = pneg %p43
        %p231 = pneg %p40
        %p232 = pneg %p64
        %p233 = pneg %p61
        %p234 = pneg %p85
        %p235 = pneg %p82
        %p236 = pneg %p106
        %p237 = pneg %p103
        %p238 = pneg %p132
        %p239 = pneg %p129
        %s240 = sand.u32 %s119, 1
        %s241 = scalar_lea.sflag [#allocation4], %s240
        %s242 = sand.u32 %s119, 1
        %s243 = smul.addr %s242, 16
        %s244 = scalar_lea.vmem [#allocation8], %s243
        %s245 = smul.u32 2, %s22
        %s246 = smul.u32 2, %s22
        %v247 = vld [vmem:[%s212] sm:$0xff]
        %v248 = vld [vmem:[%s212 + $0x8] sm:$0xff]
        %v249 = vld [vmem:[#allocation5] sm:$0xff]
        %v250 = vld [vmem:[#allocation5 + $0x8] sm:$0xff]
        %v251 = vld [vmem:[#allocation5 + $0x10] sm:$0xff]
        %v252 = vld [vmem:[#allocation5 + $0x18] sm:$0xff]
        %v253 = vld [vmem:[#allocation5 + $0x20] sm:$0xff]
        %v254 = vld [vmem:[#allocation5 + $0x28] sm:$0xff]
        %v255 = vld [vmem:[#allocation5 + $0x30] sm:$0xff]
        %v256 = vld [vmem:[#allocation5 + $0x38] sm:$0xff]
        %v257 = vld [vmem:[#allocation5 + $0x40] sm:$0xff]
        %v258 = vld [vmem:[#allocation5 + $0x48] sm:$0xff]
        %v259 = vld [vmem:[#allocation5 + $0x50] sm:$0xff]
        %v260 = vld [vmem:[#allocation5 + $0x58] sm:$0xff]
        %v261 = vld [vmem:[#allocation5 + $0x60] sm:$0xff]
        %v262 = vld [vmem:[#allocation5 + $0x68] sm:$0xff]
        %v263 = vld [vmem:[#allocation5 + $0x70] sm:$0xff]
        %v264 = vld [vmem:[#allocation5 + $0x78] sm:$0xff]
        %vm265 = vcmask 261120
        %v267 = vsel %vm265, %v247, 0
        %v270 = vsel %vm265, %v248, 0
        %272 = vmatprep.subr.mxu0 0.0
        %273 = vmatpush1.msra.mxu0 %v249
        %274 = vmatprep.subr.mxu0 0.0
        %275 = vmatpush1.msra.mxu0 %v250
        %276 = vmatprep.subr.mxu0 0.0
        %277 = vmatpush1.msra.mxu0 %v251
        %278 = vmatprep.subr.mxu0 0.0
        %279 = vmatpush1.msra.mxu0 %v252
        %280 = vmatprep.subr.mxu0 0.0
        %281 = vmatpush1.msra.mxu0 0.0
        %282 = vmatprep.subr.mxu0 0.0
        %283 = vmatpush1.msra.mxu0 0.0
        %284 = vmatprep.subr.mxu0 0.0
        %285 = vmatpush1.msra.mxu0 0.0
        %286 = vmatprep.subr.mxu0 0.0
        %287 = vmatpush1.msra.mxu0 0.0
        %288 = vmatprep.subr.mxu0 0.0
        %289 = vmatpush1.msra.mxu0 0.0
        %290 = vmatprep.subr.mxu0 0.0
        %291 = vmatpush1.msra.mxu0 0.0
        %292 = vmatprep.subr.mxu0 0.0
        %293 = vmatpush1.msra.mxu0 0.0
        %294 = vmatprep.subr.mxu0 0.0
        %295 = vmatpush1.msra.mxu0 0.0
        %296 = vmatprep.subr.mxu0 0.0
        %297 = vmatpush1.msra.mxu0 0.0
        %298 = vmatprep.subr.mxu0 0.0
        %299 = vmatpush1.msra.mxu0 0.0
        %300 = vmatprep.subr.mxu0 0.0
        %301 = vmatpush1.msra.mxu0 0.0
        %302 = vmatprep.subr.mxu0 0.0
        %303 = vmatpush1.msra.mxu0 0.0
        %304 = vmatprep.subr.mxu0 0.0
        %305 = vmatpush1.msra.mxu0 0.0
        %306 = vmatprep.subr.mxu0 0.0
        %307 = vmatpush1.msra.mxu0 0.0
        %308 = vmatprep.subr.mxu0 0.0
        %309 = vmatpush1.msra.mxu0 0.0
        %310 = vmatprep.subr.mxu0 0.0
        %311 = vmatpush1.msra.mxu0 0.0
        %312 = vmatprep.subr.mxu0 0.0
        %313 = vmatpush1.msra.mxu0 0.0
        %314 = vmatprep.subr.mxu0 0.0
        %315 = vmatpush1.msra.mxu0 0.0
        %316 = vmatprep.subr.mxu0 0.0
        %317 = vmatpush1.msra.mxu0 0.0
        %318 = vmatprep.subr.mxu0 0.0
        %319 = vmatpush1.msra.mxu0 0.0
        %320 = vmatprep.subr.mxu0 0.0
        %321 = vmatpush1.msra.mxu0 0.0
        %322 = vmatprep.subr.mxu0 0.0
        %323 = vmatpush1.msra.mxu0 0.0
        %324 = vmatprep.subr.mxu0 0.0
        %325 = vmatpush1.msra.mxu0 0.0
        %326 = vmatprep.subr.mxu0 0.0
        %327 = vmatpush1.msra.mxu0 0.0
        %328 = vmatprep.subr.mxu0 0.0
        %329 = vmatpush1.msra.mxu0 0.0
        %330 = vmatprep.subr.mxu0 0.0
        %331 = vmatpush1.msra.mxu0 0.0
        %332 = vmatprep.subr.mxu0 0.0
        %333 = vmatpush1.msra.mxu0 0.0
        %334 = vmatprep.subr.mxu0 0.0
        %335 = vmatpush1.msra.mxu0 0.0
        %336 = vmatprep.mubr.f32.mxu0 0.0
        %337 = vmatmul.mubr.f32.gmra.mrb[0].mxu0 %v267
        %v338 = vpop.f32.mrb[0].mxu0
        %v339 = vadd.f32 0.0, %v338
        %v340 = vpop.f32.mrb[0].mxu0
        %341 = vmatprep.mubr.f32.mxu0 0.0
        %342 = vmatmul.mubr.f32.gmra.mrb[0].mxu0 %v270
        %v343 = vpop.f32.mrb[0].mxu0
        %v344 = vadd.f32 0.0, %v343
        %v345 = vpop.f32.mrb[0].mxu0
        %346 = vdwg.mxu0
        %347 = vmatprep.subr.mxu0 0.0
        %348 = vmatpush1.msra.mxu0 %v253
        %349 = vmatprep.subr.mxu0 0.0
        %350 = vmatpush1.msra.mxu0 %v254
        %351 = vmatprep.subr.mxu0 0.0
        %352 = vmatpush1.msra.mxu0 %v255
        %353 = vmatprep.subr.mxu0 0.0
        %354 = vmatpush1.msra.mxu0 %v256
        %355 = vmatprep.subr.mxu0 0.0
        %356 = vmatpush1.msra.mxu0 0.0
        %357 = vmatprep.subr.mxu0 0.0
        %358 = vmatpush1.msra.mxu0 0.0
        %359 = vmatprep.subr.mxu0 0.0
        %360 = vmatpush1.msra.mxu0 0.0
        %361 = vmatprep.subr.mxu0 0.0
        %362 = vmatpush1.msra.mxu0 0.0
        %363 = vmatprep.subr.mxu0 0.0
        %364 = vmatpush1.msra.mxu0 0.0
        %365 = vmatprep.subr.mxu0 0.0
        %366 = vmatpush1.msra.mxu0 0.0
        %367 = vmatprep.subr.mxu0 0.0
        %368 = vmatpush1.msra.mxu0 0.0
        %369 = vmatprep.subr.mxu0 0.0
        %370 = vmatpush1.msra.mxu0 0.0
        %371 = vmatprep.subr.mxu0 0.0
        %372 = vmatpush1.msra.mxu0 0.0
        %373 = vmatprep.subr.mxu0 0.0
        %374 = vmatpush1.msra.mxu0 0.0
        %375 = vmatprep.subr.mxu0 0.0
        %376 = vmatpush1.msra.mxu0 0.0
        %377 = vmatprep.subr.mxu0 0.0
        %378 = vmatpush1.msra.mxu0 0.0
        %379 = vmatprep.subr.mxu0 0.0
        %380 = vmatpush1.msra.mxu0 0.0
        %381 = vmatprep.subr.mxu0 0.0
        %382 = vmatpush1.msra.mxu0 0.0
        %383 = vmatprep.subr.mxu0 0.0
        %384 = vmatpush1.msra.mxu0 0.0
        %385 = vmatprep.subr.mxu0 0.0
        %386 = vmatpush1.msra.mxu0 0.0
        %387 = vmatprep.subr.mxu0 0.0
        %388 = vmatpush1.msra.mxu0 0.0
        %389 = vmatprep.subr.mxu0 0.0
        %390 = vmatpush1.msra.mxu0 0.0
        %391 = vmatprep.subr.mxu0 0.0
        %392 = vmatpush1.msra.mxu0 0.0
        %393 = vmatprep.subr.mxu0 0.0
        %394 = vmatpush1.msra.mxu0 0.0
        %395 = vmatprep.subr.mxu0 0.0
        %396 = vmatpush1.msra.mxu0 0.0
        %397 = vmatprep.subr.mxu0 0.0
        %398 = vmatpush1.msra.mxu0 0.0
        %399 = vmatprep.subr.mxu0 0.0
        %400 = vmatpush1.msra.mxu0 0.0
        %401 = vmatprep.subr.mxu0 0.0
        %402 = vmatpush1.msra.mxu0 0.0
        %403 = vmatprep.subr.mxu0 0.0
        %404 = vmatpush1.msra.mxu0 0.0
        %405 = vmatprep.subr.mxu0 0.0
        %406 = vmatpush1.msra.mxu0 0.0
        %407 = vmatprep.subr.mxu0 0.0
        %408 = vmatpush1.msra.mxu0 0.0
        %409 = vmatprep.subr.mxu0 0.0
        %410 = vmatpush1.msra.mxu0 0.0
        %411 = vmatprep.mubr.f32.mxu0 0.0
        %412 = vmatmul.mubr.f32.gmra.mrb[0].mxu0 %v267
        %v413 = vpop.f32.mrb[0].mxu0
        %v414 = vadd.f32 0.0, %v413
        %v415 = vpop.f32.mrb[0].mxu0
        %416 = vmatprep.mubr.f32.mxu0 0.0
        %417 = vmatmul.mubr.f32.gmra.mrb[0].mxu0 %v270
        %v418 = vpop.f32.mrb[0].mxu0
        %v419 = vadd.f32 0.0, %v418
        %v420 = vpop.f32.mrb[0].mxu0
        %421 = vdwg.mxu0
        %422 = vmatprep.subr.mxu0 0.0
        %423 = vmatpush1.msra.mxu0 %v257
        %424 = vmatprep.subr.mxu0 0.0
        %425 = vmatpush1.msra.mxu0 %v258
        %426 = vmatprep.subr.mxu0 0.0
        %427 = vmatpush1.msra.mxu0 %v259
        %428 = vmatprep.subr.mxu0 0.0
        %429 = vmatpush1.msra.mxu0 %v260
        %430 = vmatprep.subr.mxu0 0.0
        %431 = vmatpush1.msra.mxu0 0.0
        %432 = vmatprep.subr.mxu0 0.0
        %433 = vmatpush1.msra.mxu0 0.0
        %434 = vmatprep.subr.mxu0 0.0
        %435 = vmatpush1.msra.mxu0 0.0
        %436 = vmatprep.subr.mxu0 0.0
        %437 = vmatpush1.msra.mxu0 0.0
        %438 = vmatprep.subr.mxu0 0.0
        %439 = vmatpush1.msra.mxu0 0.0
        %440 = vmatprep.subr.mxu0 0.0
        %441 = vmatpush1.msra.mxu0 0.0
        %442 = vmatprep.subr.mxu0 0.0
        %443 = vmatpush1.msra.mxu0 0.0
        %444 = vmatprep.subr.mxu0 0.0
        %445 = vmatpush1.msra.mxu0 0.0
        %446 = vmatprep.subr.mxu0 0.0
        %447 = vmatpush1.msra.mxu0 0.0
        %448 = vmatprep.subr.mxu0 0.0
        %449 = vmatpush1.msra.mxu0 0.0
        %450 = vmatprep.subr.mxu0 0.0
        %451 = vmatpush1.msra.mxu0 0.0
        %452 = vmatprep.subr.mxu0 0.0
        %453 = vmatpush1.msra.mxu0 0.0
        %454 = vmatprep.subr.mxu0 0.0
        %455 = vmatpush1.msra.mxu0 0.0
        %456 = vmatprep.subr.mxu0 0.0
        %457 = vmatpush1.msra.mxu0 0.0
        %458 = vmatprep.subr.mxu0 0.0
        %459 = vmatpush1.msra.mxu0 0.0
        %460 = vmatprep.subr.mxu0 0.0
        %461 = vmatpush1.msra.mxu0 0.0
        %462 = vmatprep.subr.mxu0 0.0
        %463 = vmatpush1.msra.mxu0 0.0
        %464 = vmatprep.subr.mxu0 0.0
        %465 = vmatpush1.msra.mxu0 0.0
        %466 = vmatprep.subr.mxu0 0.0
        %467 = vmatpush1.msra.mxu0 0.0
        %468 = vmatprep.subr.mxu0 0.0
        %469 = vmatpush1.msra.mxu0 0.0
        %470 = vmatprep.subr.mxu0 0.0
        %471 = vmatpush1.msra.mxu0 0.0
        %472 = vmatprep.subr.mxu0 0.0
        %473 = vmatpush1.msra.mxu0 0.0
        %474 = vmatprep.subr.mxu0 0.0
        %475 = vmatpush1.msra.mxu0 0.0
        %476 = vmatprep.subr.mxu0 0.0
        %477 = vmatpush1.msra.mxu0 0.0
        %478 = vmatprep.subr.mxu0 0.0
        %479 = vmatpush1.msra.mxu0 0.0
        %480 = vmatprep.subr.mxu0 0.0
        %481 = vmatpush1.msra.mxu0 0.0
        %482 = vmatprep.subr.mxu0 0.0
        %483 = vmatpush1.msra.mxu0 0.0
        %484 = vmatprep.subr.mxu0 0.0
        %485 = vmatpush1.msra.mxu0 0.0
        %486 = vmatprep.mubr.f32.mxu0 0.0
        %487 = vmatmul.mubr.f32.gmra.mrb[0].mxu0 %v267
        %v488 = vpop.f32.mrb[0].mxu0
        %v489 = vadd.f32 0.0, %v488
        %v490 = vpop.f32.mrb[0].mxu0
        %491 = vmatprep.mubr.f32.mxu0 0.0
        %492 = vmatmul.mubr.f32.gmra.mrb[0].mxu0 %v270
        %v493 = vpop.f32.mrb[0].mxu0
        %v494 = vadd.f32 0.0, %v493
        %v495 = vpop.f32.mrb[0].mxu0
        %496 = vdwg.mxu0
        %497 = vmatprep.subr.mxu0 0.0
        %498 = vmatpush1.msra.mxu0 %v261
        %499 = vmatprep.subr.mxu0 0.0
        %500 = vmatpush1.msra.mxu0 %v262
        %501 = vmatprep.subr.mxu0 0.0
        %502 = vmatpush1.msra.mxu0 %v263
        %503 = vmatprep.subr.mxu0 0.0
        %504 = vmatpush1.msra.mxu0 %v264
        %505 = vmatprep.subr.mxu0 0.0
        %506 = vmatpush1.msra.mxu0 0.0
        %507 = vmatprep.subr.mxu0 0.0
        %508 = vmatpush1.msra.mxu0 0.0
        %509 = vmatprep.subr.mxu0 0.0
        %510 = vmatpush1.msra.mxu0 0.0
        %511 = vmatprep.subr.mxu0 0.0
        %512 = vmatpush1.msra.mxu0 0.0
        %513 = vmatprep.subr.mxu0 0.0
        %514 = vmatpush1.msra.mxu0 0.0
        %515 = vmatprep.subr.mxu0 0.0
        %516 = vmatpush1.msra.mxu0 0.0
        %517 = vmatprep.subr.mxu0 0.0
        %518 = vmatpush1.msra.mxu0 0.0
        %519 = vmatprep.subr.mxu0 0.0
        %520 = vmatpush1.msra.mxu0 0.0
        %521 = vmatprep.subr.mxu0 0.0
        %522 = vmatpush1.msra.mxu0 0.0
        %523 = vmatprep.subr.mxu0 0.0
        %524 = vmatpush1.msra.mxu0 0.0
        %525 = vmatprep.subr.mxu0 0.0
        %526 = vmatpush1.msra.mxu0 0.0
        %527 = vmatprep.subr.mxu0 0.0
        %528 = vmatpush1.msra.mxu0 0.0
        %529 = vmatprep.subr.mxu0 0.0
        %530 = vmatpush1.msra.mxu0 0.0
        %531 = vmatprep.subr.mxu0 0.0
        %532 = vmatpush1.msra.mxu0 0.0
        %533 = vmatprep.subr.mxu0 0.0
        %534 = vmatpush1.msra.mxu0 0.0
        %535 = vmatprep.subr.mxu0 0.0
        %536 = vmatpush1.msra.mxu0 0.0
        %537 = vmatprep.subr.mxu0 0.0
        %538 = vmatpush1.msra.mxu0 0.0
        %539 = vmatprep.subr.mxu0 0.0
        %540 = vmatpush1.msra.mxu0 0.0
        %541 = vmatprep.subr.mxu0 0.0
        %542 = vmatpush1.msra.mxu0 0.0
        %543 = vmatprep.subr.mxu0 0.0
        %544 = vmatpush1.msra.mxu0 0.0
        %545 = vmatprep.subr.mxu0 0.0
        %546 = vmatpush1.msra.mxu0 0.0
        %547 = vmatprep.subr.mxu0 0.0
        %548 = vmatpush1.msra.mxu0 0.0
        %549 = vmatprep.subr.mxu0 0.0
        %550 = vmatpush1.msra.mxu0 0.0
        %551 = vmatprep.subr.mxu0 0.0
        %552 = vmatpush1.msra.mxu0 0.0
        %553 = vmatprep.subr.mxu0 0.0
        %554 = vmatpush1.msra.mxu0 0.0
        %555 = vmatprep.subr.mxu0 0.0
        %556 = vmatpush1.msra.mxu0 0.0
        %557 = vmatprep.subr.mxu0 0.0
        %558 = vmatpush1.msra.mxu0 0.0
        %559 = vmatprep.subr.mxu0 0.0
        %560 = vmatpush1.msra.mxu0 0.0
        %561 = vmatprep.mubr.f32.mxu0 0.0
        %562 = vmatmul.mubr.f32.gmra.mrb[0].mxu0 %v267
        %v563 = vpop.f32.mrb[0].mxu0
        %v564 = vadd.f32 0.0, %v563
        %v565 = vpop.f32.mrb[0].mxu0
        %566 = vmatprep.mubr.f32.mxu0 0.0
        %567 = vmatmul.mubr.f32.gmra.mrb[0].mxu0 %v270
        %v568 = vpop.f32.mrb[0].mxu0
        %v569 = vadd.f32 0.0, %v568
        %v570 = vpop.f32.mrb[0].mxu0
        %571 = vdwg.mxu0
        %573 = vrot.lane.b32.xlu0 %v339, 112
        %v574 = vpop.permute.xlu0 %573
        %vm575 = vcmask 130048
        %v576 = vsel %vm575, %v339, 0
        %v578 = vsel %vm575, %v574, 0
        %580 = vmatprep.subr.mxu0 0.0
        %581 = vmatpush1.xpose.msra.mxu0 %v578
        %582 = vmatprep.subr.mxu0 0.0
        %583 = vmatpush1.xpose.msra.mxu0 0.0
        %584 = vmatprep.subr.mxu0 0.0
        %585 = vmatpush1.xpose.msra.mxu0 0.0
        %586 = vmatprep.subr.mxu0 0.0
        %587 = vmatpush1.xpose.msra.mxu0 0.0
        %588 = vmatprep.subr.mxu0 0.0
        %589 = vmatpush1.xpose.msra.mxu0 0.0
        %590 = vmatprep.subr.mxu0 0.0
        %591 = vmatpush1.xpose.msra.mxu0 0.0
        %592 = vmatprep.subr.mxu0 0.0
        %593 = vmatpush1.xpose.msra.mxu0 0.0
        %594 = vmatprep.subr.mxu0 0.0
        %595 = vmatpush1.xpose.msra.mxu0 0.0
        %596 = vmatprep.subr.mxu0 0.0
        %597 = vmatpush1.xpose.msra.mxu0 0.0
        %598 = vmatprep.subr.mxu0 0.0
        %599 = vmatpush1.xpose.msra.mxu0 0.0
        %600 = vmatprep.subr.mxu0 0.0
        %601 = vmatpush1.xpose.msra.mxu0 0.0
        %602 = vmatprep.subr.mxu0 0.0
        %603 = vmatpush1.xpose.msra.mxu0 0.0
        %604 = vmatprep.subr.mxu0 0.0
        %605 = vmatpush1.xpose.msra.mxu0 0.0
        %606 = vmatprep.subr.mxu0 0.0
        %607 = vmatpush1.xpose.msra.mxu0 0.0
        %608 = vmatprep.subr.mxu0 0.0
        %609 = vmatpush1.xpose.msra.mxu0 0.0
        %610 = vmatprep.subr.mxu0 0.0
        %611 = vmatpush1.xpose.msra.mxu0 0.0
        %612 = vmatprep.subr.mxu0 0.0
        %613 = vmatpush1.xpose.msra.mxu0 0.0
        %614 = vmatprep.subr.mxu0 0.0
        %615 = vmatpush1.xpose.msra.mxu0 0.0
        %616 = vmatprep.subr.mxu0 0.0
        %617 = vmatpush1.xpose.msra.mxu0 0.0
        %618 = vmatprep.subr.mxu0 0.0
        %619 = vmatpush1.xpose.msra.mxu0 0.0
        %620 = vmatprep.subr.mxu0 0.0
        %621 = vmatpush1.xpose.msra.mxu0 0.0
        %622 = vmatprep.subr.mxu0 0.0
        %623 = vmatpush1.xpose.msra.mxu0 0.0
        %624 = vmatprep.subr.mxu0 0.0
        %625 = vmatpush1.xpose.msra.mxu0 0.0
        %626 = vmatprep.subr.mxu0 0.0
        %627 = vmatpush1.xpose.msra.mxu0 0.0
        %628 = vmatprep.subr.mxu0 0.0
        %629 = vmatpush1.xpose.msra.mxu0 0.0
        %630 = vmatprep.subr.mxu0 0.0
        %631 = vmatpush1.xpose.msra.mxu0 0.0
        %632 = vmatprep.subr.mxu0 0.0
        %633 = vmatpush1.xpose.msra.mxu0 0.0
        %634 = vmatprep.subr.mxu0 0.0
        %635 = vmatpush1.xpose.msra.mxu0 0.0
        %636 = vmatprep.subr.mxu0 0.0
        %637 = vmatpush1.xpose.msra.mxu0 0.0
        %638 = vmatprep.subr.mxu0 0.0
        %639 = vmatpush1.xpose.msra.mxu0 0.0
        %640 = vmatprep.subr.mxu0 0.0
        %641 = vmatpush1.xpose.msra.mxu0 0.0
        %642 = vmatprep.subr.mxu0 0.0
        %643 = vmatpush1.xpose.msra.mxu0 0.0
        %644 = vmatprep.mubr.f32.mxu0 0.0
        %645 = vmatmul.mubr.f32.gmra.mrb[0].mxu0 %v576
        %v646 = vpop.f32.mrb[0].mxu0
        %v647 = vadd.f32 0.0, %v646
        %v648 = vpop.f32.mrb[0].mxu0
        %649 = vdwg.mxu0
        %651 = vrot.lane.b32.xlu0 %v344, 112
        %v652 = vpop.permute.xlu0 %651
        %v653 = vsel %vm575, %v344, 0
        %v655 = vsel %vm575, %v652, 0
        %657 = vmatprep.subr.mxu0 0.0
        %658 = vmatpush1.xpose.msra.mxu0 %v655
        %659 = vmatprep.subr.mxu0 0.0
        %660 = vmatpush1.xpose.msra.mxu0 0.0
        %661 = vmatprep.subr.mxu0 0.0
        %662 = vmatpush1.xpose.msra.mxu0 0.0
        %663 = vmatprep.subr.mxu0 0.0
        %664 = vmatpush1.xpose.msra.mxu0 0.0
        %665 = vmatprep.subr.mxu0 0.0
        %666 = vmatpush1.xpose.msra.mxu0 0.0
        %667 = vmatprep.subr.mxu0 0.0
        %668 = vmatpush1.xpose.msra.mxu0 0.0
        %669 = vmatprep.subr.mxu0 0.0
        %670 = vmatpush1.xpose.msra.mxu0 0.0
        %671 = vmatprep.subr.mxu0 0.0
        %672 = vmatpush1.xpose.msra.mxu0 0.0
        %673 = vmatprep.subr.mxu0 0.0
        %674 = vmatpush1.xpose.msra.mxu0 0.0
        %675 = vmatprep.subr.mxu0 0.0
        %676 = vmatpush1.xpose.msra.mxu0 0.0
        %677 = vmatprep.subr.mxu0 0.0
        %678 = vmatpush1.xpose.msra.mxu0 0.0
        %679 = vmatprep.subr.mxu0 0.0
        %680 = vmatpush1.xpose.msra.mxu0 0.0
        %681 = vmatprep.subr.mxu0 0.0
        %682 = vmatpush1.xpose.msra.mxu0 0.0
        %683 = vmatprep.subr.mxu0 0.0
        %684 = vmatpush1.xpose.msra.mxu0 0.0
        %685 = vmatprep.subr.mxu0 0.0
        %686 = vmatpush1.xpose.msra.mxu0 0.0
        %687 = vmatprep.subr.mxu0 0.0
        %688 = vmatpush1.xpose.msra.mxu0 0.0
        %689 = vmatprep.subr.mxu0 0.0
        %690 = vmatpush1.xpose.msra.mxu0 0.0
        %691 = vmatprep.subr.mxu0 0.0
        %692 = vmatpush1.xpose.msra.mxu0 0.0
        %693 = vmatprep.subr.mxu0 0.0
        %694 = vmatpush1.xpose.msra.mxu0 0.0
        %695 = vmatprep.subr.mxu0 0.0
        %696 = vmatpush1.xpose.msra.mxu0 0.0
        %697 = vmatprep.subr.mxu0 0.0
        %698 = vmatpush1.xpose.msra.mxu0 0.0
        %699 = vmatprep.subr.mxu0 0.0
        %700 = vmatpush1.xpose.msra.mxu0 0.0
        %701 = vmatprep.subr.mxu0 0.0
        %702 = vmatpush1.xpose.msra.mxu0 0.0
        %703 = vmatprep.subr.mxu0 0.0
        %704 = vmatpush1.xpose.msra.mxu0 0.0
        %705 = vmatprep.subr.mxu0 0.0
        %706 = vmatpush1.xpose.msra.mxu0 0.0
        %707 = vmatprep.subr.mxu0 0.0
        %708 = vmatpush1.xpose.msra.mxu0 0.0
        %709 = vmatprep.subr.mxu0 0.0
        %710 = vmatpush1.xpose.msra.mxu0 0.0
        %711 = vmatprep.subr.mxu0 0.0
        %712 = vmatpush1.xpose.msra.mxu0 0.0
        %713 = vmatprep.subr.mxu0 0.0
        %714 = vmatpush1.xpose.msra.mxu0 0.0
        %715 = vmatprep.subr.mxu0 0.0
        %716 = vmatpush1.xpose.msra.mxu0 0.0
        %717 = vmatprep.subr.mxu0 0.0
        %718 = vmatpush1.xpose.msra.mxu0 0.0
        %719 = vmatprep.subr.mxu0 0.0
        %720 = vmatpush1.xpose.msra.mxu0 0.0
        %721 = vmatprep.mubr.f32.mxu0 0.0
        %722 = vmatmul.mubr.f32.gmra.mrb[0].mxu0 %v653
        %v723 = vpop.f32.mrb[0].mxu0
        %v724 = vadd.f32 0.0, %v723
        %v725 = vpop.f32.mrb[0].mxu0
        %726 = vdwg.mxu0
        %728 = vrot.lane.b32.xlu0 %v414, 112
        %v729 = vpop.permute.xlu0 %728
        %v730 = vsel %vm575, %v414, 0
        %v732 = vsel %vm575, %v729, 0
        %734 = vmatprep.subr.mxu0 0.0
        %735 = vmatpush1.xpose.msra.mxu0 %v732
        %736 = vmatprep.subr.mxu0 0.0
        %737 = vmatpush1.xpose.msra.mxu0 0.0
        %738 = vmatprep.subr.mxu0 0.0
        %739 = vmatpush1.xpose.msra.mxu0 0.0
        %740 = vmatprep.subr.mxu0 0.0
        %741 = vmatpush1.xpose.msra.mxu0 0.0
        %742 = vmatprep.subr.mxu0 0.0
        %743 = vmatpush1.xpose.msra.mxu0 0.0
        %744 = vmatprep.subr.mxu0 0.0
        %745 = vmatpush1.xpose.msra.mxu0 0.0
        %746 = vmatprep.subr.mxu0 0.0
        %747 = vmatpush1.xpose.msra.mxu0 0.0
        %748 = vmatprep.subr.mxu0 0.0
        %749 = vmatpush1.xpose.msra.mxu0 0.0
        %750 = vmatprep.subr.mxu0 0.0
        %751 = vmatpush1.xpose.msra.mxu0 0.0
        %752 = vmatprep.subr.mxu0 0.0
        %753 = vmatpush1.xpose.msra.mxu0 0.0
        %754 = vmatprep.subr.mxu0 0.0
        %755 = vmatpush1.xpose.msra.mxu0 0.0
        %756 = vmatprep.subr.mxu0 0.0
        %757 = vmatpush1.xpose.msra.mxu0 0.0
        %758 = vmatprep.subr.mxu0 0.0
        %759 = vmatpush1.xpose.msra.mxu0 0.0
        %760 = vmatprep.subr.mxu0 0.0
        %761 = vmatpush1.xpose.msra.mxu0 0.0
        %762 = vmatprep.subr.mxu0 0.0
        %763 = vmatpush1.xpose.msra.mxu0 0.0
        %764 = vmatprep.subr.mxu0 0.0
        %765 = vmatpush1.xpose.msra.mxu0 0.0
        %766 = vmatprep.subr.mxu0 0.0
        %767 = vmatpush1.xpose.msra.mxu0 0.0
        %768 = vmatprep.subr.mxu0 0.0
        %769 = vmatpush1.xpose.msra.mxu0 0.0
        %770 = vmatprep.subr.mxu0 0.0
        %771 = vmatpush1.xpose.msra.mxu0 0.0
        %772 = vmatprep.subr.mxu0 0.0
        %773 = vmatpush1.xpose.msra.mxu0 0.0
        %774 = vmatprep.subr.mxu0 0.0
        %775 = vmatpush1.xpose.msra.mxu0 0.0
        %776 = vmatprep.subr.mxu0 0.0
        %777 = vmatpush1.xpose.msra.mxu0 0.0
        %778 = vmatprep.subr.mxu0 0.0
        %779 = vmatpush1.xpose.msra.mxu0 0.0
        %780 = vmatprep.subr.mxu0 0.0
        %781 = vmatpush1.xpose.msra.mxu0 0.0
        %782 = vmatprep.subr.mxu0 0.0
        %783 = vmatpush1.xpose.msra.mxu0 0.0
        %784 = vmatprep.subr.mxu0 0.0
        %785 = vmatpush1.xpose.msra.mxu0 0.0
        %786 = vmatprep.subr.mxu0 0.0
        %787 = vmatpush1.xpose.msra.mxu0 0.0
        %788 = vmatprep.subr.mxu0 0.0
        %789 = vmatpush1.xpose.msra.mxu0 0.0
        %790 = vmatprep.subr.mxu0 0.0
        %791 = vmatpush1.xpose.msra.mxu0 0.0
        %792 = vmatprep.subr.mxu0 0.0
        %793 = vmatpush1.xpose.msra.mxu0 0.0
        %794 = vmatprep.subr.mxu0 0.0
        %795 = vmatpush1.xpose.msra.mxu0 0.0
        %796 = vmatprep.subr.mxu0 0.0
        %797 = vmatpush1.xpose.msra.mxu0 0.0
        %798 = vmatprep.mubr.f32.mxu0 0.0
        %799 = vmatmul.mubr.f32.gmra.mrb[0].mxu0 %v730
        %v800 = vpop.f32.mrb[0].mxu0
        %v801 = vadd.f32 0.0, %v800
        %v802 = vpop.f32.mrb[0].mxu0
        %803 = vdwg.mxu0
        %805 = vrot.lane.b32.xlu0 %v419, 112
        %v806 = vpop.permute.xlu0 %805
        %v807 = vsel %vm575, %v419, 0
        %v809 = vsel %vm575, %v806, 0
        %811 = vmatprep.subr.mxu0 0.0
        %812 = vmatpush1.xpose.msra.mxu0 %v809
        %813 = vmatprep.subr.mxu0 0.0
        %814 = vmatpush1.xpose.msra.mxu0 0.0
        %815 = vmatprep.subr.mxu0 0.0
        %816 = vmatpush1.xpose.msra.mxu0 0.0
        %817 = vmatprep.subr.mxu0 0.0
        %818 = vmatpush1.xpose.msra.mxu0 0.0
        %819 = vmatprep.subr.mxu0 0.0
        %820 = vmatpush1.xpose.msra.mxu0 0.0
        %821 = vmatprep.subr.mxu0 0.0
        %822 = vmatpush1.xpose.msra.mxu0 0.0
        %823 = vmatprep.subr.mxu0 0.0
        %824 = vmatpush1.xpose.msra.mxu0 0.0
        %825 = vmatprep.subr.mxu0 0.0
        %826 = vmatpush1.xpose.msra.mxu0 0.0
        %827 = vmatprep.subr.mxu0 0.0
        %828 = vmatpush1.xpose.msra.mxu0 0.0
        %829 = vmatprep.subr.mxu0 0.0
        %830 = vmatpush1.xpose.msra.mxu0 0.0
        %831 = vmatprep.subr.mxu0 0.0
        %832 = vmatpush1.xpose.msra.mxu0 0.0
        %833 = vmatprep.subr.mxu0 0.0
        %834 = vmatpush1.xpose.msra.mxu0 0.0
        %835 = vmatprep.subr.mxu0 0.0
        %836 = vmatpush1.xpose.msra.mxu0 0.0
        %837 = vmatprep.subr.mxu0 0.0
        %838 = vmatpush1.xpose.msra.mxu0 0.0
        %839 = vmatprep.subr.mxu0 0.0
        %840 = vmatpush1.xpose.msra.mxu0 0.0
        %841 = vmatprep.subr.mxu0 0.0
        %842 = vmatpush1.xpose.msra.mxu0 0.0
        %843 = vmatprep.subr.mxu0 0.0
        %844 = vmatpush1.xpose.msra.mxu0 0.0
        %845 = vmatprep.subr.mxu0 0.0
        %846 = vmatpush1.xpose.msra.mxu0 0.0
        %847 = vmatprep.subr.mxu0 0.0
        %848 = vmatpush1.xpose.msra.mxu0 0.0
        %849 = vmatprep.subr.mxu0 0.0
        %850 = vmatpush1.xpose.msra.mxu0 0.0
        %851 = vmatprep.subr.mxu0 0.0
        %852 = vmatpush1.xpose.msra.mxu0 0.0
        %853 = vmatprep.subr.mxu0 0.0
        %854 = vmatpush1.xpose.msra.mxu0 0.0
        %855 = vmatprep.subr.mxu0 0.0
        %856 = vmatpush1.xpose.msra.mxu0 0.0
        %857 = vmatprep.subr.mxu0 0.0
        %858 = vmatpush1.xpose.msra.mxu0 0.0
        %859 = vmatprep.subr.mxu0 0.0
        %860 = vmatpush1.xpose.msra.mxu0 0.0
        %861 = vmatprep.subr.mxu0 0.0
        %862 = vmatpush1.xpose.msra.mxu0 0.0
        %863 = vmatprep.subr.mxu0 0.0
        %864 = vmatpush1.xpose.msra.mxu0 0.0
        %865 = vmatprep.subr.mxu0 0.0
        %866 = vmatpush1.xpose.msra.mxu0 0.0
        %867 = vmatprep.subr.mxu0 0.0
        %868 = vmatpush1.xpose.msra.mxu0 0.0
        %869 = vmatprep.subr.mxu0 0.0
        %870 = vmatpush1.xpose.msra.mxu0 0.0
        %871 = vmatprep.subr.mxu0 0.0
        %872 = vmatpush1.xpose.msra.mxu0 0.0
        %873 = vmatprep.subr.mxu0 0.0
        %874 = vmatpush1.xpose.msra.mxu0 0.0
        %875 = vmatprep.mubr.f32.mxu0 0.0
        %876 = vmatmul.mubr.f32.gmra.mrb[0].mxu0 %v807
        %v877 = vpop.f32.mrb[0].mxu0
        %v878 = vadd.f32 0.0, %v877
        %v879 = vpop.f32.mrb[0].mxu0
        %880 = vdwg.mxu0
        %882 = vrot.lane.b32.xlu0 %v489, 112
        %v883 = vpop.permute.xlu0 %882
        %v884 = vsel %vm575, %v489, 0
        %v886 = vsel %vm575, %v883, 0
        %888 = vmatprep.subr.mxu0 0.0
        %889 = vmatpush1.xpose.msra.mxu0 %v886
        %890 = vmatprep.subr.mxu0 0.0
        %891 = vmatpush1.xpose.msra.mxu0 0.0
        %892 = vmatprep.subr.mxu0 0.0
        %893 = vmatpush1.xpose.msra.mxu0 0.0
        %894 = vmatprep.subr.mxu0 0.0
        %895 = vmatpush1.xpose.msra.mxu0 0.0
        %896 = vmatprep.subr.mxu0 0.0
        %897 = vmatpush1.xpose.msra.mxu0 0.0
        %898 = vmatprep.subr.mxu0 0.0
        %899 = vmatpush1.xpose.msra.mxu0 0.0
        %900 = vmatprep.subr.mxu0 0.0
        %901 = vmatpush1.xpose.msra.mxu0 0.0
        %902 = vmatprep.subr.mxu0 0.0
        %903 = vmatpush1.xpose.msra.mxu0 0.0
        %904 = vmatprep.subr.mxu0 0.0
        %905 = vmatpush1.xpose.msra.mxu0 0.0
        %906 = vmatprep.subr.mxu0 0.0
        %907 = vmatpush1.xpose.msra.mxu0 0.0
        %908 = vmatprep.subr.mxu0 0.0
        %909 = vmatpush1.xpose.msra.mxu0 0.0
        %910 = vmatprep.subr.mxu0 0.0
        %911 = vmatpush1.xpose.msra.mxu0 0.0
        %912 = vmatprep.subr.mxu0 0.0
        %913 = vmatpush1.xpose.msra.mxu0 0.0
        %914 = vmatprep.subr.mxu0 0.0
        %915 = vmatpush1.xpose.msra.mxu0 0.0
        %916 = vmatprep.subr.mxu0 0.0
        %917 = vmatpush1.xpose.msra.mxu0 0.0
        %918 = vmatprep.subr.mxu0 0.0
        %919 = vmatpush1.xpose.msra.mxu0 0.0
        %920 = vmatprep.subr.mxu0 0.0
        %921 = vmatpush1.xpose.msra.mxu0 0.0
        %922 = vmatprep.subr.mxu0 0.0
        %923 = vmatpush1.xpose.msra.mxu0 0.0
        %924 = vmatprep.subr.mxu0 0.0
        %925 = vmatpush1.xpose.msra.mxu0 0.0
        %926 = vmatprep.subr.mxu0 0.0
        %927 = vmatpush1.xpose.msra.mxu0 0.0
        %928 = vmatprep.subr.mxu0 0.0
        %929 = vmatpush1.xpose.msra.mxu0 0.0
        %930 = vmatprep.subr.mxu0 0.0
        %931 = vmatpush1.xpose.msra.mxu0 0.0
        %932 = vmatprep.subr.mxu0 0.0
        %933 = vmatpush1.xpose.msra.mxu0 0.0
        %934 = vmatprep.subr.mxu0 0.0
        %935 = vmatpush1.xpose.msra.mxu0 0.0
        %936 = vmatprep.subr.mxu0 0.0
        %937 = vmatpush1.xpose.msra.mxu0 0.0
        %938 = vmatprep.subr.mxu0 0.0
        %939 = vmatpush1.xpose.msra.mxu0 0.0
        %940 = vmatprep.subr.mxu0 0.0
        %941 = vmatpush1.xpose.msra.mxu0 0.0
        %942 = vmatprep.subr.mxu0 0.0
        %943 = vmatpush1.xpose.msra.mxu0 0.0
        %944 = vmatprep.subr.mxu0 0.0
        %945 = vmatpush1.xpose.msra.mxu0 0.0
        %946 = vmatprep.subr.mxu0 0.0
        %947 = vmatpush1.xpose.msra.mxu0 0.0
        %948 = vmatprep.subr.mxu0 0.0
        %949 = vmatpush1.xpose.msra.mxu0 0.0
        %950 = vmatprep.subr.mxu0 0.0
        %951 = vmatpush1.xpose.msra.mxu0 0.0
        %952 = vmatprep.mubr.f32.mxu0 0.0
        %953 = vmatmul.mubr.f32.gmra.mrb[0].mxu0 %v884
        %v954 = vpop.f32.mrb[0].mxu0
        %v955 = vadd.f32 0.0, %v954
        %v956 = vpop.f32.mrb[0].mxu0
        %957 = vdwg.mxu0
        %959 = vrot.lane.b32.xlu0 %v494, 112
        %v960 = vpop.permute.xlu0 %959
        %v961 = vsel %vm575, %v494, 0
        %v963 = vsel %vm575, %v960, 0
        %965 = vmatprep.subr.mxu0 0.0
        %966 = vmatpush1.xpose.msra.mxu0 %v963
        %967 = vmatprep.subr.mxu0 0.0
        %968 = vmatpush1.xpose.msra.mxu0 0.0
        %969 = vmatprep.subr.mxu0 0.0
        %970 = vmatpush1.xpose.msra.mxu0 0.0
        %971 = vmatprep.subr.mxu0 0.0
        %972 = vmatpush1.xpose.msra.mxu0 0.0
        %973 = vmatprep.subr.mxu0 0.0
        %974 = vmatpush1.xpose.msra.mxu0 0.0
        %975 = vmatprep.subr.mxu0 0.0
        %976 = vmatpush1.xpose.msra.mxu0 0.0
        %977 = vmatprep.subr.mxu0 0.0
        %978 = vmatpush1.xpose.msra.mxu0 0.0
        %979 = vmatprep.subr.mxu0 0.0
        %980 = vmatpush1.xpose.msra.mxu0 0.0
        %981 = vmatprep.subr.mxu0 0.0
        %982 = vmatpush1.xpose.msra.mxu0 0.0
        %983 = vmatprep.subr.mxu0 0.0
        %984 = vmatpush1.xpose.msra.mxu0 0.0
        %985 = vmatprep.subr.mxu0 0.0
        %986 = vmatpush1.xpose.msra.mxu0 0.0
        %987 = vmatprep.subr.mxu0 0.0
        %988 = vmatpush1.xpose.msra.mxu0 0.0
        %989 = vmatprep.subr.mxu0 0.0
        %990 = vmatpush1.xpose.msra.mxu0 0.0
        %991 = vmatprep.subr.mxu0 0.0
        %992 = vmatpush1.xpose.msra.mxu0 0.0
        %993 = vmatprep.subr.mxu0 0.0
        %994 = vmatpush1.xpose.msra.mxu0 0.0
        %995 = vmatprep.subr.mxu0 0.0
        %996 = vmatpush1.xpose.msra.mxu0 0.0
        %997 = vmatprep.subr.mxu0 0.0
        %998 = vmatpush1.xpose.msra.mxu0 0.0
        %999 = vmatprep.subr.mxu0 0.0
        %1000 = vmatpush1.xpose.msra.mxu0 0.0
        %1001 = vmatprep.subr.mxu0 0.0
        %1002 = vmatpush1.xpose.msra.mxu0 0.0
        %1003 = vmatprep.subr.mxu0 0.0
        %1004 = vmatpush1.xpose.msra.mxu0 0.0
        %1005 = vmatprep.subr.mxu0 0.0
        %1006 = vmatpush1.xpose.msra.mxu0 0.0
        %1007 = vmatprep.subr.mxu0 0.0
        %1008 = vmatpush1.xpose.msra.mxu0 0.0
        %1009 = vmatprep.subr.mxu0 0.0
        %1010 = vmatpush1.xpose.msra.mxu0 0.0
        %1011 = vmatprep.subr.mxu0 0.0
        %1012 = vmatpush1.xpose.msra.mxu0 0.0
        %1013 = vmatprep.subr.mxu0 0.0
        %1014 = vmatpush1.xpose.msra.mxu0 0.0
        %1015 = vmatprep.subr.mxu0 0.0
        %1016 = vmatpush1.xpose.msra.mxu0 0.0
        %1017 = vmatprep.subr.mxu0 0.0
        %1018 = vmatpush1.xpose.msra.mxu0 0.0
        %1019 = vmatprep.subr.mxu0 0.0
        %1020 = vmatpush1.xpose.msra.mxu0 0.0
        %1021 = vmatprep.subr.mxu0 0.0
        %1022 = vmatpush1.xpose.msra.mxu0 0.0
        %1023 = vmatprep.subr.mxu0 0.0
        %1024 = vmatpush1.xpose.msra.mxu0 0.0
        %1025 = vmatprep.subr.mxu0 0.0
        %1026 = vmatpush1.xpose.msra.mxu0 0.0
        %1027 = vmatprep.subr.mxu0 0.0
        %1028 = vmatpush1.xpose.msra.mxu0 0.0
        %1029 = vmatprep.mubr.f32.mxu0 0.0
        %1030 = vmatmul.mubr.f32.gmra.mrb[0].mxu0 %v961
        %v1031 = vpop.f32.mrb[0].mxu0
        %v1032 = vadd.f32 0.0, %v1031
        %v1033 = vpop.f32.mrb[0].mxu0
        %1034 = vdwg.mxu0
        %1036 = vrot.lane.b32.xlu0 %v564, 112
        %v1037 = vpop.permute.xlu0 %1036
        %v1038 = vsel %vm575, %v564, 0
        %v1040 = vsel %vm575, %v1037, 0
        %1042 = vmatprep.subr.mxu0 0.0
        %1043 = vmatpush1.xpose.msra.mxu0 %v1040
        %1044 = vmatprep.subr.mxu0 0.0
        %1045 = vmatpush1.xpose.msra.mxu0 0.0
        %1046 = vmatprep.subr.mxu0 0.0
        %1047 = vmatpush1.xpose.msra.mxu0 0.0
        %1048 = vmatprep.subr.mxu0 0.0
        %1049 = vmatpush1.xpose.msra.mxu0 0.0
        %1050 = vmatprep.subr.mxu0 0.0
        %1051 = vmatpush1.xpose.msra.mxu0 0.0
        %1052 = vmatprep.subr.mxu0 0.0
        %1053 = vmatpush1.xpose.msra.mxu0 0.0
        %1054 = vmatprep.subr.mxu0 0.0
        %1055 = vmatpush1.xpose.msra.mxu0 0.0
        %1056 = vmatprep.subr.mxu0 0.0
        %1057 = vmatpush1.xpose.msra.mxu0 0.0
        %1058 = vmatprep.subr.mxu0 0.0
        %1059 = vmatpush1.xpose.msra.mxu0 0.0
        %1060 = vmatprep.subr.mxu0 0.0
        %1061 = vmatpush1.xpose.msra.mxu0 0.0
        %1062 = vmatprep.subr.mxu0 0.0
        %1063 = vmatpush1.xpose.msra.mxu0 0.0
        %1064 = vmatprep.subr.mxu0 0.0
        %1065 = vmatpush1.xpose.msra.mxu0 0.0
        %1066 = vmatprep.subr.mxu0 0.0
        %1067 = vmatpush1.xpose.msra.mxu0 0.0
        %1068 = vmatprep.subr.mxu0 0.0
        %1069 = vmatpush1.xpose.msra.mxu0 0.0
        %1070 = vmatprep.subr.mxu0 0.0
        %1071 = vmatpush1.xpose.msra.mxu0 0.0
        %1072 = vmatprep.subr.mxu0 0.0
        %1073 = vmatpush1.xpose.msra.mxu0 0.0
        %1074 = vmatprep.subr.mxu0 0.0
        %1075 = vmatpush1.xpose.msra.mxu0 0.0
        %1076 = vmatprep.subr.mxu0 0.0
        %1077 = vmatpush1.xpose.msra.mxu0 0.0
        %1078 = vmatprep.subr.mxu0 0.0
        %1079 = vmatpush1.xpose.msra.mxu0 0.0
        %1080 = vmatprep.subr.mxu0 0.0
        %1081 = vmatpush1.xpose.msra.mxu0 0.0
        %1082 = vmatprep.subr.mxu0 0.0
        %1083 = vmatpush1.xpose.msra.mxu0 0.0
        %1084 = vmatprep.subr.mxu0 0.0
        %1085 = vmatpush1.xpose.msra.mxu0 0.0
        %1086 = vmatprep.subr.mxu0 0.0
        %1087 = vmatpush1.xpose.msra.mxu0 0.0
        %1088 = vmatprep.subr.mxu0 0.0
        %1089 = vmatpush1.xpose.msra.mxu0 0.0
        %1090 = vmatprep.subr.mxu0 0.0
        %1091 = vmatpush1.xpose.msra.mxu0 0.0
        %1092 = vmatprep.subr.mxu0 0.0
        %1093 = vmatpush1.xpose.msra.mxu0 0.0
        %1094 = vmatprep.subr.mxu0 0.0
        %1095 = vmatpush1.xpose.msra.mxu0 0.0
        %1096 = vmatprep.subr.mxu0 0.0
        %1097 = vmatpush1.xpose.msra.mxu0 0.0
        %1098 = vmatprep.subr.mxu0 0.0
        %1099 = vmatpush1.xpose.msra.mxu0 0.0
        %1100 = vmatprep.subr.mxu0 0.0
        %1101 = vmatpush1.xpose.msra.mxu0 0.0
        %1102 = vmatprep.subr.mxu0 0.0
        %1103 = vmatpush1.xpose.msra.mxu0 0.0
        %1104 = vmatprep.subr.mxu0 0.0
        %1105 = vmatpush1.xpose.msra.mxu0 0.0
        %1106 = vmatprep.mubr.f32.mxu0 0.0
        %1107 = vmatmul.mubr.f32.gmra.mrb[0].mxu0 %v1038
        %v1108 = vpop.f32.mrb[0].mxu0
        %v1109 = vadd.f32 0.0, %v1108
        %v1110 = vpop.f32.mrb[0].mxu0
        %1111 = vdwg.mxu0
        %1113 = vrot.lane.b32.xlu0 %v569, 112
        %v1114 = vpop.permute.xlu0 %1113
        %v1115 = vsel %vm575, %v569, 0
        %v1117 = vsel %vm575, %v1114, 0
        %1119 = vmatprep.subr.mxu0 0.0
        %1120 = vmatpush1.xpose.msra.mxu0 %v1117
        %1121 = vmatprep.subr.mxu0 0.0
        %1122 = vmatpush1.xpose.msra.mxu0 0.0
        %1123 = vmatprep.subr.mxu0 0.0
        %1124 = vmatpush1.xpose.msra.mxu0 0.0
        %1125 = vmatprep.subr.mxu0 0.0
        %1126 = vmatpush1.xpose.msra.mxu0 0.0
        %1127 = vmatprep.subr.mxu0 0.0
        %1128 = vmatpush1.xpose.msra.mxu0 0.0
        %1129 = vmatprep.subr.mxu0 0.0
        %1130 = vmatpush1.xpose.msra.mxu0 0.0
        %1131 = vmatprep.subr.mxu0 0.0
        %1132 = vmatpush1.xpose.msra.mxu0 0.0
        %1133 = vmatprep.subr.mxu0 0.0
        %1134 = vmatpush1.xpose.msra.mxu0 0.0
        %1135 = vmatprep.subr.mxu0 0.0
        %1136 = vmatpush1.xpose.msra.mxu0 0.0
        %1137 = vmatprep.subr.mxu0 0.0
        %1138 = vmatpush1.xpose.msra.mxu0 0.0
        %1139 = vmatprep.subr.mxu0 0.0
        %1140 = vmatpush1.xpose.msra.mxu0 0.0
        %1141 = vmatprep.subr.mxu0 0.0
        %1142 = vmatpush1.xpose.msra.mxu0 0.0
        %1143 = vmatprep.subr.mxu0 0.0
        %1144 = vmatpush1.xpose.msra.mxu0 0.0
        %1145 = vmatprep.subr.mxu0 0.0
        %1146 = vmatpush1.xpose.msra.mxu0 0.0
        %1147 = vmatprep.subr.mxu0 0.0
        %1148 = vmatpush1.xpose.msra.mxu0 0.0
        %1149 = vmatprep.subr.mxu0 0.0
        %1150 = vmatpush1.xpose.msra.mxu0 0.0
        %1151 = vmatprep.subr.mxu0 0.0
        %1152 = vmatpush1.xpose.msra.mxu0 0.0
        %1153 = vmatprep.subr.mxu0 0.0
        %1154 = vmatpush1.xpose.msra.mxu0 0.0
        %1155 = vmatprep.subr.mxu0 0.0
        %1156 = vmatpush1.xpose.msra.mxu0 0.0
        %1157 = vmatprep.subr.mxu0 0.0
        %1158 = vmatpush1.xpose.msra.mxu0 0.0
        %1159 = vmatprep.subr.mxu0 0.0
        %1160 = vmatpush1.xpose.msra.mxu0 0.0
        %1161 = vmatprep.subr.mxu0 0.0
        %1162 = vmatpush1.xpose.msra.mxu0 0.0
        %1163 = vmatprep.subr.mxu0 0.0
        %1164 = vmatpush1.xpose.msra.mxu0 0.0
        %1165 = vmatprep.subr.mxu0 0.0
        %1166 = vmatpush1.xpose.msra.mxu0 0.0
        %1167 = vmatprep.subr.mxu0 0.0
        %1168 = vmatpush1.xpose.msra.mxu0 0.0
        %1169 = vmatprep.subr.mxu0 0.0
        %1170 = vmatpush1.xpose.msra.mxu0 0.0
        %1171 = vmatprep.subr.mxu0 0.0
        %1172 = vmatpush1.xpose.msra.mxu0 0.0
        %1173 = vmatprep.subr.mxu0 0.0
        %1174 = vmatpush1.xpose.msra.mxu0 0.0
        %1175 = vmatprep.subr.mxu0 0.0
        %1176 = vmatpush1.xpose.msra.mxu0 0.0
        %1177 = vmatprep.subr.mxu0 0.0
        %1178 = vmatpush1.xpose.msra.mxu0 0.0
        %1179 = vmatprep.subr.mxu0 0.0
        %1180 = vmatpush1.xpose.msra.mxu0 0.0
        %1181 = vmatprep.subr.mxu0 0.0
        %1182 = vmatpush1.xpose.msra.mxu0 0.0
        %1183 = vmatprep.mubr.f32.mxu0 0.0
        %1184 = vmatmul.mubr.f32.gmra.mrb[0].mxu0 %v1115
        %v1185 = vpop.f32.mrb[0].mxu0
        %v1186 = vadd.f32 0.0, %v1185
        %v1187 = vpop.f32.mrb[0].mxu0
        %1188 = vdwg.mxu0
        %vm1189 = vcmask 64512
        %v1190 = vsel %vm1189, %v647, -inf
        %1191 = vmax.xlane.f32.xlu0 %v1190
        %v1192 = vpop.xlane.xlu0 %1191
        %v1193 = vsel %vm1189, %v724, -inf
        %1194 = vmax.xlane.f32.xlu0 %v1193
        %v1195 = vpop.xlane.xlu0 %1194
        %v1196 = vsel %vm1189, %v801, -inf
        %1197 = vmax.xlane.f32.xlu0 %v1196
        %v1198 = vpop.xlane.xlu0 %1197
        %v1199 = vsel %vm1189, %v878, -inf
        %1200 = vmax.xlane.f32.xlu0 %v1199
        %v1201 = vpop.xlane.xlu0 %1200
        %v1202 = vsel %vm1189, %v955, -inf
        %1203 = vmax.xlane.f32.xlu0 %v1202
        %v1204 = vpop.xlane.xlu0 %1203
        %v1205 = vsel %vm1189, %v1032, -inf
        %1206 = vmax.xlane.f32.xlu0 %v1205
        %v1207 = vpop.xlane.xlu0 %1206
        %v1208 = vsel %vm1189, %v1109, -inf
        %1209 = vmax.xlane.f32.xlu0 %v1208
        %v1210 = vpop.xlane.xlu0 %1209
        %v1211 = vsel %vm1189, %v1186, -inf
        %1212 = vmax.xlane.f32.xlu0 %v1211
        %v1213 = vpop.xlane.xlu0 %1212
        %v1214 = vsub.f32 %v647, %v1192
        %v1215 = vsub.f32 %v724, %v1195
        %v1216 = vsub.f32 %v801, %v1198
        %v1217 = vsub.f32 %v878, %v1201
        %v1218 = vsub.f32 %v955, %v1204
        %v1219 = vsub.f32 %v1032, %v1207
        %v1220 = vsub.f32 %v1109, %v1210
        %v1221 = vsub.f32 %v1186, %v1213
        %v1222 = vmul.f32 %v1214, 1.442695
        %v1223 = vpow.pop %v1222
        %v1224 = vmul.f32 %v1215, 1.442695
        %v1225 = vpow.pop %v1224
        %v1226 = vmul.f32 %v1216, 1.442695
        %v1227 = vpow.pop %v1226
        %v1228 = vmul.f32 %v1217, 1.442695
        %v1229 = vpow.pop %v1228
        %v1230 = vmul.f32 %v1218, 1.442695
        %v1231 = vpow.pop %v1230
        %v1232 = vmul.f32 %v1219, 1.442695
        %v1233 = vpow.pop %v1232
        %v1234 = vmul.f32 %v1220, 1.442695
        %v1235 = vpow.pop %v1234
        %v1236 = vmul.f32 %v1221, 1.442695
        %v1237 = vpow.pop %v1236
        %v1238 = vsel %vm1189, %v1223, 0.0
        %1239 = vadd.xlane.f32.xlu0 %v1238
        %v1240 = vpop.xlane.xlu0 %1239
        %v1241 = vsel %vm1189, %v1225, 0.0
        %1242 = vadd.xlane.f32.xlu0 %v1241
        %v1243 = vpop.xlane.xlu0 %1242
        %v1244 = vsel %vm1189, %v1227, 0.0
        %1245 = vadd.xlane.f32.xlu0 %v1244
        %v1246 = vpop.xlane.xlu0 %1245
        %v1247 = vsel %vm1189, %v1229, 0.0
        %1248 = vadd.xlane.f32.xlu0 %v1247
        %v1249 = vpop.xlane.xlu0 %1248
        %v1250 = vsel %vm1189, %v1231, 0.0
        %1251 = vadd.xlane.f32.xlu0 %v1250
        %v1252 = vpop.xlane.xlu0 %1251
        %v1253 = vsel %vm1189, %v1233, 0.0
        %1254 = vadd.xlane.f32.xlu0 %v1253
        %v1255 = vpop.xlane.xlu0 %1254
        %v1256 = vsel %vm1189, %v1235, 0.0
        %1257 = vadd.xlane.f32.xlu0 %v1256
        %v1258 = vpop.xlane.xlu0 %1257
        %v1259 = vsel %vm1189, %v1237, 0.0
        %1260 = vadd.xlane.f32.xlu0 %v1259
        %v1261 = vpop.xlane.xlu0 %1260
        %1262 = vrot.lane.b32.xlu0 %v339, 96
        %v1263 = vpop.permute.xlu0 %1262
        %v1266 = vsel %vm1189, %v1223, 0
        %1268 = vmatprep.subr.mxu0 0.0
        %1269 = vmatpush1.msra.mxu0 %v1263
        %1270 = vmatprep.subr.mxu0 0.0
        %1271 = vmatpush1.msra.mxu0 0.0
        %1272 = vmatprep.subr.mxu0 0.0
        %1273 = vmatpush1.msra.mxu0 0.0
        %1274 = vmatprep.subr.mxu0 0.0
        %1275 = vmatpush1.msra.mxu0 0.0
        %1276 = vmatprep.subr.mxu0 0.0
        %1277 = vmatpush1.msra.mxu0 0.0
        %1278 = vmatprep.subr.mxu0 0.0
        %1279 = vmatpush1.msra.mxu0 0.0
        %1280 = vmatprep.subr.mxu0 0.0
        %1281 = vmatpush1.msra.mxu0 0.0
        %1282 = vmatprep.subr.mxu0 0.0
        %1283 = vmatpush1.msra.mxu0 0.0
        %1284 = vmatprep.subr.mxu0 0.0
        %1285 = vmatpush1.msra.mxu0 0.0
        %1286 = vmatprep.subr.mxu0 0.0
        %1287 = vmatpush1.msra.mxu0 0.0
        %1288 = vmatprep.subr.mxu0 0.0
        %1289 = vmatpush1.msra.mxu0 0.0
        %1290 = vmatprep.subr.mxu0 0.0
        %1291 = vmatpush1.msra.mxu0 0.0
        %1292 = vmatprep.subr.mxu0 0.0
        %1293 = vmatpush1.msra.mxu0 0.0
        %1294 = vmatprep.subr.mxu0 0.0
        %1295 = vmatpush1.msra.mxu0 0.0
        %1296 = vmatprep.subr.mxu0 0.0
        %1297 = vmatpush1.msra.mxu0 0.0
        %1298 = vmatprep.subr.mxu0 0.0
        %1299 = vmatpush1.msra.mxu0 0.0
        %1300 = vmatprep.subr.mxu0 0.0
        %1301 = vmatpush1.msra.mxu0 0.0
        %1302 = vmatprep.subr.mxu0 0.0
        %1303 = vmatpush1.msra.mxu0 0.0
        %1304 = vmatprep.subr.mxu0 0.0
        %1305 = vmatpush1.msra.mxu0 0.0
        %1306 = vmatprep.subr.mxu0 0.0
        %1307 = vmatpush1.msra.mxu0 0.0
        %1308 = vmatprep.subr.mxu0 0.0
        %1309 = vmatpush1.msra.mxu0 0.0
        %1310 = vmatprep.subr.mxu0 0.0
        %1311 = vmatpush1.msra.mxu0 0.0
        %1312 = vmatprep.subr.mxu0 0.0
        %1313 = vmatpush1.msra.mxu0 0.0
        %1314 = vmatprep.subr.mxu0 0.0
        %1315 = vmatpush1.msra.mxu0 0.0
        %1316 = vmatprep.subr.mxu0 0.0
        %1317 = vmatpush1.msra.mxu0 0.0
        %1318 = vmatprep.subr.mxu0 0.0
        %1319 = vmatpush1.msra.mxu0 0.0
        %1320 = vmatprep.subr.mxu0 0.0
        %1321 = vmatpush1.msra.mxu0 0.0
        %1322 = vmatprep.subr.mxu0 0.0
        %1323 = vmatpush1.msra.mxu0 0.0
        %1324 = vmatprep.subr.mxu0 0.0
        %1325 = vmatpush1.msra.mxu0 0.0
        %1326 = vmatprep.subr.mxu0 0.0
        %1327 = vmatpush1.msra.mxu0 0.0
        %1328 = vmatprep.subr.mxu0 0.0
        %1329 = vmatpush1.msra.mxu0 0.0
        %1330 = vmatprep.subr.mxu0 0.0
        %1331 = vmatpush1.msra.mxu0 0.0
        %1332 = vmatprep.mubr.f32.mxu0 0.0
        %1333 = vmatmul.mubr.f32.gmra.mrb[0].mxu0 %v1266
        %v1334 = vpop.f32.mrb[0].mxu0
        %v1335 = vadd.f32 0.0, %v1334
        %v1336 = vpop.f32.mrb[0].mxu0
        %1337 = vdwg.mxu0
        %1338 = vrot.lane.b32.xlu0 %v344, 96
        %v1339 = vpop.permute.xlu0 %1338
        %v1342 = vsel %vm1189, %v1225, 0
        %1344 = vmatprep.subr.mxu0 0.0
        %1345 = vmatpush1.msra.mxu0 %v1339
        %1346 = vmatprep.subr.mxu0 0.0
        %1347 = vmatpush1.msra.mxu0 0.0
        %1348 = vmatprep.subr.mxu0 0.0
        %1349 = vmatpush1.msra.mxu0 0.0
        %1350 = vmatprep.subr.mxu0 0.0
        %1351 = vmatpush1.msra.mxu0 0.0
        %1352 = vmatprep.subr.mxu0 0.0
        %1353 = vmatpush1.msra.mxu0 0.0
        %1354 = vmatprep.subr.mxu0 0.0
        %1355 = vmatpush1.msra.mxu0 0.0
        %1356 = vmatprep.subr.mxu0 0.0
        %1357 = vmatpush1.msra.mxu0 0.0
        %1358 = vmatprep.subr.mxu0 0.0
        %1359 = vmatpush1.msra.mxu0 0.0
        %1360 = vmatprep.subr.mxu0 0.0
        %1361 = vmatpush1.msra.mxu0 0.0
        %1362 = vmatprep.subr.mxu0 0.0
        %1363 = vmatpush1.msra.mxu0 0.0
        %1364 = vmatprep.subr.mxu0 0.0
        %1365 = vmatpush1.msra.mxu0 0.0
        %1366 = vmatprep.subr.mxu0 0.0
        %1367 = vmatpush1.msra.mxu0 0.0
        %1368 = vmatprep.subr.mxu0 0.0
        %1369 = vmatpush1.msra.mxu0 0.0
        %1370 = vmatprep.subr.mxu0 0.0
        %1371 = vmatpush1.msra.mxu0 0.0
        %1372 = vmatprep.subr.mxu0 0.0
        %1373 = vmatpush1.msra.mxu0 0.0
        %1374 = vmatprep.subr.mxu0 0.0
        %1375 = vmatpush1.msra.mxu0 0.0
        %1376 = vmatprep.subr.mxu0 0.0
        %1377 = vmatpush1.msra.mxu0 0.0
        %1378 = vmatprep.subr.mxu0 0.0
        %1379 = vmatpush1.msra.mxu0 0.0
        %1380 = vmatprep.subr.mxu0 0.0
        %1381 = vmatpush1.msra.mxu0 0.0
        %1382 = vmatprep.subr.mxu0 0.0
        %1383 = vmatpush1.msra.mxu0 0.0
        %1384 = vmatprep.subr.mxu0 0.0
        %1385 = vmatpush1.msra.mxu0 0.0
        %1386 = vmatprep.subr.mxu0 0.0
        %1387 = vmatpush1.msra.mxu0 0.0
        %1388 = vmatprep.subr.mxu0 0.0
        %1389 = vmatpush1.msra.mxu0 0.0
        %1390 = vmatprep.subr.mxu0 0.0
        %1391 = vmatpush1.msra.mxu0 0.0
        %1392 = vmatprep.subr.mxu0 0.0
        %1393 = vmatpush1.msra.mxu0 0.0
        %1394 = vmatprep.subr.mxu0 0.0
        %1395 = vmatpush1.msra.mxu0 0.0
        %1396 = vmatprep.subr.mxu0 0.0
        %1397 = vmatpush1.msra.mxu0 0.0
        %1398 = vmatprep.subr.mxu0 0.0
        %1399 = vmatpush1.msra.mxu0 0.0
        %1400 = vmatprep.subr.mxu0 0.0
        %1401 = vmatpush1.msra.mxu0 0.0
        %1402 = vmatprep.subr.mxu0 0.0
        %1403 = vmatpush1.msra.mxu0 0.0
        %1404 = vmatprep.subr.mxu0 0.0
        %1405 = vmatpush1.msra.mxu0 0.0
        %1406 = vmatprep.subr.mxu0 0.0
        %1407 = vmatpush1.msra.mxu0 0.0
        %1408 = vmatprep.mubr.f32.mxu0 0.0
        %1409 = vmatmul.mubr.f32.gmra.mrb[0].mxu0 %v1342
        %v1410 = vpop.f32.mrb[0].mxu0
        %v1411 = vadd.f32 0.0, %v1410
        %v1412 = vpop.f32.mrb[0].mxu0
        %1413 = vdwg.mxu0
        %1414 = vrot.lane.b32.xlu0 %v414, 96
        %v1415 = vpop.permute.xlu0 %1414
        %v1418 = vsel %vm1189, %v1227, 0
        %1420 = vmatprep.subr.mxu0 0.0
        %1421 = vmatpush1.msra.mxu0 %v1415
        %1422 = vmatprep.subr.mxu0 0.0
        %1423 = vmatpush1.msra.mxu0 0.0
        %1424 = vmatprep.subr.mxu0 0.0
        %1425 = vmatpush1.msra.mxu0 0.0
        %1426 = vmatprep.subr.mxu0 0.0
        %1427 = vmatpush1.msra.mxu0 0.0
        %1428 = vmatprep.subr.mxu0 0.0
        %1429 = vmatpush1.msra.mxu0 0.0
        %1430 = vmatprep.subr.mxu0 0.0
        %1431 = vmatpush1.msra.mxu0 0.0
        %1432 = vmatprep.subr.mxu0 0.0
        %1433 = vmatpush1.msra.mxu0 0.0
        %1434 = vmatprep.subr.mxu0 0.0
        %1435 = vmatpush1.msra.mxu0 0.0
        %1436 = vmatprep.subr.mxu0 0.0
        %1437 = vmatpush1.msra.mxu0 0.0
        %1438 = vmatprep.subr.mxu0 0.0
        %1439 = vmatpush1.msra.mxu0 0.0
        %1440 = vmatprep.subr.mxu0 0.0
        %1441 = vmatpush1.msra.mxu0 0.0
        %1442 = vmatprep.subr.mxu0 0.0
        %1443 = vmatpush1.msra.mxu0 0.0
        %1444 = vmatprep.subr.mxu0 0.0
        %1445 = vmatpush1.msra.mxu0 0.0
        %1446 = vmatprep.subr.mxu0 0.0
        %1447 = vmatpush1.msra.mxu0 0.0
        %1448 = vmatprep.subr.mxu0 0.0
        %1449 = vmatpush1.msra.mxu0 0.0
        %1450 = vmatprep.subr.mxu0 0.0
        %1451 = vmatpush1.msra.mxu0 0.0
        %1452 = vmatprep.subr.mxu0 0.0
        %1453 = vmatpush1.msra.mxu0 0.0
        %1454 = vmatprep.subr.mxu0 0.0
        %1455 = vmatpush1.msra.mxu0 0.0
        %1456 = vmatprep.subr.mxu0 0.0
        %1457 = vmatpush1.msra.mxu0 0.0
        %1458 = vmatprep.subr.mxu0 0.0
        %1459 = vmatpush1.msra.mxu0 0.0
        %1460 = vmatprep.subr.mxu0 0.0
        %1461 = vmatpush1.msra.mxu0 0.0
        %1462 = vmatprep.subr.mxu0 0.0
        %1463 = vmatpush1.msra.mxu0 0.0
        %1464 = vmatprep.subr.mxu0 0.0
        %1465 = vmatpush1.msra.mxu0 0.0
        %1466 = vmatprep.subr.mxu0 0.0
        %1467 = vmatpush1.msra.mxu0 0.0
        %1468 = vmatprep.subr.mxu0 0.0
        %1469 = vmatpush1.msra.mxu0 0.0
        %1470 = vmatprep.subr.mxu0 0.0
        %1471 = vmatpush1.msra.mxu0 0.0
        %1472 = vmatprep.subr.mxu0 0.0
        %1473 = vmatpush1.msra.mxu0 0.0
        %1474 = vmatprep.subr.mxu0 0.0
        %1475 = vmatpush1.msra.mxu0 0.0
        %1476 = vmatprep.subr.mxu0 0.0
        %1477 = vmatpush1.msra.mxu0 0.0
        %1478 = vmatprep.subr.mxu0 0.0
        %1479 = vmatpush1.msra.mxu0 0.0
        %1480 = vmatprep.subr.mxu0 0.0
        %1481 = vmatpush1.msra.mxu0 0.0
        %1482 = vmatprep.subr.mxu0 0.0
        %1483 = vmatpush1.msra.mxu0 0.0
        %1484 = vmatprep.mubr.f32.mxu0 0.0
        %1485 = vmatmul.mubr.f32.gmra.mrb[0].mxu0 %v1418
        %v1486 = vpop.f32.mrb[0].mxu0
        %v1487 = vadd.f32 0.0, %v1486
        %v1488 = vpop.f32.mrb[0].mxu0
        %1489 = vdwg.mxu0
        %1490 = vrot.lane.b32.xlu0 %v419, 96
        %v1491 = vpop.permute.xlu0 %1490
        %v1494 = vsel %vm1189, %v1229, 0
        %1496 = vmatprep.subr.mxu0 0.0
        %1497 = vmatpush1.msra.mxu0 %v1491
        %1498 = vmatprep.subr.mxu0 0.0
        %1499 = vmatpush1.msra.mxu0 0.0
        %1500 = vmatprep.subr.mxu0 0.0
        %1501 = vmatpush1.msra.mxu0 0.0
        %1502 = vmatprep.subr.mxu0 0.0
        %1503 = vmatpush1.msra.mxu0 0.0
        %1504 = vmatprep.subr.mxu0 0.0
        %1505 = vmatpush1.msra.mxu0 0.0
        %1506 = vmatprep.subr.mxu0 0.0
        %1507 = vmatpush1.msra.mxu0 0.0
        %1508 = vmatprep.subr.mxu0 0.0
        %1509 = vmatpush1.msra.mxu0 0.0
        %1510 = vmatprep.subr.mxu0 0.0
        %1511 = vmatpush1.msra.mxu0 0.0
        %1512 = vmatprep.subr.mxu0 0.0
        %1513 = vmatpush1.msra.mxu0 0.0
        %1514 = vmatprep.subr.mxu0 0.0
        %1515 = vmatpush1.msra.mxu0 0.0
        %1516 = vmatprep.subr.mxu0 0.0
        %1517 = vmatpush1.msra.mxu0 0.0
        %1518 = vmatprep.subr.mxu0 0.0
        %1519 = vmatpush1.msra.mxu0 0.0
        %1520 = vmatprep.subr.mxu0 0.0
        %1521 = vmatpush1.msra.mxu0 0.0
        %1522 = vmatprep.subr.mxu0 0.0
        %1523 = vmatpush1.msra.mxu0 0.0
        %1524 = vmatprep.subr.mxu0 0.0
        %1525 = vmatpush1.msra.mxu0 0.0
        %1526 = vmatprep.subr.mxu0 0.0
        %1527 = vmatpush1.msra.mxu0 0.0
        %1528 = vmatprep.subr.mxu0 0.0
        %1529 = vmatpush1.msra.mxu0 0.0
        %1530 = vmatprep.subr.mxu0 0.0
        %1531 = vmatpush1.msra.mxu0 0.0
        %1532 = vmatprep.subr.mxu0 0.0
        %1533 = vmatpush1.msra.mxu0 0.0
        %1534 = vmatprep.subr.mxu0 0.0
        %1535 = vmatpush1.msra.mxu0 0.0
        %1536 = vmatprep.subr.mxu0 0.0
        %1537 = vmatpush1.msra.mxu0 0.0
        %1538 = vmatprep.subr.mxu0 0.0
        %1539 = vmatpush1.msra.mxu0 0.0
        %1540 = vmatprep.subr.mxu0 0.0
        %1541 = vmatpush1.msra.mxu0 0.0
        %1542 = vmatprep.subr.mxu0 0.0
        %1543 = vmatpush1.msra.mxu0 0.0
        %1544 = vmatprep.subr.mxu0 0.0
        %1545 = vmatpush1.msra.mxu0 0.0
        %1546 = vmatprep.subr.mxu0 0.0
        %1547 = vmatpush1.msra.mxu0 0.0
        %1548 = vmatprep.subr.mxu0 0.0
        %1549 = vmatpush1.msra.mxu0 0.0
        %1550 = vmatprep.subr.mxu0 0.0
        %1551 = vmatpush1.msra.mxu0 0.0
        %1552 = vmatprep.subr.mxu0 0.0
        %1553 = vmatpush1.msra.mxu0 0.0
        %1554 = vmatprep.subr.mxu0 0.0
        %1555 = vmatpush1.msra.mxu0 0.0
        %1556 = vmatprep.subr.mxu0 0.0
        %1557 = vmatpush1.msra.mxu0 0.0
        %1558 = vmatprep.subr.mxu0 0.0
        %1559 = vmatpush1.msra.mxu0 0.0
        %1560 = vmatprep.mubr.f32.mxu0 0.0
        %1561 = vmatmul.mubr.f32.gmra.mrb[0].mxu0 %v1494
        %v1562 = vpop.f32.mrb[0].mxu0
        %v1563 = vadd.f32 0.0, %v1562
        %v1564 = vpop.f32.mrb[0].mxu0
        %1565 = vdwg.mxu0
        %1566 = vrot.lane.b32.xlu0 %v489, 96
        %v1567 = vpop.permute.xlu0 %1566
        %v1570 = vsel %vm1189, %v1231, 0
        %1572 = vmatprep.subr.mxu0 0.0
        %1573 = vmatpush1.msra.mxu0 %v1567
        %1574 = vmatprep.subr.mxu0 0.0
        %1575 = vmatpush1.msra.mxu0 0.0
        %1576 = vmatprep.subr.mxu0 0.0
        %1577 = vmatpush1.msra.mxu0 0.0
        %1578 = vmatprep.subr.mxu0 0.0
        %1579 = vmatpush1.msra.mxu0 0.0
        %1580 = vmatprep.subr.mxu0 0.0
        %1581 = vmatpush1.msra.mxu0 0.0
        %1582 = vmatprep.subr.mxu0 0.0
        %1583 = vmatpush1.msra.mxu0 0.0
        %1584 = vmatprep.subr.mxu0 0.0
        %1585 = vmatpush1.msra.mxu0 0.0
        %1586 = vmatprep.subr.mxu0 0.0
        %1587 = vmatpush1.msra.mxu0 0.0
        %1588 = vmatprep.subr.mxu0 0.0
        %1589 = vmatpush1.msra.mxu0 0.0
        %1590 = vmatprep.subr.mxu0 0.0
        %1591 = vmatpush1.msra.mxu0 0.0
        %1592 = vmatprep.subr.mxu0 0.0
        %1593 = vmatpush1.msra.mxu0 0.0
        %1594 = vmatprep.subr.mxu0 0.0
        %1595 = vmatpush1.msra.mxu0 0.0
        %1596 = vmatprep.subr.mxu0 0.0
        %1597 = vmatpush1.msra.mxu0 0.0
        %1598 = vmatprep.subr.mxu0 0.0
        %1599 = vmatpush1.msra.mxu0 0.0
        %1600 = vmatprep.subr.mxu0 0.0
        %1601 = vmatpush1.msra.mxu0 0.0
        %1602 = vmatprep.subr.mxu0 0.0
        %1603 = vmatpush1.msra.mxu0 0.0
        %1604 = vmatprep.subr.mxu0 0.0
        %1605 = vmatpush1.msra.mxu0 0.0
        %1606 = vmatprep.subr.mxu0 0.0
        %1607 = vmatpush1.msra.mxu0 0.0
        %1608 = vmatprep.subr.mxu0 0.0
        %1609 = vmatpush1.msra.mxu0 0.0
        %1610 = vmatprep.subr.mxu0 0.0
        %1611 = vmatpush1.msra.mxu0 0.0
        %1612 = vmatprep.subr.mxu0 0.0
        %1613 = vmatpush1.msra.mxu0 0.0
        %1614 = vmatprep.subr.mxu0 0.0
        %1615 = vmatpush1.msra.mxu0 0.0
        %1616 = vmatprep.subr.mxu0 0.0
        %1617 = vmatpush1.msra.mxu0 0.0
        %1618 = vmatprep.subr.mxu0 0.0
        %1619 = vmatpush1.msra.mxu0 0.0
        %1620 = vmatprep.subr.mxu0 0.0
        %1621 = vmatpush1.msra.mxu0 0.0
        %1622 = vmatprep.subr.mxu0 0.0
        %1623 = vmatpush1.msra.mxu0 0.0
        %1624 = vmatprep.subr.mxu0 0.0
        %1625 = vmatpush1.msra.mxu0 0.0
        %1626 = vmatprep.subr.mxu0 0.0
        %1627 = vmatpush1.msra.mxu0 0.0
        %1628 = vmatprep.subr.mxu0 0.0
        %1629 = vmatpush1.msra.mxu0 0.0
        %1630 = vmatprep.subr.mxu0 0.0
        %1631 = vmatpush1.msra.mxu0 0.0
        %1632 = vmatprep.subr.mxu0 0.0
        %1633 = vmatpush1.msra.mxu0 0.0
        %1634 = vmatprep.subr.mxu0 0.0
        %1635 = vmatpush1.msra.mxu0 0.0
        %1636 = vmatprep.mubr.f32.mxu0 0.0
        %1637 = vmatmul.mubr.f32.gmra.mrb[0].mxu0 %v1570
        %v1638 = vpop.f32.mrb[0].mxu0
        %v1639 = vadd.f32 0.0, %v1638
        %v1640 = vpop.f32.mrb[0].mxu0
        %1641 = vdwg.mxu0
        %1642 = vrot.lane.b32.xlu0 %v494, 96
        %v1643 = vpop.permute.xlu0 %1642
        %v1646 = vsel %vm1189, %v1233, 0
        %1648 = vmatprep.subr.mxu0 0.0
        %1649 = vmatpush1.msra.mxu0 %v1643
        %1650 = vmatprep.subr.mxu0 0.0
        %1651 = vmatpush1.msra.mxu0 0.0
        %1652 = vmatprep.subr.mxu0 0.0
        %1653 = vmatpush1.msra.mxu0 0.0
        %1654 = vmatprep.subr.mxu0 0.0
        %1655 = vmatpush1.msra.mxu0 0.0
        %1656 = vmatprep.subr.mxu0 0.0
        %1657 = vmatpush1.msra.mxu0 0.0
        %1658 = vmatprep.subr.mxu0 0.0
        %1659 = vmatpush1.msra.mxu0 0.0
        %1660 = vmatprep.subr.mxu0 0.0
        %1661 = vmatpush1.msra.mxu0 0.0
        %1662 = vmatprep.subr.mxu0 0.0
        %1663 = vmatpush1.msra.mxu0 0.0
        %1664 = vmatprep.subr.mxu0 0.0
        %1665 = vmatpush1.msra.mxu0 0.0
        %1666 = vmatprep.subr.mxu0 0.0
        %1667 = vmatpush1.msra.mxu0 0.0
        %1668 = vmatprep.subr.mxu0 0.0
        %1669 = vmatpush1.msra.mxu0 0.0
        %1670 = vmatprep.subr.mxu0 0.0
        %1671 = vmatpush1.msra.mxu0 0.0
        %1672 = vmatprep.subr.mxu0 0.0
        %1673 = vmatpush1.msra.mxu0 0.0
        %1674 = vmatprep.subr.mxu0 0.0
        %1675 = vmatpush1.msra.mxu0 0.0
        %1676 = vmatprep.subr.mxu0 0.0
        %1677 = vmatpush1.msra.mxu0 0.0
        %1678 = vmatprep.subr.mxu0 0.0
        %1679 = vmatpush1.msra.mxu0 0.0
        %1680 = vmatprep.subr.mxu0 0.0
        %1681 = vmatpush1.msra.mxu0 0.0
        %1682 = vmatprep.subr.mxu0 0.0
        %1683 = vmatpush1.msra.mxu0 0.0
        %1684 = vmatprep.subr.mxu0 0.0
        %1685 = vmatpush1.msra.mxu0 0.0
        %1686 = vmatprep.subr.mxu0 0.0
        %1687 = vmatpush1.msra.mxu0 0.0
        %1688 = vmatprep.subr.mxu0 0.0
        %1689 = vmatpush1.msra.mxu0 0.0
        %1690 = vmatprep.subr.mxu0 0.0
        %1691 = vmatpush1.msra.mxu0 0.0
        %1692 = vmatprep.subr.mxu0 0.0
        %1693 = vmatpush1.msra.mxu0 0.0
        %1694 = vmatprep.subr.mxu0 0.0
        %1695 = vmatpush1.msra.mxu0 0.0
        %1696 = vmatprep.subr.mxu0 0.0
        %1697 = vmatpush1.msra.mxu0 0.0
        %1698 = vmatprep.subr.mxu0 0.0
        %1699 = vmatpush1.msra.mxu0 0.0
        %1700 = vmatprep.subr.mxu0 0.0
        %1701 = vmatpush1.msra.mxu0 0.0
        %1702 = vmatprep.subr.mxu0 0.0
        %1703 = vmatpush1.msra.mxu0 0.0
        %1704 = vmatprep.subr.mxu0 0.0
        %1705 = vmatpush1.msra.mxu0 0.0
        %1706 = vmatprep.subr.mxu0 0.0
        %1707 = vmatpush1.msra.mxu0 0.0
        %1708 = vmatprep.subr.mxu0 0.0
        %1709 = vmatpush1.msra.mxu0 0.0
        %1710 = vmatprep.subr.mxu0 0.0
        %1711 = vmatpush1.msra.mxu0 0.0
        %1712 = vmatprep.mubr.f32.mxu0 0.0
        %1713 = vmatmul.mubr.f32.gmra.mrb[0].mxu0 %v1646
        %v1714 = vpop.f32.mrb[0].mxu0
        %v1715 = vadd.f32 0.0, %v1714
        %v1716 = vpop.f32.mrb[0].mxu0
        %1717 = vdwg.mxu0
        %1718 = vrot.lane.b32.xlu0 %v564, 96
        %v1719 = vpop.permute.xlu0 %1718
        %v1722 = vsel %vm1189, %v1235, 0
        %1724 = vmatprep.subr.mxu0 0.0
        %1725 = vmatpush1.msra.mxu0 %v1719
        %1726 = vmatprep.subr.mxu0 0.0
        %1727 = vmatpush1.msra.mxu0 0.0
        %1728 = vmatprep.subr.mxu0 0.0
        %1729 = vmatpush1.msra.mxu0 0.0
        %1730 = vmatprep.subr.mxu0 0.0
        %1731 = vmatpush1.msra.mxu0 0.0
        %1732 = vmatprep.subr.mxu0 0.0
        %1733 = vmatpush1.msra.mxu0 0.0
        %1734 = vmatprep.subr.mxu0 0.0
        %1735 = vmatpush1.msra.mxu0 0.0
        %1736 = vmatprep.subr.mxu0 0.0
        %1737 = vmatpush1.msra.mxu0 0.0
        %1738 = vmatprep.subr.mxu0 0.0
        %1739 = vmatpush1.msra.mxu0 0.0
        %1740 = vmatprep.subr.mxu0 0.0
        %1741 = vmatpush1.msra.mxu0 0.0
        %1742 = vmatprep.subr.mxu0 0.0
        %1743 = vmatpush1.msra.mxu0 0.0
        %1744 = vmatprep.subr.mxu0 0.0
        %1745 = vmatpush1.msra.mxu0 0.0
        %1746 = vmatprep.subr.mxu0 0.0
        %1747 = vmatpush1.msra.mxu0 0.0
        %1748 = vmatprep.subr.mxu0 0.0
        %1749 = vmatpush1.msra.mxu0 0.0
        %1750 = vmatprep.subr.mxu0 0.0
        %1751 = vmatpush1.msra.mxu0 0.0
        %1752 = vmatprep.subr.mxu0 0.0
        %1753 = vmatpush1.msra.mxu0 0.0
        %1754 = vmatprep.subr.mxu0 0.0
        %1755 = vmatpush1.msra.mxu0 0.0
        %1756 = vmatprep.subr.mxu0 0.0
        %1757 = vmatpush1.msra.mxu0 0.0
        %1758 = vmatprep.subr.mxu0 0.0
        %1759 = vmatpush1.msra.mxu0 0.0
        %1760 = vmatprep.subr.mxu0 0.0
        %1761 = vmatpush1.msra.mxu0 0.0
        %1762 = vmatprep.subr.mxu0 0.0
        %1763 = vmatpush1.msra.mxu0 0.0
        %1764 = vmatprep.subr.mxu0 0.0
        %1765 = vmatpush1.msra.mxu0 0.0
        %1766 = vmatprep.subr.mxu0 0.0
        %1767 = vmatpush1.msra.mxu0 0.0
        %1768 = vmatprep.subr.mxu0 0.0
        %1769 = vmatpush1.msra.mxu0 0.0
        %1770 = vmatprep.subr.mxu0 0.0
        %1771 = vmatpush1.msra.mxu0 0.0
        %1772 = vmatprep.subr.mxu0 0.0
        %1773 = vmatpush1.msra.mxu0 0.0
        %1774 = vmatprep.subr.mxu0 0.0
        %1775 = vmatpush1.msra.mxu0 0.0
        %1776 = vmatprep.subr.mxu0 0.0
        %1777 = vmatpush1.msra.mxu0 0.0
        %1778 = vmatprep.subr.mxu0 0.0
        %1779 = vmatpush1.msra.mxu0 0.0
        %1780 = vmatprep.subr.mxu0 0.0
        %1781 = vmatpush1.msra.mxu0 0.0
        %1782 = vmatprep.subr.mxu0 0.0
        %1783 = vmatpush1.msra.mxu0 0.0
        %1784 = vmatprep.subr.mxu0 0.0
        %1785 = vmatpush1.msra.mxu0 0.0
        %1786 = vmatprep.subr.mxu0 0.0
        %1787 = vmatpush1.msra.mxu0 0.0
        %1788 = vmatprep.mubr.f32.mxu0 0.0
        %1789 = vmatmul.mubr.f32.gmra.mrb[0].mxu0 %v1722
        %v1790 = vpop.f32.mrb[0].mxu0
        %v1791 = vadd.f32 0.0, %v1790
        %v1792 = vpop.f32.mrb[0].mxu0
        %1793 = vdwg.mxu0
        %1794 = vrot.lane.b32.xlu0 %v569, 96
        %v1795 = vpop.permute.xlu0 %1794
        %v1798 = vsel %vm1189, %v1237, 0
        %1800 = vmatprep.subr.mxu0 0.0
        %1801 = vmatpush1.msra.mxu0 %v1795
        %1802 = vmatprep.subr.mxu0 0.0
        %1803 = vmatpush1.msra.mxu0 0.0
        %1804 = vmatprep.subr.mxu0 0.0
        %1805 = vmatpush1.msra.mxu0 0.0
        %1806 = vmatprep.subr.mxu0 0.0
        %1807 = vmatpush1.msra.mxu0 0.0
        %1808 = vmatprep.subr.mxu0 0.0
        %1809 = vmatpush1.msra.mxu0 0.0
        %1810 = vmatprep.subr.mxu0 0.0
        %1811 = vmatpush1.msra.mxu0 0.0
        %1812 = vmatprep.subr.mxu0 0.0
        %1813 = vmatpush1.msra.mxu0 0.0
        %1814 = vmatprep.subr.mxu0 0.0
        %1815 = vmatpush1.msra.mxu0 0.0
        %1816 = vmatprep.subr.mxu0 0.0
        %1817 = vmatpush1.msra.mxu0 0.0
        %1818 = vmatprep.subr.mxu0 0.0
        %1819 = vmatpush1.msra.mxu0 0.0
        %1820 = vmatprep.subr.mxu0 0.0
        %1821 = vmatpush1.msra.mxu0 0.0
        %1822 = vmatprep.subr.mxu0 0.0
        %1823 = vmatpush1.msra.mxu0 0.0
        %1824 = vmatprep.subr.mxu0 0.0
        %1825 = vmatpush1.msra.mxu0 0.0
        %1826 = vmatprep.subr.mxu0 0.0
        %1827 = vmatpush1.msra.mxu0 0.0
        %1828 = vmatprep.subr.mxu0 0.0
        %1829 = vmatpush1.msra.mxu0 0.0
        %1830 = vmatprep.subr.mxu0 0.0
        %1831 = vmatpush1.msra.mxu0 0.0
        %1832 = vmatprep.subr.mxu0 0.0
        %1833 = vmatpush1.msra.mxu0 0.0
        %1834 = vmatprep.subr.mxu0 0.0
        %1835 = vmatpush1.msra.mxu0 0.0
        %1836 = vmatprep.subr.mxu0 0.0
        %1837 = vmatpush1.msra.mxu0 0.0
        %1838 = vmatprep.subr.mxu0 0.0
        %1839 = vmatpush1.msra.mxu0 0.0
        %1840 = vmatprep.subr.mxu0 0.0
        %1841 = vmatpush1.msra.mxu0 0.0
        %1842 = vmatprep.subr.mxu0 0.0
        %1843 = vmatpush1.msra.mxu0 0.0
        %1844 = vmatprep.subr.mxu0 0.0
        %1845 = vmatpush1.msra.mxu0 0.0
        %1846 = vmatprep.subr.mxu0 0.0
        %1847 = vmatpush1.msra.mxu0 0.0
        %1848 = vmatprep.subr.mxu0 0.0
        %1849 = vmatpush1.msra.mxu0 0.0
        %1850 = vmatprep.subr.mxu0 0.0
        %1851 = vmatpush1.msra.mxu0 0.0
        %1852 = vmatprep.subr.mxu0 0.0
        %1853 = vmatpush1.msra.mxu0 0.0
        %1854 = vmatprep.subr.mxu0 0.0
        %1855 = vmatpush1.msra.mxu0 0.0
        %1856 = vmatprep.subr.mxu0 0.0
        %1857 = vmatpush1.msra.mxu0 0.0
        %1858 = vmatprep.subr.mxu0 0.0
        %1859 = vmatpush1.msra.mxu0 0.0
        %1860 = vmatprep.subr.mxu0 0.0
        %1861 = vmatpush1.msra.mxu0 0.0
        %1862 = vmatprep.subr.mxu0 0.0
        %1863 = vmatpush1.msra.mxu0 0.0
        %1864 = vmatprep.mubr.f32.mxu0 0.0
        %1865 = vmatmul.mubr.f32.gmra.mrb[0].mxu0 %v1798
        %v1866 = vpop.f32.mrb[0].mxu0
        %v1867 = vadd.f32 0.0, %v1866
        %v1868 = vpop.f32.mrb[0].mxu0
        %1869 = vdwg.mxu0
        %v1870 = vrcp.pop %v1240
        %v1871 = vrcp.pop %v1243
        %v1872 = vrcp.pop %v1246
        %v1873 = vrcp.pop %v1249
        %v1874 = vrcp.pop %v1252
        %v1875 = vrcp.pop %v1255
        %v1876 = vrcp.pop %v1258
        %v1877 = vrcp.pop %v1261
        %v1878 = vmul.f32 %v1335, %v1870
        %v1879 = vmul.f32 %v1411, %v1871
        %v1880 = vmul.f32 %v1487, %v1872
        %v1881 = vmul.f32 %v1563, %v1873
        %v1882 = vmul.f32 %v1639, %v1874
        %v1883 = vmul.f32 %v1715, %v1875
        %v1884 = vmul.f32 %v1791, %v1876
        %v1885 = vmul.f32 %v1867, %v1877
        %v1886 = vld [vmem:[#allocation7] sm:$0xff]
        %v1887 = vld [vmem:[#allocation7 + $0x8] sm:$0xff]
        %v1888 = vld [vmem:[#allocation7 + $0x10] sm:$0xff]
        %v1889 = vld [vmem:[#allocation7 + $0x18] sm:$0xff]
        %v1890 = vld [vmem:[#allocation7 + $0x20] sm:$0xff]
        %v1891 = vld [vmem:[#allocation7 + $0x28] sm:$0xff]
        %v1892 = vld [vmem:[#allocation7 + $0x30] sm:$0xff]
        %v1893 = vld [vmem:[#allocation7 + $0x38] sm:$0xff]
        %v1895 = vsel %vm575, %v1878, 0
        %v1898 = vsel %vm575, %v1879, 0
        %1900 = vmatprep.subr.mxu0 0.0
        %1901 = vmatpush1.msra.mxu0 %v1886
        %1902 = vmatprep.subr.mxu0 0.0
        %1903 = vmatpush1.msra.mxu0 %v1887
        %1904 = vmatprep.subr.mxu0 0.0
        %1905 = vmatpush1.msra.mxu0 0.0
        %1906 = vmatprep.subr.mxu0 0.0
        %1907 = vmatpush1.msra.mxu0 0.0
        %1908 = vmatprep.subr.mxu0 0.0
        %1909 = vmatpush1.msra.mxu0 0.0
        %1910 = vmatprep.subr.mxu0 0.0
        %1911 = vmatpush1.msra.mxu0 0.0
        %1912 = vmatprep.subr.mxu0 0.0
        %1913 = vmatpush1.msra.mxu0 0.0
        %1914 = vmatprep.subr.mxu0 0.0
        %1915 = vmatpush1.msra.mxu0 0.0
        %1916 = vmatprep.subr.mxu0 0.0
        %1917 = vmatpush1.msra.mxu0 0.0
        %1918 = vmatprep.subr.mxu0 0.0
        %1919 = vmatpush1.msra.mxu0 0.0
        %1920 = vmatprep.subr.mxu0 0.0
        %1921 = vmatpush1.msra.mxu0 0.0
        %1922 = vmatprep.subr.mxu0 0.0
        %1923 = vmatpush1.msra.mxu0 0.0
        %1924 = vmatprep.subr.mxu0 0.0
        %1925 = vmatpush1.msra.mxu0 0.0
        %1926 = vmatprep.subr.mxu0 0.0
        %1927 = vmatpush1.msra.mxu0 0.0
        %1928 = vmatprep.subr.mxu0 0.0
        %1929 = vmatpush1.msra.mxu0 0.0
        %1930 = vmatprep.subr.mxu0 0.0
        %1931 = vmatpush1.msra.mxu0 0.0
        %1932 = vmatprep.subr.mxu0 0.0
        %1933 = vmatpush1.msra.mxu0 0.0
        %1934 = vmatprep.subr.mxu0 0.0
        %1935 = vmatpush1.msra.mxu0 0.0
        %1936 = vmatprep.subr.mxu0 0.0
        %1937 = vmatpush1.msra.mxu0 0.0
        %1938 = vmatprep.subr.mxu0 0.0
        %1939 = vmatpush1.msra.mxu0 0.0
        %1940 = vmatprep.subr.mxu0 0.0
        %1941 = vmatpush1.msra.mxu0 0.0
        %1942 = vmatprep.subr.mxu0 0.0
        %1943 = vmatpush1.msra.mxu0 0.0
        %1944 = vmatprep.subr.mxu0 0.0
        %1945 = vmatpush1.msra.mxu0 0.0
        %1946 = vmatprep.subr.mxu0 0.0
        %1947 = vmatpush1.msra.mxu0 0.0
        %1948 = vmatprep.subr.mxu0 0.0
        %1949 = vmatpush1.msra.mxu0 0.0
        %1950 = vmatprep.subr.mxu0 0.0
        %1951 = vmatpush1.msra.mxu0 0.0
        %1952 = vmatprep.subr.mxu0 0.0
        %1953 = vmatpush1.msra.mxu0 0.0
        %1954 = vmatprep.subr.mxu0 0.0
        %1955 = vmatpush1.msra.mxu0 0.0
        %1956 = vmatprep.subr.mxu0 0.0
        %1957 = vmatpush1.msra.mxu0 0.0
        %1958 = vmatprep.subr.mxu0 0.0
        %1959 = vmatpush1.msra.mxu0 0.0
        %1960 = vmatprep.subr.mxu0 0.0
        %1961 = vmatpush1.msra.mxu0 0.0
        %1962 = vmatprep.subr.mxu0 0.0
        %1963 = vmatpush1.msra.mxu0 0.0
        %1964 = vmatprep.mubr.f32.mxu0 0.0
        %1965 = vmatmul.mubr.f32.gmra.mrb[0].mxu0 %v1895
        %v1966 = vpop.f32.mrb[0].mxu0
        %v1967 = vadd.f32 0.0, %v1966
        %v1968 = vpop.f32.mrb[0].mxu0
        %1969 = vmatprep.mubr.f32.mxu0 0.0
        %1970 = vmatmul.mubr.f32.gmra.mrb[0].mxu0 %v1898
        %v1971 = vpop.f32.mrb[0].mxu0
        %v1972 = vadd.f32 0.0, %v1971
        %v1973 = vpop.f32.mrb[0].mxu0
        %1974 = vdwg.mxu0
        %v1976 = vsel %vm575, %v1880, 0
        %v1979 = vsel %vm575, %v1881, 0
        %1981 = vmatprep.subr.mxu0 0.0
        %1982 = vmatpush1.msra.mxu0 %v1888
        %1983 = vmatprep.subr.mxu0 0.0
        %1984 = vmatpush1.msra.mxu0 %v1889
        %1985 = vmatprep.subr.mxu0 0.0
        %1986 = vmatpush1.msra.mxu0 0.0
        %1987 = vmatprep.subr.mxu0 0.0
        %1988 = vmatpush1.msra.mxu0 0.0
        %1989 = vmatprep.subr.mxu0 0.0
        %1990 = vmatpush1.msra.mxu0 0.0
        %1991 = vmatprep.subr.mxu0 0.0
        %1992 = vmatpush1.msra.mxu0 0.0
        %1993 = vmatprep.subr.mxu0 0.0
        %1994 = vmatpush1.msra.mxu0 0.0
        %1995 = vmatprep.subr.mxu0 0.0
        %1996 = vmatpush1.msra.mxu0 0.0
        %1997 = vmatprep.subr.mxu0 0.0
        %1998 = vmatpush1.msra.mxu0 0.0
        %1999 = vmatprep.subr.mxu0 0.0
        %2000 = vmatpush1.msra.mxu0 0.0
        %2001 = vmatprep.subr.mxu0 0.0
        %2002 = vmatpush1.msra.mxu0 0.0
        %2003 = vmatprep.subr.mxu0 0.0
        %2004 = vmatpush1.msra.mxu0 0.0
        %2005 = vmatprep.subr.mxu0 0.0
        %2006 = vmatpush1.msra.mxu0 0.0
        %2007 = vmatprep.subr.mxu0 0.0
        %2008 = vmatpush1.msra.mxu0 0.0
        %2009 = vmatprep.subr.mxu0 0.0
        %2010 = vmatpush1.msra.mxu0 0.0
        %2011 = vmatprep.subr.mxu0 0.0
        %2012 = vmatpush1.msra.mxu0 0.0
        %2013 = vmatprep.subr.mxu0 0.0
        %2014 = vmatpush1.msra.mxu0 0.0
        %2015 = vmatprep.subr.mxu0 0.0
        %2016 = vmatpush1.msra.mxu0 0.0
        %2017 = vmatprep.subr.mxu0 0.0
        %2018 = vmatpush1.msra.mxu0 0.0
        %2019 = vmatprep.subr.mxu0 0.0
        %2020 = vmatpush1.msra.mxu0 0.0
        %2021 = vmatprep.subr.mxu0 0.0
        %2022 = vmatpush1.msra.mxu0 0.0
        %2023 = vmatprep.subr.mxu0 0.0
        %2024 = vmatpush1.msra.mxu0 0.0
        %2025 = vmatprep.subr.mxu0 0.0
        %2026 = vmatpush1.msra.mxu0 0.0
        %2027 = vmatprep.subr.mxu0 0.0
        %2028 = vmatpush1.msra.mxu0 0.0
        %2029 = vmatprep.subr.mxu0 0.0
        %2030 = vmatpush1.msra.mxu0 0.0
        %2031 = vmatprep.subr.mxu0 0.0
        %2032 = vmatpush1.msra.mxu0 0.0
        %2033 = vmatprep.subr.mxu0 0.0
        %2034 = vmatpush1.msra.mxu0 0.0
        %2035 = vmatprep.subr.mxu0 0.0
        %2036 = vmatpush1.msra.mxu0 0.0
        %2037 = vmatprep.subr.mxu0 0.0
        %2038 = vmatpush1.msra.mxu0 0.0
        %2039 = vmatprep.subr.mxu0 0.0
        %2040 = vmatpush1.msra.mxu0 0.0
        %2041 = vmatprep.subr.mxu0 0.0
        %2042 = vmatpush1.msra.mxu0 0.0
        %2043 = vmatprep.subr.mxu0 0.0
        %2044 = vmatpush1.msra.mxu0 0.0
        %2045 = vmatprep.mubr.f32.mxu0 0.0
        %2046 = vmatmul.mubr.f32.gmra.mrb[0].mxu0 %v1976
        %v2047 = vpop.f32.mrb[0].mxu0
        %v2048 = vadd.f32 0.0, %v2047
        %v2049 = vpop.f32.mrb[0].mxu0
        %2050 = vmatprep.mubr.f32.mxu0 0.0
        %2051 = vmatmul.mubr.f32.gmra.mrb[0].mxu0 %v1979
        %v2052 = vpop.f32.mrb[0].mxu0
        %v2053 = vadd.f32 0.0, %v2052
        %v2054 = vpop.f32.mrb[0].mxu0
        %2055 = vdwg.mxu0
        %v2057 = vsel %vm575, %v1882, 0
        %v2060 = vsel %vm575, %v1883, 0
        %2062 = vmatprep.subr.mxu0 0.0
        %2063 = vmatpush1.msra.mxu0 %v1890
        %2064 = vmatprep.subr.mxu0 0.0
        %2065 = vmatpush1.msra.mxu0 %v1891
        %2066 = vmatprep.subr.mxu0 0.0
        %2067 = vmatpush1.msra.mxu0 0.0
        %2068 = vmatprep.subr.mxu0 0.0
        %2069 = vmatpush1.msra.mxu0 0.0
        %2070 = vmatprep.subr.mxu0 0.0
        %2071 = vmatpush1.msra.mxu0 0.0
        %2072 = vmatprep.subr.mxu0 0.0
        %2073 = vmatpush1.msra.mxu0 0.0
        %2074 = vmatprep.subr.mxu0 0.0
        %2075 = vmatpush1.msra.mxu0 0.0
        %2076 = vmatprep.subr.mxu0 0.0
        %2077 = vmatpush1.msra.mxu0 0.0
        %2078 = vmatprep.subr.mxu0 0.0
        %2079 = vmatpush1.msra.mxu0 0.0
        %2080 = vmatprep.subr.mxu0 0.0
        %2081 = vmatpush1.msra.mxu0 0.0
        %2082 = vmatprep.subr.mxu0 0.0
        %2083 = vmatpush1.msra.mxu0 0.0
        %2084 = vmatprep.subr.mxu0 0.0
        %2085 = vmatpush1.msra.mxu0 0.0
        %2086 = vmatprep.subr.mxu0 0.0
        %2087 = vmatpush1.msra.mxu0 0.0
        %2088 = vmatprep.subr.mxu0 0.0
        %2089 = vmatpush1.msra.mxu0 0.0
        %2090 = vmatprep.subr.mxu0 0.0
        %2091 = vmatpush1.msra.mxu0 0.0
        %2092 = vmatprep.subr.mxu0 0.0
        %2093 = vmatpush1.msra.mxu0 0.0
        %2094 = vmatprep.subr.mxu0 0.0
        %2095 = vmatpush1.msra.mxu0 0.0
        %2096 = vmatprep.subr.mxu0 0.0
        %2097 = vmatpush1.msra.mxu0 0.0
        %2098 = vmatprep.subr.mxu0 0.0
        %2099 = vmatpush1.msra.mxu0 0.0
        %2100 = vmatprep.subr.mxu0 0.0
        %2101 = vmatpush1.msra.mxu0 0.0
        %2102 = vmatprep.subr.mxu0 0.0
        %2103 = vmatpush1.msra.mxu0 0.0
        %2104 = vmatprep.subr.mxu0 0.0
        %2105 = vmatpush1.msra.mxu0 0.0
        %2106 = vmatprep.subr.mxu0 0.0
        %2107 = vmatpush1.msra.mxu0 0.0
        %2108 = vmatprep.subr.mxu0 0.0
        %2109 = vmatpush1.msra.mxu0 0.0
        %2110 = vmatprep.subr.mxu0 0.0
        %2111 = vmatpush1.msra.mxu0 0.0
        %2112 = vmatprep.subr.mxu0 0.0
        %2113 = vmatpush1.msra.mxu0 0.0
        %2114 = vmatprep.subr.mxu0 0.0
        %2115 = vmatpush1.msra.mxu0 0.0
        %2116 = vmatprep.subr.mxu0 0.0
        %2117 = vmatpush1.msra.mxu0 0.0
        %2118 = vmatprep.subr.mxu0 0.0
        %2119 = vmatpush1.msra.mxu0 0.0
        %2120 = vmatprep.subr.mxu0 0.0
        %2121 = vmatpush1.msra.mxu0 0.0
        %2122 = vmatprep.subr.mxu0 0.0
        %2123 = vmatpush1.msra.mxu0 0.0
        %2124 = vmatprep.subr.mxu0 0.0
        %2125 = vmatpush1.msra.mxu0 0.0
        %2126 = vmatprep.mubr.f32.mxu0 0.0
        %2127 = vmatmul.mubr.f32.gmra.mrb[0].mxu0 %v2057
        %v2128 = vpop.f32.mrb[0].mxu0
        %v2129 = vadd.f32 0.0, %v2128
        %v2130 = vpop.f32.mrb[0].mxu0
        %2131 = vmatprep.mubr.f32.mxu0 0.0
        %2132 = vmatmul.mubr.f32.gmra.mrb[0].mxu0 %v2060
        %v2133 = vpop.f32.mrb[0].mxu0
        %v2134 = vadd.f32 0.0, %v2133
        %v2135 = vpop.f32.mrb[0].mxu0
        %2136 = vdwg.mxu0
        %v2138 = vsel %vm575, %v1884, 0
        %v2141 = vsel %vm575, %v1885, 0
        %2143 = vmatprep.subr.mxu0 0.0
        %2144 = vmatpush1.msra.mxu0 %v1892
        %2145 = vmatprep.subr.mxu0 0.0
        %2146 = vmatpush1.msra.mxu0 %v1893
        %2147 = vmatprep.subr.mxu0 0.0
        %2148 = vmatpush1.msra.mxu0 0.0
        %2149 = vmatprep.subr.mxu0 0.0
        %2150 = vmatpush1.msra.mxu0 0.0
        %2151 = vmatprep.subr.mxu0 0.0
        %2152 = vmatpush1.msra.mxu0 0.0
        %2153 = vmatprep.subr.mxu0 0.0
        %2154 = vmatpush1.msra.mxu0 0.0
        %2155 = vmatprep.subr.mxu0 0.0
        %2156 = vmatpush1.msra.mxu0 0.0
        %2157 = vmatprep.subr.mxu0 0.0
        %2158 = vmatpush1.msra.mxu0 0.0
        %2159 = vmatprep.subr.mxu0 0.0
        %2160 = vmatpush1.msra.mxu0 0.0
        %2161 = vmatprep.subr.mxu0 0.0
        %2162 = vmatpush1.msra.mxu0 0.0
        %2163 = vmatprep.subr.mxu0 0.0
        %2164 = vmatpush1.msra.mxu0 0.0
        %2165 = vmatprep.subr.mxu0 0.0
        %2166 = vmatpush1.msra.mxu0 0.0
        %2167 = vmatprep.subr.mxu0 0.0
        %2168 = vmatpush1.msra.mxu0 0.0
        %2169 = vmatprep.subr.mxu0 0.0
        %2170 = vmatpush1.msra.mxu0 0.0
        %2171 = vmatprep.subr.mxu0 0.0
        %2172 = vmatpush1.msra.mxu0 0.0
        %2173 = vmatprep.subr.mxu0 0.0
        %2174 = vmatpush1.msra.mxu0 0.0
        %2175 = vmatprep.subr.mxu0 0.0
        %2176 = vmatpush1.msra.mxu0 0.0
        %2177 = vmatprep.subr.mxu0 0.0
        %2178 = vmatpush1.msra.mxu0 0.0
        %2179 = vmatprep.subr.mxu0 0.0
        %2180 = vmatpush1.msra.mxu0 0.0
        %2181 = vmatprep.subr.mxu0 0.0
        %2182 = vmatpush1.msra.mxu0 0.0
        %2183 = vmatprep.subr.mxu0 0.0
        %2184 = vmatpush1.msra.mxu0 0.0
        %2185 = vmatprep.subr.mxu0 0.0
        %2186 = vmatpush1.msra.mxu0 0.0
        %2187 = vmatprep.subr.mxu0 0.0
        %2188 = vmatpush1.msra.mxu0 0.0
        %2189 = vmatprep.subr.mxu0 0.0
        %2190 = vmatpush1.msra.mxu0 0.0
        %2191 = vmatprep.subr.mxu0 0.0
        %2192 = vmatpush1.msra.mxu0 0.0
        %2193 = vmatprep.subr.mxu0 0.0
        %2194 = vmatpush1.msra.mxu0 0.0
        %2195 = vmatprep.subr.mxu0 0.0
        %2196 = vmatpush1.msra.mxu0 0.0
        %2197 = vmatprep.subr.mxu0 0.0
        %2198 = vmatpush1.msra.mxu0 0.0
        %2199 = vmatprep.subr.mxu0 0.0
        %2200 = vmatpush1.msra.mxu0 0.0
        %2201 = vmatprep.subr.mxu0 0.0
        %2202 = vmatpush1.msra.mxu0 0.0
        %2203 = vmatprep.subr.mxu0 0.0
        %2204 = vmatpush1.msra.mxu0 0.0
        %2205 = vmatprep.subr.mxu0 0.0
        %2206 = vmatpush1.msra.mxu0 0.0
        %2207 = vmatprep.mubr.f32.mxu0 0.0
        %2208 = vmatmul.mubr.f32.gmra.mrb[0].mxu0 %v2138
        %v2209 = vpop.f32.mrb[0].mxu0
        %v2210 = vadd.f32 0.0, %v2209
        %v2211 = vpop.f32.mrb[0].mxu0
        %2212 = vmatprep.mubr.f32.mxu0 0.0
        %2213 = vmatmul.mubr.f32.gmra.mrb[0].mxu0 %v2141
        %v2214 = vpop.f32.mrb[0].mxu0
        %v2215 = vadd.f32 0.0, %v2214
        %v2216 = vpop.f32.mrb[0].mxu0
        %2217 = vdwg.mxu0
        %v2218 = vadd.f32 %v1967, %v2048
        %v2219 = vadd.f32 %v1972, %v2053
        %v2220 = vadd.f32 %v2218, %v2129
        %v2221 = vadd.f32 %v2219, %v2134
        %v2222 = vadd.f32 %v2220, %v2210
        %v2223 = vadd.f32 %v2221, %v2215
        %v2224 = vld [vmem:[%s3] sm:$0x1]
        %v2226 = vlaneseq
        %v2227 = vshrl.u32 %v2226, 7
        %v2228 = vsub.s32 0, %v2227
        %v2229 = vrot.slane %v2224, %v2228
        %v2231 = vadd.f32 %v2222, %v2229
        %v2232 = vadd.f32 %v2223, %v2229
        %2233 = vst.msk [vmem:[%s244] sm:$0xff] %vm265, %v2231
        %2234 = vst.msk [vmem:[%s244 + $0x8] sm:$0xff] %vm265, %v2232
        %s2235 = sand.u32 %s119, 1
        %s2236 = scalar_lea.sflag [#allocation4], %s2235
        %s2237 = sand.u32 %s119, 1
        %s2238 = smul.addr %s2237, 16
        %s2239 = scalar_lea.vmem [#allocation8], %s2238
        // Predicated region
        $region49: #{tpu_custom_call.1} parent=35 // pred_check
          %p2240 = pneg %p129
        $region50: #{tpu_custom_call.1} parent=35 // pred_check_branch
          %2242 = sbr.rel (%p2240) target = $region52
        $region51: #{tpu_custom_call.1} parent=35 // pred_region
          %s2243 = smul.u32 2, %s22
          %s2245 = ssub.s32 256, 256
          %2246 = vsyncadd %s2236, %s2245
          %s2247 = smul.addr %s2243, 128
          %s2248 = scalar_lea.hbm %s4, %s2247
          %s2249 = sshll.u32 %s2239, 4
          %s2250 = int_to_ptr.vmem [resolvable:$true] %s2249
          %2255 = dma.vmem_to_hbm [thread:$0]  %s2250, 256, %s2248, %s2236, 128, 128, 8
        $region52: #{tpu_custom_call.1} parent=35 // pred_fallthru
          _
      $region36: #{tpu_custom_call.1} parent=5 // pred_fallthru
        _
      %p2256 = scmp.le.s32.totalorder 2, %s17
      // Predicated region
      $region53: #{tpu_custom_call.1} parent=5 // pred_check
        %p2257 = pneg %p2256
      $region54: #{tpu_custom_call.1} parent=5 // pred_check_branch
        %2259 = sbr.rel (%p2257) target = $region56
      $region55: #{tpu_custom_call.1} parent=5 // pred_region
        %s2260 = ssub.s32 %s17, 2
        // Predicated region
        $region57: #{tpu_custom_call.1} parent=55 // pred_check
          %p2261 = pneg %p135
        $region58: #{tpu_custom_call.1} parent=55 // pred_check_branch
          %2263 = sbr.rel (%p2261) target = $region60
        $region59: #{tpu_custom_call.1} parent=55 // pred_region
          %s2264 = sand.u32 %s120, 1
          %s2265 = scalar_lea.sflag [#allocation4], %s2264
          %s2266 = sand.u32 %s120, 1
          %s2267 = smul.addr %s2266, 16
          %s2268 = scalar_lea.vmem [#allocation8], %s2267
          %2269 = dma.done %s2265, 256
        $region60: #{tpu_custom_call.1} parent=55 // pred_fallthru
          _
      $region56: #{tpu_custom_call.1} parent=5 // pred_fallthru
        _
    $region6: #{tpu_custom_call.1} parent=1 // loop_footer
      %s21 = sadd.s32 1, %s17
    $region7: #{tpu_custom_call.1} parent=1 // loop_footer_branch
      %16 = sbr.rel target = $region3
    $region8: #{tpu_custom_call.1} parent=1 // loop_exit
      _
    %2270 = vsyncpa [#allocation3], 1
    %s2271 = scalar_lea.sflag [#allocation3], 1
    %2272 = vsyncpa %s2271, 1
    %2273 = vsyncpa [#allocation6], 1
    %2274 = vsyncpa [#allocation4], 1
    %s2275 = scalar_lea.sflag [#allocation4], 1
    %2276 = vsyncpa %s2275, 1

// kernel: tpu_custom_call.1
$region0: #{tpu_custom_call.1}
  #allocation0 [shape = 'u32[]', space=smem, size = 0x4, offset = 0x4, fixed_abs, tag = 'smem constant byte address 0x4 - core index']
  #allocation1 [shape = 'u32[144,128]{1,0:T(1,128)}', space=vmem, size = 0x12000, scoped, tag = 'internal scratch']
  %s0 = inlined_call_operand.hbm [shape: f32[4,8,32], index: 0, kind: input, shape index: {}]
  %s1 = inlined_call_operand.hbm [shape: f32[4,32,48], index: 1, kind: input, shape index: {}]
  %s2 = inlined_call_operand.hbm [shape: f32[4,16,32], index: 2, kind: input, shape index: {}]
  %s3 = inlined_call_operand.vmem [shape: f32[1,32], index: 3, kind: input, shape index: {}]
  %s4 = inlined_call_operand.hbm [shape: f32[4,8,32], index: 4, kind: output, shape index: {}]
  %s5 = sld [smem:[#allocation0]]
  $region61: #{tpu_custom_call.1} parent=0
    _
  %s7 = ssub.s32 1, %s5
  %s8 = scalar_select 0, %s7, %s5
  $region1: #{tpu_custom_call.1} parent=0
    #allocation2 [shape = 'u8[16384]{0}', space=vmem, size = 0x4000, scoped, tag = 'input window, operand 0']
    #allocation3 [shape = 's32[2]{0}', space=sflag, size = 0x8, scoped, tag = 'scoped memory for tpu_custom_call.1']
    #allocation4 [shape = 's32[2]{0}', space=sflag, size = 0x8, scoped, tag = 'scoped memory for tpu_custom_call.1']
    #allocation5 [shape = 'u8[65536]{0}', space=vmem, size = 0x10000, scoped, tag = 'input window, operand 1, single buffered']
    #allocation6 [shape = 's32[1]{0}', space=sflag, size = 0x4, scoped, tag = 'scoped memory for tpu_custom_call.1']
    #allocation7 [shape = 'u8[32768]{0}', space=vmem, size = 0x8000, scoped, tag = 'input window, operand 2, single buffered']
    #allocation8 [shape = 'u8[16384]{0}', space=vmem, size = 0x4000, scoped, tag = 'output window, operand 0']
    %9 = vsyncpa [#allocation3], 0
    %s10 = scalar_lea.sflag [#allocation3], 1
    %11 = vsyncpa %s10, 0
    %12 = vsyncpa [#allocation6], 0
    %13 = vsyncpa [#allocation4], 0
    %s14 = scalar_lea.sflag [#allocation4], 1
    %15 = vsyncpa %s14, 0
    loop: start=0, step=1, limit=4
    $region2: #{tpu_custom_call.1} parent=1 // loop_pre_header
      _
    $region3: #{tpu_custom_call.1} parent=1 // loop_header
      %s17 = sphi 0, %s21
      %p18 = scmp.ge.s32.totalorder %s17, 4
      %s27 = sphi 0, %s29
      %s30 = sphi 0, %s27
      %s31 = sphi 0, %s30
      %s47 = sphi 0, %s31
      %s51 = sphi 0, %s51
      %s53 = sphi 0, %s51
      %s54 = sphi 0, %s53
      %s68 = sphi 0, %s54
      %s72 = sphi 0, %s72
      %s74 = sphi 0, %s72
      %s75 = sphi 0, %s74
      %s89 = sphi 0, %s75
      %s93 = sphi 0, %s93
      %s95 = sphi 0, %s93
      %s96 = sphi 0, %s95
      %s110 = sphi 0, %s96
      %s116 = sphi 0, %s118
      %s119 = sphi 0, %s116
      %s120 = sphi 0, %s119
      %s136 = sphi 0, %s120
    $region4: #{tpu_custom_call.1} parent=1 // loop_header_branch
      %20 = sbr.rel (%p18) target = $region8
    $region5: #{tpu_custom_call.1} parent=1 // loop_body
      %s22 = ssub.s32 %s17, 1
      %s23 = ssub.s32 %s17, 2
      %s24 = sadd.s32 %s17, 1
      %s25 = ssub.s32 %s17, %s24
      %p26 = scmp.eq.s32.totalorder %s25, 0
      %s28 = sadd.s32 %s27, 1
      %s29 = scalar_select %p26, %s27, %s28
      %p32 = pneg %p26
      %p33 = scmp.eq.s32.totalorder %s17, 1
      %p34 = por %p32, %p33
      %p35 = scmp.ne.s32.totalorder %s27, %s30
      %p36 = scmp.eq.s32.totalorder %s17, 0
      %p37 = por %p35, %p36
      %p38 = scmp.ne.s32.totalorder %s27, %s30
      %p39 = scmp.eq.s32.totalorder %s22, 1
      %p40 = por %p38, %p39
      %p41 = scmp.ne.s32.totalorder %s30, %s31
      %p42 = scmp.eq.s32.totalorder %s22, 0
      %p43 = por %p41, %p42
      %p44 = scmp.ne.s32.totalorder %s30, %s31
      %p45 = scmp.eq.s32.totalorder %s23, 1
      %p46 = por %p44, %p45
      %p48 = scmp.ne.s32.totalorder %s31, %s47
      %p49 = scmp.eq.s32.totalorder %s23, 0
      %p50 = por %p48, %p49
      %s52 = sadd.s32 %s51, 1
      %p55 = scmp.eq.s32.totalorder %s17, 1
      %p56 = scmp.ne.s32.totalorder %s51, %s53
      %p57 = scmp.eq.s32.totalorder %s17, 0
      %p58 = por %p56, %p57
      %p59 = scmp.ne.s32.totalorder %s51, %s53
      %p60 = scmp.eq.s32.totalorder %s22, 1
      %p61 = por %p59, %p60
      %p62 = scmp.ne.s32.totalorder %s53, %s54
      %p63 = scmp.eq.s32.totalorder %s22, 0
      %p64 = por %p62, %p63
      %p65 = scmp.ne.s32.totalorder %s53, %s54
      %p66 = scmp.eq.s32.totalorder %s23, 1
      %p67 = por %p65, %p66
      %p69 = scmp.ne.s32.totalorder %s54, %s68
      %p70 = scmp.eq.s32.totalorder %s23, 0
      %p71 = por %p69, %p70
      %s73 = sadd.s32 %s72, 1
      %p76 = scmp.eq.s32.totalorder %s17, 1
      %p77 = scmp.ne.s32.totalorder %s72, %s74
      %p78 = scmp.eq.s32.totalorder %s17, 0
      %p79 = por %p77, %p78
      %p80 = scmp.ne.s32.totalorder %s72, %s74
      %p81 = scmp.eq.s32.totalorder %s22, 1
      %p82 = por %p80, %p81
      %p83 = scmp.ne.s32.totalorder %s74, %s75
      %p84 = scmp.eq.s32.totalorder %s22, 0
      %p85 = por %p83, %p84
      %p86 = scmp.ne.s32.totalorder %s74, %s75
      %p87 = scmp.eq.s32.totalorder %s23, 1
      %p88 = por %p86, %p87
      %p90 = scmp.ne.s32.totalorder %s75, %s89
      %p91 = scmp.eq.s32.totalorder %s23, 0
      %p92 = por %p90, %p91
      %s94 = sadd.s32 %s93, 1
      %p97 = scmp.eq.s32.totalorder %s17, 1
      %p98 = scmp.ne.s32.totalorder %s93, %s95
      %p99 = scmp.eq.s32.totalorder %s17, 0
      %p100 = por %p98, %p99
      %p101 = scmp.ne.s32.totalorder %s93, %s95
      %p102 = scmp.eq.s32.totalorder %s22, 1
      %p103 = por %p101, %p102
      %p104 = scmp.ne.s32.totalorder %s95, %s96
      %p105 = scmp.eq.s32.totalorder %s22, 0
      %p106 = por %p104, %p105
      %p107 = scmp.ne.s32.totalorder %s95, %s96
      %p108 = scmp.eq.s32.totalorder %s23, 1
      %p109 = por %p107, %p108
      %p111 = scmp.ne.s32.totalorder %s96, %s110
      %p112 = scmp.eq.s32.totalorder %s23, 0
      %p113 = por %p111, %p112
      %s114 = ssub.s32 %s17, %s24
      %p115 = scmp.eq.s32.totalorder %s114, 0
      %s117 = sadd.s32 %s116, 1
      %s118 = scalar_select %p115, %s116, %s117
      %p121 = pneg %p115
      %p122 = scmp.eq.s32.totalorder %s17, 1
      %p123 = por %p121, %p122
      %p124 = scmp.ne.s32.totalorder %s116, %s119
      %p125 = scmp.eq.s32.totalorder %s17, 0
      %p126 = por %p124, %p125
      %p127 = scmp.ne.s32.totalorder %s116, %s119
      %p128 = scmp.eq.s32.totalorder %s22, 1
      %p129 = por %p127, %p128
      %p130 = scmp.ne.s32.totalorder %s119, %s120
      %p131 = scmp.eq.s32.totalorder %s22, 0
      %p132 = por %p130, %p131
      %p133 = scmp.ne.s32.totalorder %s119, %s120
      %p134 = scmp.eq.s32.totalorder %s23, 1
      %p135 = por %p133, %p134
      %p137 = scmp.ne.s32.totalorder %s120, %s136
      %p138 = scmp.eq.s32.totalorder %s23, 0
      %p139 = por %p137, %p138
      %p140 = scmp.le.s32.totalorder 1, %s17
      %p141 = scmp.lt.s32.totalorder %s17, 3
      %p142 = pnand %p140, %p141
      %p143 = pneg %p142
      // Predicated region
      $region9: #{tpu_custom_call.1} parent=5 // pred_check
        _
      $region10: #{tpu_custom_call.1} parent=5 // pred_check_branch
        %145 = sbr.rel (%p142) target = $region12
      $region11: #{tpu_custom_call.1} parent=5 // pred_region
        %s146 = ssub.s32 %s17, 1
        // Predicated region
        $region13: #{tpu_custom_call.1} parent=11 // pred_check
          %p147 = pneg %p64
        $region14: #{tpu_custom_call.1} parent=11 // pred_check_branch
          %149 = sbr.rel (%p147) target = $region16
        $region15: #{tpu_custom_call.1} parent=11 // pred_region
          %s151 = ssub.s32 2048, 2048
          %152 = vsyncadd [#allocation6], %s151
          %s153 = sshll.u32 [#allocation5], 4
          %s154 = int_to_ptr.vmem [resolvable:$true] %s153
          %159 = dma.hbm_to_vmem [thread:$0]  %s1, 2048, %s154, [#allocation6], 128, 128, 8
        $region16: #{tpu_custom_call.1} parent=11 // pred_fallthru
          _
        // Predicated region
        $region17: #{tpu_custom_call.1} parent=11 // pred_check
          %p160 = pneg %p85
        $region18: #{tpu_custom_call.1} parent=11 // pred_check_branch
          %162 = sbr.rel (%p160) target = $region20
        $region19: #{tpu_custom_call.1} parent=11 // pred_region
          %s164 = ssub.s32 1024, 1024
          %165 = vsyncadd [#allocation6], %s164
          %s166 = sshll.u32 [#allocation7], 4
          %s167 = int_to_ptr.vmem [resolvable:$true] %s166
          %172 = dma.hbm_to_vmem [thread:$0]  %s2, 1024, %s167, [#allocation6], 128, 128, 8
        $region20: #{tpu_custom_call.1} parent=11 // pred_fallthru
          _
        // Predicated region
        $region21: #{tpu_custom_call.1} parent=11 // pred_check
          %p173 = pneg %p106
        $region22: #{tpu_custom_call.1} parent=11 // pred_check_branch
          %175 = sbr.rel (%p173) target = $region24
        $region23: #{tpu_custom_call.1} parent=11 // pred_region
          _
        $region24: #{tpu_custom_call.1} parent=11 // pred_fallthru
          _
      $region12: #{tpu_custom_call.1} parent=5 // pred_fallthru
        _
      %p176 = scmp.lt.s32.totalorder %s17, 2
      // Predicated region
      $region25: #{tpu_custom_call.1} parent=5 // pred_check
        %p177 = pneg %p176
      $region26: #{tpu_custom_call.1} parent=5 // pred_check_branch
        %179 = sbr.rel (%p177) target = $region28
      $region27: #{tpu_custom_call.1} parent=5 // pred_region
        // Predicated region
        $region29: #{tpu_custom_call.1} parent=27 // pred_check
          %p180 = pneg %p37
        $region30: #{tpu_custom_call.1} parent=27 // pred_check_branch
          %182 = sbr.rel (%p180) target = $region32
        $region31: #{tpu_custom_call.1} parent=27 // pred_region
          %s183 = sand.u32 %s27, 1
          %s184 = scalar_lea.sflag [#allocation3], %s183
          %s185 = sand.u32 %s27, 1
          %s186 = smul.addr %s185, 16
          %s187 = scalar_lea.vmem [#allocation2], %s186
          %s188 = smul.u32 2, %s17
          %s190 = ssub.s32 256, 256
          %191 = vsyncadd %s184, %s190
          %s192 = smul.addr %s188, 128
          %s193 = scalar_lea.hbm %s0, %s192
          %s194 = sshll.u32 %s187, 4
          %s195 = int_to_ptr.vmem [resolvable:$true] %s194
          %200 = dma.hbm_to_vmem [thread:$0]  %s193, 256, %s195, %s184, 128, 128, 8
        $region32: #{tpu_custom_call.1} parent=27 // pred_fallthru
          _
      $region28: #{tpu_custom_call.1} parent=5 // pred_fallthru
        _
      %p201 = scmp.le.s32.totalorder 1, %s17
      %p202 = scmp.lt.s32.totalorder %s17, 3
      %p203 = pnand %p201, %p202
      %p204 = pneg %p203
      // Predicated region
      $region33: #{tpu_custom_call.1} parent=5 // pred_check
        _
      $region34: #{tpu_custom_call.1} parent=5 // pred_check_branch
        %206 = sbr.rel (%p203) target = $region36
      $region35: #{tpu_custom_call.1} parent=5 // pred_region
        %s207 = ssub.s32 %s17, 1
        %s208 = sand.u32 %s30, 1
        %s209 = scalar_lea.sflag [#allocation3], %s208
        %s210 = sand.u32 %s30, 1
        %s211 = smul.addr %s210, 16
        %s212 = scalar_lea.vmem [#allocation2], %s211
        // Predicated region
        $region37: #{tpu_custom_call.1} parent=35 // pred_check
          %p213 = pneg %p43
        $region38: #{tpu_custom_call.1} parent=35 // pred_check_branch
          %215 = sbr.rel (%p213) target = $region40
        $region39: #{tpu_custom_call.1} parent=35 // pred_region
          %216 = dma.done %s209, 256
        $region40: #{tpu_custom_call.1} parent=35 // pred_fallthru
          _
        // Predicated region
        $region41: #{tpu_custom_call.1} parent=35 // pred_check
          %p217 = pneg %p64
        $region42: #{tpu_custom_call.1} parent=35 // pred_check_branch
          %219 = sbr.rel (%p217) target = $region44
        $region43: #{tpu_custom_call.1} parent=35 // pred_region
          %220 = dma.done [#allocation6], 2048
        $region44: #{tpu_custom_call.1} parent=35 // pred_fallthru
          _
        // Predicated region
        $region45: #{tpu_custom_call.1} parent=35 // pred_check
          %p221 = pneg %p85
        $region46: #{tpu_custom_call.1} parent=35 // pred_check_branch
          %223 = sbr.rel (%p221) target = $region48
        $region47: #{tpu_custom_call.1} parent=35 // pred_region
          %224 = dma.done [#allocation6], 1024
        $region48: #{tpu_custom_call.1} parent=35 // pred_fallthru
          _
        %s225 = sand.u32 %s30, 1
        %s226 = scalar_lea.sflag [#allocation3], %s225
        %s227 = sand.u32 %s30, 1
        %s228 = smul.addr %s227, 16
        %s229 = scalar_lea.vmem [#allocation2], %s228
        %p230 = pneg %p43
        %p231 = pneg %p40
        %p232 = pneg %p64
        %p233 = pneg %p61
        %p234 = pneg %p85
        %p235 = pneg %p82
        %p236 = pneg %p106
        %p237 = pneg %p103
        %p238 = pneg %p132
        %p239 = pneg %p129
        %s240 = sand.u32 %s119, 1
        %s241 = scalar_lea.sflag [#allocation4], %s240
        %s242 = sand.u32 %s119, 1
        %s243 = smul.addr %s242, 16
        %s244 = scalar_lea.vmem [#allocation8], %s243
        %s245 = smul.u32 2, %s22
        %s246 = smul.u32 2, %s22
        %v247 = vld [vmem:[%s212] sm:$0xff]
        %v248 = vld [vmem:[%s212 + $0x8] sm:$0xff]
        %v249 = vld [vmem:[#allocation5] sm:$0xff]
        %v250 = vld [vmem:[#allocation5 + $0x8] sm:$0xff]
        %v251 = vld [vmem:[#allocation5 + $0x10] sm:$0xff]
        %v252 = vld [vmem:[#allocation5 + $0x18] sm:$0xff]
        %v253 = vld [vmem:[#allocation5 + $0x20] sm:$0xff]
        %v254 = vld [vmem:[#allocation5 + $0x28] sm:$0xff]
        %v255 = vld [vmem:[#allocation5 + $0x30] sm:$0xff]
        %v256 = vld [vmem:[#allocation5 + $0x38] sm:$0xff]
        %v257 = vld [vmem:[#allocation5 + $0x40] sm:$0xff]
        %v258 = vld [vmem:[#allocation5 + $0x48] sm:$0xff]
        %v259 = vld [vmem:[#allocation5 + $0x50] sm:$0xff]
        %v260 = vld [vmem:[#allocation5 + $0x58] sm:$0xff]
        %v261 = vld [vmem:[#allocation5 + $0x60] sm:$0xff]
        %v262 = vld [vmem:[#allocation5 + $0x68] sm:$0xff]
        %v263 = vld [vmem:[#allocation5 + $0x70] sm:$0xff]
        %v264 = vld [vmem:[#allocation5 + $0x78] sm:$0xff]
        %vm265 = vcmask 261120
        %v267 = vsel %vm265, %v247, 0
        %v270 = vsel %vm265, %v248, 0
        %272 = vmatprep.subr.mxu0 0.0
        %273 = vmatpush1.msra.mxu0 %v249
        %274 = vmatprep.subr.mxu0 0.0
        %275 = vmatpush1.msra.mxu0 %v250
        %276 = vmatprep.subr.mxu0 0.0
        %277 = vmatpush1.msra.mxu0 %v251
        %278 = vmatprep.subr.mxu0 0.0
        %279 = vmatpush1.msra.mxu0 %v252
        %280 = vmatprep.subr.mxu0 0.0
        %281 = vmatpush1.msra.mxu0 0.0
        %282 = vmatprep.subr.mxu0 0.0
        %283 = vmatpush1.msra.mxu0 0.0
        %284 = vmatprep.subr.mxu0 0.0
        %285 = vmatpush1.msra.mxu0 0.0
        %286 = vmatprep.subr.mxu0 0.0
        %287 = vmatpush1.msra.mxu0 0.0
        %288 = vmatprep.subr.mxu0 0.0
        %289 = vmatpush1.msra.mxu0 0.0
        %290 = vmatprep.subr.mxu0 0.0
        %291 = vmatpush1.msra.mxu0 0.0
        %292 = vmatprep.subr.mxu0 0.0
        %293 = vmatpush1.msra.mxu0 0.0
        %294 = vmatprep.subr.mxu0 0.0
        %295 = vmatpush1.msra.mxu0 0.0
        %296 = vmatprep.subr.mxu0 0.0
        %297 = vmatpush1.msra.mxu0 0.0
        %298 = vmatprep.subr.mxu0 0.0
        %299 = vmatpush1.msra.mxu0 0.0
        %300 = vmatprep.subr.mxu0 0.0
        %301 = vmatpush1.msra.mxu0 0.0
        %302 = vmatprep.subr.mxu0 0.0
        %303 = vmatpush1.msra.mxu0 0.0
        %304 = vmatprep.subr.mxu0 0.0
        %305 = vmatpush1.msra.mxu0 0.0
        %306 = vmatprep.subr.mxu0 0.0
        %307 = vmatpush1.msra.mxu0 0.0
        %308 = vmatprep.subr.mxu0 0.0
        %309 = vmatpush1.msra.mxu0 0.0
        %310 = vmatprep.subr.mxu0 0.0
        %311 = vmatpush1.msra.mxu0 0.0
        %312 = vmatprep.subr.mxu0 0.0
        %313 = vmatpush1.msra.mxu0 0.0
        %314 = vmatprep.subr.mxu0 0.0
        %315 = vmatpush1.msra.mxu0 0.0
        %316 = vmatprep.subr.mxu0 0.0
        %317 = vmatpush1.msra.mxu0 0.0
        %318 = vmatprep.subr.mxu0 0.0
        %319 = vmatpush1.msra.mxu0 0.0
        %320 = vmatprep.subr.mxu0 0.0
        %321 = vmatpush1.msra.mxu0 0.0
        %322 = vmatprep.subr.mxu0 0.0
        %323 = vmatpush1.msra.mxu0 0.0
        %324 = vmatprep.subr.mxu0 0.0
        %325 = vmatpush1.msra.mxu0 0.0
        %326 = vmatprep.subr.mxu0 0.0
        %327 = vmatpush1.msra.mxu0 0.0
        %328 = vmatprep.subr.mxu0 0.0
        %329 = vmatpush1.msra.mxu0 0.0
        %330 = vmatprep.subr.mxu0 0.0
        %331 = vmatpush1.msra.mxu0 0.0
        %332 = vmatprep.subr.mxu0 0.0
        %333 = vmatpush1.msra.mxu0 0.0
        %334 = vmatprep.subr.mxu0 0.0
        %335 = vmatpush1.msra.mxu0 0.0
        %336 = vmatprep.mubr.f32.mxu0 0.0
        %337 = vmatmul.mubr.f32.gmra.mrb[0].mxu0 %v267
        %v338 = vpop.f32.mrb[0].mxu0
        %v339 = vadd.f32 0.0, %v338
        %v340 = vpop.f32.mrb[0].mxu0
        %341 = vmatprep.mubr.f32.mxu0 0.0
        %342 = vmatmul.mubr.f32.gmra.mrb[0].mxu0 %v270
        %v343 = vpop.f32.mrb[0].mxu0
        %v344 = vadd.f32 0.0, %v343
        %v345 = vpop.f32.mrb[0].mxu0
        %346 = vdwg.mxu0
        %347 = vmatprep.subr.mxu0 0.0
        %348 = vmatpush1.msra.mxu0 %v253
        %349 = vmatprep.subr.mxu0 0.0
        %350 = vmatpush1.msra.mxu0 %v254
        %351 = vmatprep.subr.mxu0 0.0
        %352 = vmatpush1.msra.mxu0 %v255
        %353 = vmatprep.subr.mxu0 0.0
        %354 = vmatpush1.msra.mxu0 %v256
        %355 = vmatprep.subr.mxu0 0.0
        %356 = vmatpush1.msra.mxu0 0.0
        %357 = vmatprep.subr.mxu0 0.0
        %358 = vmatpush1.msra.mxu0 0.0
        %359 = vmatprep.subr.mxu0 0.0
        %360 = vmatpush1.msra.mxu0 0.0
        %361 = vmatprep.subr.mxu0 0.0
        %362 = vmatpush1.msra.mxu0 0.0
        %363 = vmatprep.subr.mxu0 0.0
        %364 = vmatpush1.msra.mxu0 0.0
        %365 = vmatprep.subr.mxu0 0.0
        %366 = vmatpush1.msra.mxu0 0.0
        %367 = vmatprep.subr.mxu0 0.0
        %368 = vmatpush1.msra.mxu0 0.0
        %369 = vmatprep.subr.mxu0 0.0
        %370 = vmatpush1.msra.mxu0 0.0
        %371 = vmatprep.subr.mxu0 0.0
        %372 = vmatpush1.msra.mxu0 0.0
        %373 = vmatprep.subr.mxu0 0.0
        %374 = vmatpush1.msra.mxu0 0.0
        %375 = vmatprep.subr.mxu0 0.0
        %376 = vmatpush1.msra.mxu0 0.0
        %377 = vmatprep.subr.mxu0 0.0
        %378 = vmatpush1.msra.mxu0 0.0
        %379 = vmatprep.subr.mxu0 0.0
        %380 = vmatpush1.msra.mxu0 0.0
        %381 = vmatprep.subr.mxu0 0.0
        %382 = vmatpush1.msra.mxu0 0.0
        %383 = vmatprep.subr.mxu0 0.0
        %384 = vmatpush1.msra.mxu0 0.0
        %385 = vmatprep.subr.mxu0 0.0
        %386 = vmatpush1.msra.mxu0 0.0
        %387 = vmatprep.subr.mxu0 0.0
        %388 = vmatpush1.msra.mxu0 0.0
        %389 = vmatprep.subr.mxu0 0.0
        %390 = vmatpush1.msra.mxu0 0.0
        %391 = vmatprep.subr.mxu0 0.0
        %392 = vmatpush1.msra.mxu0 0.0
        %393 = vmatprep.subr.mxu0 0.0
        %394 = vmatpush1.msra.mxu0 0.0
        %395 = vmatprep.subr.mxu0 0.0
        %396 = vmatpush1.msra.mxu0 0.0
        %397 = vmatprep.subr.mxu0 0.0
        %398 = vmatpush1.msra.mxu0 0.0
        %399 = vmatprep.subr.mxu0 0.0
        %400 = vmatpush1.msra.mxu0 0.0
        %401 = vmatprep.subr.mxu0 0.0
        %402 = vmatpush1.msra.mxu0 0.0
        %403 = vmatprep.subr.mxu0 0.0
        %404 = vmatpush1.msra.mxu0 0.0
        %405 = vmatprep.subr.mxu0 0.0
        %406 = vmatpush1.msra.mxu0 0.0
        %407 = vmatprep.subr.mxu0 0.0
        %408 = vmatpush1.msra.mxu0 0.0
        %409 = vmatprep.subr.mxu0 0.0
        %410 = vmatpush1.msra.mxu0 0.0
        %411 = vmatprep.mubr.f32.mxu0 0.0
        %412 = vmatmul.mubr.f32.gmra.mrb[0].mxu0 %v267
        %v413 = vpop.f32.mrb[0].mxu0
        %v414 = vadd.f32 0.0, %v413
        %v415 = vpop.f32.mrb[0].mxu0
        %416 = vmatprep.mubr.f32.mxu0 0.0
        %417 = vmatmul.mubr.f32.gmra.mrb[0].mxu0 %v270
        %v418 = vpop.f32.mrb[0].mxu0
        %v419 = vadd.f32 0.0, %v418
        %v420 = vpop.f32.mrb[0].mxu0
        %421 = vdwg.mxu0
        %422 = vmatprep.subr.mxu0 0.0
        %423 = vmatpush1.msra.mxu0 %v257
        %424 = vmatprep.subr.mxu0 0.0
        %425 = vmatpush1.msra.mxu0 %v258
        %426 = vmatprep.subr.mxu0 0.0
        %427 = vmatpush1.msra.mxu0 %v259
        %428 = vmatprep.subr.mxu0 0.0
        %429 = vmatpush1.msra.mxu0 %v260
        %430 = vmatprep.subr.mxu0 0.0
        %431 = vmatpush1.msra.mxu0 0.0
        %432 = vmatprep.subr.mxu0 0.0
        %433 = vmatpush1.msra.mxu0 0.0
        %434 = vmatprep.subr.mxu0 0.0
        %435 = vmatpush1.msra.mxu0 0.0
        %436 = vmatprep.subr.mxu0 0.0
        %437 = vmatpush1.msra.mxu0 0.0
        %438 = vmatprep.subr.mxu0 0.0
        %439 = vmatpush1.msra.mxu0 0.0
        %440 = vmatprep.subr.mxu0 0.0
        %441 = vmatpush1.msra.mxu0 0.0
        %442 = vmatprep.subr.mxu0 0.0
        %443 = vmatpush1.msra.mxu0 0.0
        %444 = vmatprep.subr.mxu0 0.0
        %445 = vmatpush1.msra.mxu0 0.0
        %446 = vmatprep.subr.mxu0 0.0
        %447 = vmatpush1.msra.mxu0 0.0
        %448 = vmatprep.subr.mxu0 0.0
        %449 = vmatpush1.msra.mxu0 0.0
        %450 = vmatprep.subr.mxu0 0.0
        %451 = vmatpush1.msra.mxu0 0.0
        %452 = vmatprep.subr.mxu0 0.0
        %453 = vmatpush1.msra.mxu0 0.0
        %454 = vmatprep.subr.mxu0 0.0
        %455 = vmatpush1.msra.mxu0 0.0
        %456 = vmatprep.subr.mxu0 0.0
        %457 = vmatpush1.msra.mxu0 0.0
        %458 = vmatprep.subr.mxu0 0.0
        %459 = vmatpush1.msra.mxu0 0.0
        %460 = vmatprep.subr.mxu0 0.0
        %461 = vmatpush1.msra.mxu0 0.0
        %462 = vmatprep.subr.mxu0 0.0
        %463 = vmatpush1.msra.mxu0 0.0
        %464 = vmatprep.subr.mxu0 0.0
        %465 = vmatpush1.msra.mxu0 0.0
        %466 = vmatprep.subr.mxu0 0.0
        %467 = vmatpush1.msra.mxu0 0.0
        %468 = vmatprep.subr.mxu0 0.0
        %469 = vmatpush1.msra.mxu0 0.0
        %470 = vmatprep.subr.mxu0 0.0
        %471 = vmatpush1.msra.mxu0 0.0
        %472 = vmatprep.subr.mxu0 0.0
        %473 = vmatpush1.msra.mxu0 0.0
        %474 = vmatprep.subr.mxu0 0.0
        %475 = vmatpush1.msra.mxu0 0.0
        %476 = vmatprep.subr.mxu0 0.0
        %477 = vmatpush1.msra.mxu0 0.0
        %478 = vmatprep.subr.mxu0 0.0
        %479 = vmatpush1.msra.mxu0 0.0
        %480 = vmatprep.subr.mxu0 0.0
        %481 = vmatpush1.msra.mxu0 0.0
        %482 = vmatprep.subr.mxu0 0.0
        %483 = vmatpush1.msra.mxu0 0.0
        %484 = vmatprep.subr.mxu0 0.0
        %485 = vmatpush1.msra.mxu0 0.0
        %486 = vmatprep.mubr.f32.mxu0 0.0
        %487 = vmatmul.mubr.f32.gmra.mrb[0].mxu0 %v267
        %v488 = vpop.f32.mrb[0].mxu0
        %v489 = vadd.f32 0.0, %v488
        %v490 = vpop.f32.mrb[0].mxu0
        %491 = vmatprep.mubr.f32.mxu0 0.0
        %492 = vmatmul.mubr.f32.gmra.mrb[0].mxu0 %v270
        %v493 = vpop.f32.mrb[0].mxu0
        %v494 = vadd.f32 0.0, %v493
        %v495 = vpop.f32.mrb[0].mxu0
        %496 = vdwg.mxu0
        %497 = vmatprep.subr.mxu0 0.0
        %498 = vmatpush1.msra.mxu0 %v261
        %499 = vmatprep.subr.mxu0 0.0
        %500 = vmatpush1.msra.mxu0 %v262
        %501 = vmatprep.subr.mxu0 0.0
        %502 = vmatpush1.msra.mxu0 %v263
        %503 = vmatprep.subr.mxu0 0.0
        %504 = vmatpush1.msra.mxu0 %v264
        %505 = vmatprep.subr.mxu0 0.0
        %506 = vmatpush1.msra.mxu0 0.0
        %507 = vmatprep.subr.mxu0 0.0
        %508 = vmatpush1.msra.mxu0 0.0
        %509 = vmatprep.subr.mxu0 0.0
        %510 = vmatpush1.msra.mxu0 0.0
        %511 = vmatprep.subr.mxu0 0.0
        %512 = vmatpush1.msra.mxu0 0.0
        %513 = vmatprep.subr.mxu0 0.0
        %514 = vmatpush1.msra.mxu0 0.0
        %515 = vmatprep.subr.mxu0 0.0
        %516 = vmatpush1.msra.mxu0 0.0
        %517 = vmatprep.subr.mxu0 0.0
        %518 = vmatpush1.msra.mxu0 0.0
        %519 = vmatprep.subr.mxu0 0.0
        %520 = vmatpush1.msra.mxu0 0.0
        %521 = vmatprep.subr.mxu0 0.0
        %522 = vmatpush1.msra.mxu0 0.0
        %523 = vmatprep.subr.mxu0 0.0
        %524 = vmatpush1.msra.mxu0 0.0
        %525 = vmatprep.subr.mxu0 0.0
        %526 = vmatpush1.msra.mxu0 0.0
        %527 = vmatprep.subr.mxu0 0.0
        %528 = vmatpush1.msra.mxu0 0.0
        %529 = vmatprep.subr.mxu0 0.0
        %530 = vmatpush1.msra.mxu0 0.0
        %531 = vmatprep.subr.mxu0 0.0
        %532 = vmatpush1.msra.mxu0 0.0
        %533 = vmatprep.subr.mxu0 0.0
        %534 = vmatpush1.msra.mxu0 0.0
        %535 = vmatprep.subr.mxu0 0.0
        %536 = vmatpush1.msra.mxu0 0.0
        %537 = vmatprep.subr.mxu0 0.0
        %538 = vmatpush1.msra.mxu0 0.0
        %539 = vmatprep.subr.mxu0 0.0
        %540 = vmatpush1.msra.mxu0 0.0
        %541 = vmatprep.subr.mxu0 0.0
        %542 = vmatpush1.msra.mxu0 0.0
        %543 = vmatprep.subr.mxu0 0.0
        %544 = vmatpush1.msra.mxu0 0.0
        %545 = vmatprep.subr.mxu0 0.0
        %546 = vmatpush1.msra.mxu0 0.0
        %547 = vmatprep.subr.mxu0 0.0
        %548 = vmatpush1.msra.mxu0 0.0
        %549 = vmatprep.subr.mxu0 0.0
        %550 = vmatpush1.msra.mxu0 0.0
        %551 = vmatprep.subr.mxu0 0.0
        %552 = vmatpush1.msra.mxu0 0.0
        %553 = vmatprep.subr.mxu0 0.0
        %554 = vmatpush1.msra.mxu0 0.0
        %555 = vmatprep.subr.mxu0 0.0
        %556 = vmatpush1.msra.mxu0 0.0
        %557 = vmatprep.subr.mxu0 0.0
        %558 = vmatpush1.msra.mxu0 0.0
        %559 = vmatprep.subr.mxu0 0.0
        %560 = vmatpush1.msra.mxu0 0.0
        %561 = vmatprep.mubr.f32.mxu0 0.0
        %562 = vmatmul.mubr.f32.gmra.mrb[0].mxu0 %v267
        %v563 = vpop.f32.mrb[0].mxu0
        %v564 = vadd.f32 0.0, %v563
        %v565 = vpop.f32.mrb[0].mxu0
        %566 = vmatprep.mubr.f32.mxu0 0.0
        %567 = vmatmul.mubr.f32.gmra.mrb[0].mxu0 %v270
        %v568 = vpop.f32.mrb[0].mxu0
        %v569 = vadd.f32 0.0, %v568
        %v570 = vpop.f32.mrb[0].mxu0
        %571 = vdwg.mxu0
        %573 = vrot.lane.b32.xlu0 %v339, 112
        %v574 = vpop.permute.xlu0 %573
        %vm575 = vcmask 130048
        %v576 = vsel %vm575, %v339, 0
        %v578 = vsel %vm575, %v574, 0
        %580 = vmatprep.subr.mxu0 0.0
        %581 = vmatpush1.xpose.msra.mxu0 %v578
        %582 = vmatprep.subr.mxu0 0.0
        %583 = vmatpush1.xpose.msra.mxu0 0.0
        %584 = vmatprep.subr.mxu0 0.0
        %585 = vmatpush1.xpose.msra.mxu0 0.0
        %586 = vmatprep.subr.mxu0 0.0
        %587 = vmatpush1.xpose.msra.mxu0 0.0
        %588 = vmatprep.subr.mxu0 0.0
        %589 = vmatpush1.xpose.msra.mxu0 0.0
        %590 = vmatprep.subr.mxu0 0.0
        %591 = vmatpush1.xpose.msra.mxu0 0.0
        %592 = vmatprep.subr.mxu0 0.0
        %593 = vmatpush1.xpose.msra.mxu0 0.0
        %594 = vmatprep.subr.mxu0 0.0
        %595 = vmatpush1.xpose.msra.mxu0 0.0
        %596 = vmatprep.subr.mxu0 0.0
        %597 = vmatpush1.xpose.msra.mxu0 0.0
        %598 = vmatprep.subr.mxu0 0.0
        %599 = vmatpush1.xpose.msra.mxu0 0.0
        %600 = vmatprep.subr.mxu0 0.0
        %601 = vmatpush1.xpose.msra.mxu0 0.0
        %602 = vmatprep.subr.mxu0 0.0
        %603 = vmatpush1.xpose.msra.mxu0 0.0
        %604 = vmatprep.subr.mxu0 0.0
        %605 = vmatpush1.xpose.msra.mxu0 0.0
        %606 = vmatprep.subr.mxu0 0.0
        %607 = vmatpush1.xpose.msra.mxu0 0.0
        %608 = vmatprep.subr.mxu0 0.0
        %609 = vmatpush1.xpose.msra.mxu0 0.0
        %610 = vmatprep.subr.mxu0 0.0
        %611 = vmatpush1.xpose.msra.mxu0 0.0
        %612 = vmatprep.subr.mxu0 0.0
        %613 = vmatpush1.xpose.msra.mxu0 0.0
        %614 = vmatprep.subr.mxu0 0.0
        %615 = vmatpush1.xpose.msra.mxu0 0.0
        %616 = vmatprep.subr.mxu0 0.0
        %617 = vmatpush1.xpose.msra.mxu0 0.0
        %618 = vmatprep.subr.mxu0 0.0
        %619 = vmatpush1.xpose.msra.mxu0 0.0
        %620 = vmatprep.subr.mxu0 0.0
        %621 = vmatpush1.xpose.msra.mxu0 0.0
        %622 = vmatprep.subr.mxu0 0.0
        %623 = vmatpush1.xpose.msra.mxu0 0.0
        %624 = vmatprep.subr.mxu0 0.0
        %625 = vmatpush1.xpose.msra.mxu0 0.0
        %626 = vmatprep.subr.mxu0 0.0
        %627 = vmatpush1.xpose.msra.mxu0 0.0
        %628 = vmatprep.subr.mxu0 0.0
        %629 = vmatpush1.xpose.msra.mxu0 0.0
        %630 = vmatprep.subr.mxu0 0.0
        %631 = vmatpush1.xpose.msra.mxu0 0.0
        %632 = vmatprep.subr.mxu0 0.0
        %633 = vmatpush1.xpose.msra.mxu0 0.0
        %634 = vmatprep.subr.mxu0 0.0
        %635 = vmatpush1.xpose.msra.mxu0 0.0
        %636 = vmatprep.subr.mxu0 0.0
        %637 = vmatpush1.xpose.msra.mxu0 0.0
        %638 = vmatprep.subr.mxu0 0.0
        %639 = vmatpush1.xpose.msra.mxu0 0.0
        %640 = vmatprep.subr.mxu0 0.0
        %641 = vmatpush1.xpose.msra.mxu0 0.0
        %642 = vmatprep.subr.mxu0 0.0
        %643 = vmatpush1.xpose.msra.mxu0 0.0
        %644 = vmatprep.mubr.f32.mxu0 0.0
        %645 = vmatmul.mubr.f32.gmra.mrb[0].mxu0 %v576
        %v646 = vpop.f32.mrb[0].mxu0
        %v647 = vadd.f32 0.0, %v646
        %v648 = vpop.f32.mrb[0].mxu0
        %649 = vdwg.mxu0
        %651 = vrot.lane.b32.xlu0 %v344, 112
        %v652 = vpop.permute.xlu0 %651
        %v653 = vsel %vm575, %v344, 0
        %v655 = vsel %vm575, %v652, 0
        %657 = vmatprep.subr.mxu0 0.0
        %658 = vmatpush1.xpose.msra.mxu0 %v655
        %659 = vmatprep.subr.mxu0 0.0
        %660 = vmatpush1.xpose.msra.mxu0 0.0
        %661 = vmatprep.subr.mxu0 0.0
        %662 = vmatpush1.xpose.msra.mxu0 0.0
        %663 = vmatprep.subr.mxu0 0.0
        %664 = vmatpush1.xpose.msra.mxu0 0.0
        %665 = vmatprep.subr.mxu0 0.0
        %666 = vmatpush1.xpose.msra.mxu0 0.0
        %667 = vmatprep.subr.mxu0 0.0
        %668 = vmatpush1.xpose.msra.mxu0 0.0
        %669 = vmatprep.subr.mxu0 0.0
        %670 = vmatpush1.xpose.msra.mxu0 0.0
        %671 = vmatprep.subr.mxu0 0.0
        %672 = vmatpush1.xpose.msra.mxu0 0.0
        %673 = vmatprep.subr.mxu0 0.0
        %674 = vmatpush1.xpose.msra.mxu0 0.0
        %675 = vmatprep.subr.mxu0 0.0
        %676 = vmatpush1.xpose.msra.mxu0 0.0
        %677 = vmatprep.subr.mxu0 0.0
        %678 = vmatpush1.xpose.msra.mxu0 0.0
        %679 = vmatprep.subr.mxu0 0.0
        %680 = vmatpush1.xpose.msra.mxu0 0.0
        %681 = vmatprep.subr.mxu0 0.0
        %682 = vmatpush1.xpose.msra.mxu0 0.0
        %683 = vmatprep.subr.mxu0 0.0
        %684 = vmatpush1.xpose.msra.mxu0 0.0
        %685 = vmatprep.subr.mxu0 0.0
        %686 = vmatpush1.xpose.msra.mxu0 0.0
        %687 = vmatprep.subr.mxu0 0.0
        %688 = vmatpush1.xpose.msra.mxu0 0.0
        %689 = vmatprep.subr.mxu0 0.0
        %690 = vmatpush1.xpose.msra.mxu0 0.0
        %691 = vmatprep.subr.mxu0 0.0
        %692 = vmatpush1.xpose.msra.mxu0 0.0
        %693 = vmatprep.subr.mxu0 0.0
        %694 = vmatpush1.xpose.msra.mxu0 0.0
        %695 = vmatprep.subr.mxu0 0.0
        %696 = vmatpush1.xpose.msra.mxu0 0.0
        %697 = vmatprep.subr.mxu0 0.0
        %698 = vmatpush1.xpose.msra.mxu0 0.0
        %699 = vmatprep.subr.mxu0 0.0
        %700 = vmatpush1.xpose.msra.mxu0 0.0
        %701 = vmatprep.subr.mxu0 0.0
        %702 = vmatpush1.xpose.msra.mxu0 0.0
        %703 = vmatprep.subr.mxu0 0.0
        %704 = vmatpush1.xpose.msra.mxu0 0.0
        %705 = vmatprep.subr.mxu0 0.0
        %706 = vmatpush1.xpose.msra.mxu0 0.0
        %707 = vmatprep.subr.mxu0 0.0
        %708 = vmatpush1.xpose.msra.mxu0 0.0
        %709 = vmatprep.subr.mxu0 0.0
        %710 = vmatpush1.xpose.msra.mxu0 0.0
        %711 = vmatprep.subr.mxu0 0.0
        %712 = vmatpush1.xpose.msra.mxu0 0.0
        %713 = vmatprep.subr.mxu0 0.0
        %714 = vmatpush1.xpose.msra.mxu0 0.0
        %715 = vmatprep.subr.mxu0 0.0
        %716 = vmatpush1.xpose.msra.mxu0 0.0
        %717 = vmatprep.subr.mxu0 0.0
        %718 = vmatpush1.xpose.msra.mxu0 0.0
        %719 = vmatprep.subr.mxu0 0.0
        %720 = vmatpush1.xpose.msra.mxu0 0.0
        %721 = vmatprep.mubr.f32.mxu0 0.0
        %722 = vmatmul.mubr.f32.gmra.mrb[0].mxu0 %v653
        %v723 = vpop.f32.mrb[0].mxu0
        %v724 = vadd.f32 0.0, %v723
        %v725 = vpop.f32.mrb[0].mxu0
        %726 = vdwg.mxu0
        %728 = vrot.lane.b32.xlu0 %v414, 112
        %v729 = vpop.permute.xlu0 %728
        %v730 = vsel %vm575, %v414, 0
        %v732 = vsel %vm575, %v729, 0
        %734 = vmatprep.subr.mxu0 0.0
        %735 = vmatpush1.xpose.msra.mxu0 %v732
        %736 = vmatprep.subr.mxu0 0.0
        %737 = vmatpush1.xpose.msra.mxu0 0.0
        %738 = vmatprep.subr.mxu0 0.0
        %739 = vmatpush1.xpose.msra.mxu0 0.0
        %740 = vmatprep.subr.mxu0 0.0
        %741 = vmatpush1.xpose.msra.mxu0 0.0
        %742 = vmatprep.subr.mxu0 0.0
        %743 = vmatpush1.xpose.msra.mxu0 0.0
        %744 = vmatprep.subr.mxu0 0.0
        %745 = vmatpush1.xpose.msra.mxu0 0.0
        %746 = vmatprep.subr.mxu0 0.0
        %747 = vmatpush1.xpose.msra.mxu0 0.0
        %748 = vmatprep.subr.mxu0 0.0
        %749 = vmatpush1.xpose.msra.mxu0 0.0
        %750 = vmatprep.subr.mxu0 0.0
        %751 = vmatpush1.xpose.msra.mxu0 0.0
        %752 = vmatprep.subr.mxu0 0.0
        %753 = vmatpush1.xpose.msra.mxu0 0.0
        %754 = vmatprep.subr.mxu0 0.0
        %755 = vmatpush1.xpose.msra.mxu0 0.0
        %756 = vmatprep.subr.mxu0 0.0
        %757 = vmatpush1.xpose.msra.mxu0 0.0
        %758 = vmatprep.subr.mxu0 0.0
        %759 = vmatpush1.xpose.msra.mxu0 0.0
        %760 = vmatprep.subr.mxu0 0.0
        %761 = vmatpush1.xpose.msra.mxu0 0.0
        %762 = vmatprep.subr.mxu0 0.0
        %763 = vmatpush1.xpose.msra.mxu0 0.0
        %764 = vmatprep.subr.mxu0 0.0
        %765 = vmatpush1.xpose.msra.mxu0 0.0
        %766 = vmatprep.subr.mxu0 0.0
        %767 = vmatpush1.xpose.msra.mxu0 0.0
        %768 = vmatprep.subr.mxu0 0.0
        %769 = vmatpush1.xpose.msra.mxu0 0.0
        %770 = vmatprep.subr.mxu0 0.0
        %771 = vmatpush1.xpose.msra.mxu0 0.0
        %772 = vmatprep.subr.mxu0 0.0
        %773 = vmatpush1.xpose.msra.mxu0 0.0
        %774 = vmatprep.subr.mxu0 0.0
        %775 = vmatpush1.xpose.msra.mxu0 0.0
        %776 = vmatprep.subr.mxu0 0.0
        %777 = vmatpush1.xpose.msra.mxu0 0.0
        %778 = vmatprep.subr.mxu0 0.0
        %779 = vmatpush1.xpose.msra.mxu0 0.0
        %780 = vmatprep.subr.mxu0 0.0
        %781 = vmatpush1.xpose.msra.mxu0 0.0
        %782 = vmatprep.subr.mxu0 0.0
        %783 = vmatpush1.xpose.msra.mxu0 0.0
        %784 = vmatprep.subr.mxu0 0.0
        %785 = vmatpush1.xpose.msra.mxu0 0.0
        %786 = vmatprep.subr.mxu0 0.0
        %787 = vmatpush1.xpose.msra.mxu0 0.0
        %788 = vmatprep.subr.mxu0 0.0
        %789 = vmatpush1.xpose.msra.mxu0 0.0
        %790 = vmatprep.subr.mxu0 0.0
        %791 = vmatpush1.xpose.msra.mxu0 0.0
        %792 = vmatprep.subr.mxu0 0.0
        %793 = vmatpush1.xpose.msra.mxu0 0.0
        %794 = vmatprep.subr.mxu0 0.0
        %795 = vmatpush1.xpose.msra.mxu0 0.0
        %796 = vmatprep.subr.mxu0 0.0
        %797 = vmatpush1.xpose.msra.mxu0 0.0
        %798 = vmatprep.mubr.f32.mxu0 0.0
        %799 = vmatmul.mubr.f32.gmra.mrb[0].mxu0 %v730
        %v800 = vpop.f32.mrb[0].mxu0
        %v801 = vadd.f32 0.0, %v800
        %v802 = vpop.f32.mrb[0].mxu0
        %803 = vdwg.mxu0
        %805 = vrot.lane.b32.xlu0 %v419, 112
        %v806 = vpop.permute.xlu0 %805
        %v807 = vsel %vm575, %v419, 0
        %v809 = vsel %vm575, %v806, 0
        %811 = vmatprep.subr.mxu0 0.0
        %812 = vmatpush1.xpose.msra.mxu0 %v809
        %813 = vmatprep.subr.mxu0 0.0
        %814 = vmatpush1.xpose.msra.mxu0 0.0
        %815 = vmatprep.subr.mxu0 0.0
        %816 = vmatpush1.xpose.msra.mxu0 0.0
        %817 = vmatprep.subr.mxu0 0.0
        %818 = vmatpush1.xpose.msra.mxu0 0.0
        %819 = vmatprep.subr.mxu0 0.0
        %820 = vmatpush1.xpose.msra.mxu0 0.0
        %821 = vmatprep.subr.mxu0 0.0
        %822 = vmatpush1.xpose.msra.mxu0 0.0
        %823 = vmatprep.subr.mxu0 0.0
        %824 = vmatpush1.xpose.msra.mxu0 0.0
        %825 = vmatprep.subr.mxu0 0.0
        %826 = vmatpush1.xpose.msra.mxu0 0.0
        %827 = vmatprep.subr.mxu0 0.0
        %828 = vmatpush1.xpose.msra.mxu0 0.0
        %829 = vmatprep.subr.mxu0 0.0
        %830 = vmatpush1.xpose.msra.mxu0 0.0
        %831 = vmatprep.subr.mxu0 0.0
        %832 = vmatpush1.xpose.msra.mxu0 0.0
        %833 = vmatprep.subr.mxu0 0.0
        %834 = vmatpush1.xpose.msra.mxu0 0.0
        %835 = vmatprep.subr.mxu0 0.0
        %836 = vmatpush1.xpose.msra.mxu0 0.0
        %837 = vmatprep.subr.mxu0 0.0
        %838 = vmatpush1.xpose.msra.mxu0 0.0
        %839 = vmatprep.subr.mxu0 0.0
        %840 = vmatpush1.xpose.msra.mxu0 0.0
        %841 = vmatprep.subr.mxu0 0.0
        %842 = vmatpush1.xpose.msra.mxu0 0.0
        %843 = vmatprep.subr.mxu0 0.0
        %844 = vmatpush1.xpose.msra.mxu0 0.0
        %845 = vmatprep.subr.mxu0 0.0
        %846 = vmatpush1.xpose.msra.mxu0 0.0
        %847 = vmatprep.subr.mxu0 0.0
        %848 = vmatpush1.xpose.msra.mxu0 0.0
        %849 = vmatprep.subr.mxu0 0.0
        %850 = vmatpush1.xpose.msra.mxu0 0.0
        %851 = vmatprep.subr.mxu0 0.0
        %852 = vmatpush1.xpose.msra.mxu0 0.0
        %853 = vmatprep.subr.mxu0 0.0
        %854 = vmatpush1.xpose.msra.mxu0 0.0
        %855 = vmatprep.subr.mxu0 0.0
        %856 = vmatpush1.xpose.msra.mxu0 0.0
        %857 = vmatprep.subr.mxu0 0.0
        %858 = vmatpush1.xpose.msra.mxu0 0.0
        %859 = vmatprep.subr.mxu0 0.0
        %860 = vmatpush1.xpose.msra.mxu0 0.0
        %861 = vmatprep.subr.mxu0 0.0
        %862 = vmatpush1.xpose.msra.mxu0 0.0
        %863 = vmatprep.subr.mxu0 0.0
        %864 = vmatpush1.xpose.msra.mxu0 0.0
        %865 = vmatprep.subr.mxu0 0.0
        %866 = vmatpush1.xpose.msra.mxu0 0.0
        %867 = vmatprep.subr.mxu0 0.0
        %868 = vmatpush1.xpose.msra.mxu0 0.0
        %869 = vmatprep.subr.mxu0 0.0
        %870 = vmatpush1.xpose.msra.mxu0 0.0
        %871 = vmatprep.subr.mxu0 0.0
        %872 = vmatpush1.xpose.msra.mxu0 0.0
        %873 = vmatprep.subr.mxu0 0.0
        %874 = vmatpush1.xpose.msra.mxu0 0.0
        %875 = vmatprep.mubr.f32.mxu0 0.0
        %876 = vmatmul.mubr.f32.gmra.mrb[0].mxu0 %v807
        %v877 = vpop.f32.mrb[0].mxu0
        %v878 = vadd.f32 0.0, %v877
        %v879 = vpop.f32.mrb[0].mxu0
        %880 = vdwg.mxu0
        %882 = vrot.lane.b32.xlu0 %v489, 112
        %v883 = vpop.permute.xlu0 %882
        %v884 = vsel %vm575, %v489, 0
        %v886 = vsel %vm575, %v883, 0
        %888 = vmatprep.subr.mxu0 0.0
        %889 = vmatpush1.xpose.msra.mxu0 %v886
        %890 = vmatprep.subr.mxu0 0.0
        %891 = vmatpush1.xpose.msra.mxu0 0.0
        %892 = vmatprep.subr.mxu0 0.0
        %893 = vmatpush1.xpose.msra.mxu0 0.0
        %894 = vmatprep.subr.mxu0 0.0
        %895 = vmatpush1.xpose.msra.mxu0 0.0
        %896 = vmatprep.subr.mxu0 0.0
        %897 = vmatpush1.xpose.msra.mxu0 0.0
        %898 = vmatprep.subr.mxu0 0.0
        %899 = vmatpush1.xpose.msra.mxu0 0.0
        %900 = vmatprep.subr.mxu0 0.0
        %901 = vmatpush1.xpose.msra.mxu0 0.0
        %902 = vmatprep.subr.mxu0 0.0
        %903 = vmatpush1.xpose.msra.mxu0 0.0
        %904 = vmatprep.subr.mxu0 0.0
        %905 = vmatpush1.xpose.msra.mxu0 0.0
        %906 = vmatprep.subr.mxu0 0.0
        %907 = vmatpush1.xpose.msra.mxu0 0.0
        %908 = vmatprep.subr.mxu0 0.0
        %909 = vmatpush1.xpose.msra.mxu0 0.0
        %910 = vmatprep.subr.mxu0 0.0
        %911 = vmatpush1.xpose.msra.mxu0 0.0
        %912 = vmatprep.subr.mxu0 0.0
        %913 = vmatpush1.xpose.msra.mxu0 0.0
        %914 = vmatprep.subr.mxu0 0.0
        %915 = vmatpush1.xpose.msra.mxu0 0.0
        %916 = vmatprep.subr.mxu0 0.0
        %917 = vmatpush1.xpose.msra.mxu0 0.0
        %918 = vmatprep.subr.mxu0 0.0
        %919 = vmatpush1.xpose.msra.mxu0 0.0
        %920 = vmatprep.subr.mxu0 0.0
        %921 = vmatpush1.xpose.msra.mxu0 0.0
        %922 = vmatprep.subr.mxu0 0.0
        %923 = vmatpush1.xpose.msra.mxu0 0.0
        %924 = vmatprep.subr.mxu0 0.0
        %925 = vmatpush1.xpose.msra.mxu0 0.0
        %926 = vmatprep.subr.mxu0 0.0
        %927 = vmatpush1.xpose.msra.mxu0 0.0
        %928 = vmatprep.subr.mxu0 0.0
        %929 = vmatpush1.xpose.msra.mxu0 0.0
        %930 = vmatprep.subr.mxu0 0.0
        %931 = vmatpush1.xpose.msra.mxu0 0.0
        %932 = vmatprep.subr.mxu0 0.0
        %933 = vmatpush1.xpose.msra.mxu0 0.0
        %934 = vmatprep.subr.mxu0 0.0
        %935 = vmatpush1.xpose.msra.mxu0 0.0
        %936 = vmatprep.subr.mxu0 0.0
        %937 = vmatpush1.xpose.msra.mxu0 0.0
        %938 = vmatprep.subr.mxu0 0.0
        %939 = vmatpush1.xpose.msra.mxu0 0.0
        %940 = vmatprep.subr.mxu0 0.0
        %941 = vmatpush1.xpose.msra.mxu0 0.0
        %942 = vmatprep.subr.mxu0 0.0
        %943 = vmatpush1.xpose.msra.mxu0 0.0
        %944 = vmatprep.subr.mxu0 0.0
        %945 = vmatpush1.xpose.msra.mxu0 0.0
        %946 = vmatprep.subr.mxu0 0.0
        %947 = vmatpush1.xpose.msra.mxu0 0.0
        %948 = vmatprep.subr.mxu0 0.0
        %949 = vmatpush1.xpose.msra.mxu0 0.0
        %950 = vmatprep.subr.mxu0 0.0
        %951 = vmatpush1.xpose.msra.mxu0 0.0
        %952 = vmatprep.mubr.f32.mxu0 0.0
        %953 = vmatmul.mubr.f32.gmra.mrb[0].mxu0 %v884
        %v954 = vpop.f32.mrb[0].mxu0
        %v955 = vadd.f32 0.0, %v954
        %v956 = vpop.f32.mrb[0].mxu0
        %957 = vdwg.mxu0
        %959 = vrot.lane.b32.xlu0 %v494, 112
        %v960 = vpop.permute.xlu0 %959
        %v961 = vsel %vm575, %v494, 0
        %v963 = vsel %vm575, %v960, 0
        %965 = vmatprep.subr.mxu0 0.0
        %966 = vmatpush1.xpose.msra.mxu0 %v963
        %967 = vmatprep.subr.mxu0 0.0
        %968 = vmatpush1.xpose.msra.mxu0 0.0
        %969 = vmatprep.subr.mxu0 0.0
        %970 = vmatpush1.xpose.msra.mxu0 0.0
        %971 = vmatprep.subr.mxu0 0.0
        %972 = vmatpush1.xpose.msra.mxu0 0.0
        %973 = vmatprep.subr.mxu0 0.0
        %974 = vmatpush1.xpose.msra.mxu0 0.0
        %975 = vmatprep.subr.mxu0 0.0
        %976 = vmatpush1.xpose.msra.mxu0 0.0
        %977 = vmatprep.subr.mxu0 0.0
        %978 = vmatpush1.xpose.msra.mxu0 0.0
        %979 = vmatprep.subr.mxu0 0.0
        %980 = vmatpush1.xpose.msra.mxu0 0.0
        %981 = vmatprep.subr.mxu0 0.0
        %982 = vmatpush1.xpose.msra.mxu0 0.0
        %983 = vmatprep.subr.mxu0 0.0
        %984 = vmatpush1.xpose.msra.mxu0 0.0
        %985 = vmatprep.subr.mxu0 0.0
        %986 = vmatpush1.xpose.msra.mxu0 0.0
        %987 = vmatprep.subr.mxu0 0.0
        %988 = vmatpush1.xpose.msra.mxu0 0.0
        %989 = vmatprep.subr.mxu0 0.0
        %990 = vmatpush1.xpose.msra.mxu0 0.0
        %991 = vmatprep.subr.mxu0 0.0
        %992 = vmatpush1.xpose.msra.mxu0 0.0
        %993 = vmatprep.subr.mxu0 0.0
        %994 = vmatpush1.xpose.msra.mxu0 0.0
        %995 = vmatprep.subr.mxu0 0.0
        %996 = vmatpush1.xpose.msra.mxu0 0.0
        %997 = vmatprep.subr.mxu0 0.0
        %998 = vmatpush1.xpose.msra.mxu0 0.0
        %999 = vmatprep.subr.mxu0 0.0
        %1000 = vmatpush1.xpose.msra.mxu0 0.0
        %1001 = vmatprep.subr.mxu0 0.0
        %1002 = vmatpush1.xpose.msra.mxu0 0.0
        %1003 = vmatprep.subr.mxu0 0.0
        %1004 = vmatpush1.xpose.msra.mxu0 0.0
        %1005 = vmatprep.subr.mxu0 0.0
        %1006 = vmatpush1.xpose.msra.mxu0 0.0
        %1007 = vmatprep.subr.mxu0 0.0
        %1008 = vmatpush1.xpose.msra.mxu0 0.0
        %1009 = vmatprep.subr.mxu0 0.0
        %1010 = vmatpush1.xpose.msra.mxu0 0.0
        %1011 = vmatprep.subr.mxu0 0.0
        %1012 = vmatpush1.xpose.msra.mxu0 0.0
        %1013 = vmatprep.subr.mxu0 0.0
        %1014 = vmatpush1.xpose.msra.mxu0 0.0
        %1015 = vmatprep.subr.mxu0 0.0
        %1016 = vmatpush1.xpose.msra.mxu0 0.0
        %1017 = vmatprep.subr.mxu0 0.0
        %1018 = vmatpush1.xpose.msra.mxu0 0.0
        %1019 = vmatprep.subr.mxu0 0.0
        %1020 = vmatpush1.xpose.msra.mxu0 0.0
        %1021 = vmatprep.subr.mxu0 0.0
        %1022 = vmatpush1.xpose.msra.mxu0 0.0
        %1023 = vmatprep.subr.mxu0 0.0
        %1024 = vmatpush1.xpose.msra.mxu0 0.0
        %1025 = vmatprep.subr.mxu0 0.0
        %1026 = vmatpush1.xpose.msra.mxu0 0.0
        %1027 = vmatprep.subr.mxu0 0.0
        %1028 = vmatpush1.xpose.msra.mxu0 0.0
        %1029 = vmatprep.mubr.f32.mxu0 0.0
        %1030 = vmatmul.mubr.f32.gmra.mrb[0].mxu0 %v961
        %v1031 = vpop.f32.mrb[0].mxu0
        %v1032 = vadd.f32 0.0, %v1031
        %v1033 = vpop.f32.mrb[0].mxu0
        %1034 = vdwg.mxu0
        %1036 = vrot.lane.b32.xlu0 %v564, 112
        %v1037 = vpop.permute.xlu0 %1036
        %v1038 = vsel %vm575, %v564, 0
        %v1040 = vsel %vm575, %v1037, 0
        %1042 = vmatprep.subr.mxu0 0.0
        %1043 = vmatpush1.xpose.msra.mxu0 %v1040
        %1044 = vmatprep.subr.mxu0 0.0
        %1045 = vmatpush1.xpose.msra.mxu0 0.0
        %1046 = vmatprep.subr.mxu0 0.0
        %1047 = vmatpush1.xpose.msra.mxu0 0.0
        %1048 = vmatprep.subr.mxu0 0.0
        %1049 = vmatpush1.xpose.msra.mxu0 0.0
        %1050 = vmatprep.subr.mxu0 0.0
        %1051 = vmatpush1.xpose.msra.mxu0 0.0
        %1052 = vmatprep.subr.mxu0 0.0
        %1053 = vmatpush1.xpose.msra.mxu0 0.0
        %1054 = vmatprep.subr.mxu0 0.0
        %1055 = vmatpush1.xpose.msra.mxu0 0.0
        %1056 = vmatprep.subr.mxu0 0.0
        %1057 = vmatpush1.xpose.msra.mxu0 0.0
        %1058 = vmatprep.subr.mxu0 0.0
        %1059 = vmatpush1.xpose.msra.mxu0 0.0
        %1060 = vmatprep.subr.mxu0 0.0
        %1061 = vmatpush1.xpose.msra.mxu0 0.0
        %1062 = vmatprep.subr.mxu0 0.0
        %1063 = vmatpush1.xpose.msra.mxu0 0.0
        %1064 = vmatprep.subr.mxu0 0.0
        %1065 = vmatpush1.xpose.msra.mxu0 0.0
        %1066 = vmatprep.subr.mxu0 0.0
        %1067 = vmatpush1.xpose.msra.mxu0 0.0
        %1068 = vmatprep.subr.mxu0 0.0
        %1069 = vmatpush1.xpose.msra.mxu0 0.0
        %1070 = vmatprep.subr.mxu0 0.0
        %1071 = vmatpush1.xpose.msra.mxu0 0.0
        %1072 = vmatprep.subr.mxu0 0.0
        %1073 = vmatpush1.xpose.msra.mxu0 0.0
        %1074 = vmatprep.subr.mxu0 0.0
        %1075 = vmatpush1.xpose.msra.mxu0 0.0
        %1076 = vmatprep.subr.mxu0 0.0
        %1077 = vmatpush1.xpose.msra.mxu0 0.0
        %1078 = vmatprep.subr.mxu0 0.0
        %1079 = vmatpush1.xpose.msra.mxu0 0.0
        %1080 = vmatprep.subr.mxu0 0.0
        %1081 = vmatpush1.xpose.msra.mxu0 0.0
        %1082 = vmatprep.subr.mxu0 0.0
        %1083 = vmatpush1.xpose.msra.mxu0 0.0
        %1084 = vmatprep.subr.mxu0 0.0
        %1085 = vmatpush1.xpose.msra.mxu0 0.0
        %1086 = vmatprep.subr.mxu0 0.0
        %1087 = vmatpush1.xpose.msra.mxu0 0.0
        %1088 = vmatprep.subr.mxu0 0.0
        %1089 = vmatpush1.xpose.msra.mxu0 0.0
        %1090 = vmatprep.subr.mxu0 0.0
        %1091 = vmatpush1.xpose.msra.mxu0 0.0
        %1092 = vmatprep.subr.mxu0 0.0
        %1093 = vmatpush1.xpose.msra.mxu0 0.0
        %1094 = vmatprep.subr.mxu0 0.0
        %1095 = vmatpush1.xpose.msra.mxu0 0.0
        %1096 = vmatprep.subr.mxu0 0.0
        %1097 = vmatpush1.xpose.msra.mxu0 0.0
        %1098 = vmatprep.subr.mxu0 0.0
        %1099 = vmatpush1.xpose.msra.mxu0 0.0
        %1100 = vmatprep.subr.mxu0 0.0
        %1101 = vmatpush1.xpose.msra.mxu0 0.0
        %1102 = vmatprep.subr.mxu0 0.0
        %1103 = vmatpush1.xpose.msra.mxu0 0.0
        %1104 = vmatprep.subr.mxu0 0.0
        %1105 = vmatpush1.xpose.msra.mxu0 0.0
        %1106 = vmatprep.mubr.f32.mxu0 0.0
        %1107 = vmatmul.mubr.f32.gmra.mrb[0].mxu0 %v1038
        %v1108 = vpop.f32.mrb[0].mxu0
        %v1109 = vadd.f32 0.0, %v1108
        %v1110 = vpop.f32.mrb[0].mxu0
        %1111 = vdwg.mxu0
        %1113 = vrot.lane.b32.xlu0 %v569, 112
        %v1114 = vpop.permute.xlu0 %1113
        %v1115 = vsel %vm575, %v569, 0
        %v1117 = vsel %vm575, %v1114, 0
        %1119 = vmatprep.subr.mxu0 0.0
        %1120 = vmatpush1.xpose.msra.mxu0 %v1117
        %1121 = vmatprep.subr.mxu0 0.0
        %1122 = vmatpush1.xpose.msra.mxu0 0.0
        %1123 = vmatprep.subr.mxu0 0.0
        %1124 = vmatpush1.xpose.msra.mxu0 0.0
        %1125 = vmatprep.subr.mxu0 0.0
        %1126 = vmatpush1.xpose.msra.mxu0 0.0
        %1127 = vmatprep.subr.mxu0 0.0
        %1128 = vmatpush1.xpose.msra.mxu0 0.0
        %1129 = vmatprep.subr.mxu0 0.0
        %1130 = vmatpush1.xpose.msra.mxu0 0.0
        %1131 = vmatprep.subr.mxu0 0.0
        %1132 = vmatpush1.xpose.msra.mxu0 0.0
        %1133 = vmatprep.subr.mxu0 0.0
        %1134 = vmatpush1.xpose.msra.mxu0 0.0
        %1135 = vmatprep.subr.mxu0 0.0
        %1136 = vmatpush1.xpose.msra.mxu0 0.0
        %1137 = vmatprep.subr.mxu0 0.0
        %1138 = vmatpush1.xpose.msra.mxu0 0.0
        %1139 = vmatprep.subr.mxu0 0.0
        %1140 = vmatpush1.xpose.msra.mxu0 0.0
        %1141 = vmatprep.subr.mxu0 0.0
        %1142 = vmatpush1.xpose.msra.mxu0 0.0
        %1143 = vmatprep.subr.mxu0 0.0
        %1144 = vmatpush1.xpose.msra.mxu0 0.0
        %1145 = vmatprep.subr.mxu0 0.0
        %1146 = vmatpush1.xpose.msra.mxu0 0.0
        %1147 = vmatprep.subr.mxu0 0.0
        %1148 = vmatpush1.xpose.msra.mxu0 0.0
        %1149 = vmatprep.subr.mxu0 0.0
        %1150 = vmatpush1.xpose.msra.mxu0 0.0
        %1151 = vmatprep.subr.mxu0 0.0
        %1152 = vmatpush1.xpose.msra.mxu0 0.0
        %1153 = vmatprep.subr.mxu0 0.0
        %1154 = vmatpush1.xpose.msra.mxu0 0.0
        %1155 = vmatprep.subr.mxu0 0.0
        %1156 = vmatpush1.xpose.msra.mxu0 0.0
        %1157 = vmatprep.subr.mxu0 0.0
        %1158 = vmatpush1.xpose.msra.mxu0 0.0
        %1159 = vmatprep.subr.mxu0 0.0
        %1160 = vmatpush1.xpose.msra.mxu0 0.0
        %1161 = vmatprep.subr.mxu0 0.0
        %1162 = vmatpush1.xpose.msra.mxu0 0.0
        %1163 = vmatprep.subr.mxu0 0.0
        %1164 = vmatpush1.xpose.msra.mxu0 0.0
        %1165 = vmatprep.subr.mxu0 0.0
        %1166 = vmatpush1.xpose.msra.mxu0 0.0
        %1167 = vmatprep.subr.mxu0 0.0
        %1168 = vmatpush1.xpose.msra.mxu0 0.0
        %1169 = vmatprep.subr.mxu0 0.0
        %1170 = vmatpush1.xpose.msra.mxu0 0.0
        %1171 = vmatprep.subr.mxu0 0.0
        %1172 = vmatpush1.xpose.msra.mxu0 0.0
        %1173 = vmatprep.subr.mxu0 0.0
        %1174 = vmatpush1.xpose.msra.mxu0 0.0
        %1175 = vmatprep.subr.mxu0 0.0
        %1176 = vmatpush1.xpose.msra.mxu0 0.0
        %1177 = vmatprep.subr.mxu0 0.0
        %1178 = vmatpush1.xpose.msra.mxu0 0.0
        %1179 = vmatprep.subr.mxu0 0.0
        %1180 = vmatpush1.xpose.msra.mxu0 0.0
        %1181 = vmatprep.subr.mxu0 0.0
        %1182 = vmatpush1.xpose.msra.mxu0 0.0
        %1183 = vmatprep.mubr.f32.mxu0 0.0
        %1184 = vmatmul.mubr.f32.gmra.mrb[0].mxu0 %v1115
        %v1185 = vpop.f32.mrb[0].mxu0
        %v1186 = vadd.f32 0.0, %v1185
        %v1187 = vpop.f32.mrb[0].mxu0
        %1188 = vdwg.mxu0
        %vm1189 = vcmask 64512
        %v1190 = vsel %vm1189, %v647, -inf
        %1191 = vmax.xlane.f32.xlu0 %v1190
        %v1192 = vpop.xlane.xlu0 %1191
        %v1193 = vsel %vm1189, %v724, -inf
        %1194 = vmax.xlane.f32.xlu0 %v1193
        %v1195 = vpop.xlane.xlu0 %1194
        %v1196 = vsel %vm1189, %v801, -inf
        %1197 = vmax.xlane.f32.xlu0 %v1196
        %v1198 = vpop.xlane.xlu0 %1197
        %v1199 = vsel %vm1189, %v878, -inf
        %1200 = vmax.xlane.f32.xlu0 %v1199
        %v1201 = vpop.xlane.xlu0 %1200
        %v1202 = vsel %vm1189, %v955, -inf
        %1203 = vmax.xlane.f32.xlu0 %v1202
        %v1204 = vpop.xlane.xlu0 %1203
        %v1205 = vsel %vm1189, %v1032, -inf
        %1206 = vmax.xlane.f32.xlu0 %v1205
        %v1207 = vpop.xlane.xlu0 %1206
        %v1208 = vsel %vm1189, %v1109, -inf
        %1209 = vmax.xlane.f32.xlu0 %v1208
        %v1210 = vpop.xlane.xlu0 %1209
        %v1211 = vsel %vm1189, %v1186, -inf
        %1212 = vmax.xlane.f32.xlu0 %v1211
        %v1213 = vpop.xlane.xlu0 %1212
        %v1214 = vsub.f32 %v647, %v1192
        %v1215 = vsub.f32 %v724, %v1195
        %v1216 = vsub.f32 %v801, %v1198
        %v1217 = vsub.f32 %v878, %v1201
        %v1218 = vsub.f32 %v955, %v1204
        %v1219 = vsub.f32 %v1032, %v1207
        %v1220 = vsub.f32 %v1109, %v1210
        %v1221 = vsub.f32 %v1186, %v1213
        %v1222 = vmul.f32 %v1214, 1.442695
        %v1223 = vpow.pop %v1222
        %v1224 = vmul.f32 %v1215, 1.442695
        %v1225 = vpow.pop %v1224
        %v1226 = vmul.f32 %v1216, 1.442695
        %v1227 = vpow.pop %v1226
        %v1228 = vmul.f32 %v1217, 1.442695
        %v1229 = vpow.pop %v1228
        %v1230 = vmul.f32 %v1218, 1.442695
        %v1231 = vpow.pop %v1230
        %v1232 = vmul.f32 %v1219, 1.442695
        %v1233 = vpow.pop %v1232
        %v1234 = vmul.f32 %v1220, 1.442695
        %v1235 = vpow.pop %v1234
        %v1236 = vmul.f32 %v1221, 1.442695
        %v1237 = vpow.pop %v1236
        %v1238 = vsel %vm1189, %v1223, 0.0
        %1239 = vadd.xlane.f32.xlu0 %v1238
        %v1240 = vpop.xlane.xlu0 %1239
        %v1241 = vsel %vm1189, %v1225, 0.0
        %1242 = vadd.xlane.f32.xlu0 %v1241
        %v1243 = vpop.xlane.xlu0 %1242
        %v1244 = vsel %vm1189, %v1227, 0.0
        %1245 = vadd.xlane.f32.xlu0 %v1244
        %v1246 = vpop.xlane.xlu0 %1245
        %v1247 = vsel %vm1189, %v1229, 0.0
        %1248 = vadd.xlane.f32.xlu0 %v1247
        %v1249 = vpop.xlane.xlu0 %1248
        %v1250 = vsel %vm1189, %v1231, 0.0
        %1251 = vadd.xlane.f32.xlu0 %v1250
        %v1252 = vpop.xlane.xlu0 %1251
        %v1253 = vsel %vm1189, %v1233, 0.0
        %1254 = vadd.xlane.f32.xlu0 %v1253
        %v1255 = vpop.xlane.xlu0 %1254
        %v1256 = vsel %vm1189, %v1235, 0.0
        %1257 = vadd.xlane.f32.xlu0 %v1256
        %v1258 = vpop.xlane.xlu0 %1257
        %v1259 = vsel %vm1189, %v1237, 0.0
        %1260 = vadd.xlane.f32.xlu0 %v1259
        %v1261 = vpop.xlane.xlu0 %1260
        %1262 = vrot.lane.b32.xlu0 %v339, 96
        %v1263 = vpop.permute.xlu0 %1262
        %v1266 = vsel %vm1189, %v1223, 0
        %1268 = vmatprep.subr.mxu0 0.0
        %1269 = vmatpush1.msra.mxu0 %v1263
        %1270 = vmatprep.subr.mxu0 0.0
        %1271 = vmatpush1.msra.mxu0 0.0
        %1272 = vmatprep.subr.mxu0 0.0
        %1273 = vmatpush1.msra.mxu0 0.0
        %1274 = vmatprep.subr.mxu0 0.0
        %1275 = vmatpush1.msra.mxu0 0.0
        %1276 = vmatprep.subr.mxu0 0.0
        %1277 = vmatpush1.msra.mxu0 0.0
        %1278 = vmatprep.subr.mxu0 0.0
        %1279 = vmatpush1.msra.mxu0 0.0
        %1280 = vmatprep.subr.mxu0 0.0
        %1281 = vmatpush1.msra.mxu0 0.0
        %1282 = vmatprep.subr.mxu0 0.0
        %1283 = vmatpush1.msra.mxu0 0.0
        %1284 = vmatprep.subr.mxu0 0.0
        %1285 = vmatpush1.msra.mxu0 0.0
        %1286 = vmatprep.subr.mxu0 0.0
        %1287 = vmatpush1.msra.mxu0 0.0
        %1288 = vmatprep.subr.mxu0 0.0
        %1289 = vmatpush1.msra.mxu0 0.0
        %1290 = vmatprep.subr.mxu0 0.0
        %1291 = vmatpush1.msra.mxu0 0.0
        %1292 = vmatprep.subr.mxu0 0.0
        %1293 = vmatpush1.msra.mxu0 0.0
        %1294 = vmatprep.subr.mxu0 0.0
        %1295 = vmatpush1.msra.mxu0 0.0
        %1296 = vmatprep.subr.mxu0 0.0
        %1297 = vmatpush1.msra.mxu0 0.0
        %1298 = vmatprep.subr.mxu0 0.0
        %1299 = vmatpush1.msra.mxu0 0.0
        %1300 = vmatprep.subr.mxu0 0.0
        %1301 = vmatpush1.msra.mxu0 0.0
        %1302 = vmatprep.subr.mxu0 0.0
        %1303 = vmatpush1.msra.mxu0 0.0
        %1304 = vmatprep.subr.mxu0 0.0
        %1305 = vmatpush1.msra.mxu0 0.0
        %1306 = vmatprep.subr.mxu0 0.0
        %1307 = vmatpush1.msra.mxu0 0.0
        %1308 = vmatprep.subr.mxu0 0.0
        %1309 = vmatpush1.msra.mxu0 0.0
        %1310 = vmatprep.subr.mxu0 0.0
        %1311 = vmatpush1.msra.mxu0 0.0
        %1312 = vmatprep.subr.mxu0 0.0
        %1313 = vmatpush1.msra.mxu0 0.0
        %1314 = vmatprep.subr.mxu0 0.0
        %1315 = vmatpush1.msra.mxu0 0.0
        %1316 = vmatprep.subr.mxu0 0.0
        %1317 = vmatpush1.msra.mxu0 0.0
        %1318 = vmatprep.subr.mxu0 0.0
        %1319 = vmatpush1.msra.mxu0 0.0
        %1320 = vmatprep.subr.mxu0 0.0
        %1321 = vmatpush1.msra.mxu0 0.0
        %1322 = vmatprep.subr.mxu0 0.0
        %1323 = vmatpush1.msra.mxu0 0.0
        %1324 = vmatprep.subr.mxu0 0.0
        %1325 = vmatpush1.msra.mxu0 0.0
        %1326 = vmatprep.subr.mxu0 0.0
        %1327 = vmatpush1.msra.mxu0 0.0
        %1328 = vmatprep.subr.mxu0 0.0
        %1329 = vmatpush1.msra.mxu0 0.0
        %1330 = vmatprep.subr.mxu0 0.0
        %1331 = vmatpush1.msra.mxu0 0.0
        %1332 = vmatprep.mubr.f32.mxu0 0.0
        %1333 = vmatmul.mubr.f32.gmra.mrb[0].mxu0 %v1266
        %v1334 = vpop.f32.mrb[0].mxu0
        %v1335 = vadd.f32 0.0, %v1334
        %v1336 = vpop.f32.mrb[0].mxu0
        %1337 = vdwg.mxu0
        %1338 = vrot.lane.b32.xlu0 %v344, 96
        %v1339 = vpop.permute.xlu0 %1338
        %v1342 = vsel %vm1189, %v1225, 0
        %1344 = vmatprep.subr.mxu0 0.0
        %1345 = vmatpush1.msra.mxu0 %v1339
        %1346 = vmatprep.subr.mxu0 0.0
        %1347 = vmatpush1.msra.mxu0 0.0
        %1348 = vmatprep.subr.mxu0 0.0
        %1349 = vmatpush1.msra.mxu0 0.0
        %1350 = vmatprep.subr.mxu0 0.0
        %1351 = vmatpush1.msra.mxu0 0.0
        %1352 = vmatprep.subr.mxu0 0.0
        %1353 = vmatpush1.msra.mxu0 0.0
        %1354 = vmatprep.subr.mxu0 0.0
        %1355 = vmatpush1.msra.mxu0 0.0
        %1356 = vmatprep.subr.mxu0 0.0
        %1357 = vmatpush1.msra.mxu0 0.0
        %1358 = vmatprep.subr.mxu0 0.0
        %1359 = vmatpush1.msra.mxu0 0.0
        %1360 = vmatprep.subr.mxu0 0.0
        %1361 = vmatpush1.msra.mxu0 0.0
        %1362 = vmatprep.subr.mxu0 0.0
        %1363 = vmatpush1.msra.mxu0 0.0
        %1364 = vmatprep.subr.mxu0 0.0
        %1365 = vmatpush1.msra.mxu0 0.0
        %1366 = vmatprep.subr.mxu0 0.0
        %1367 = vmatpush1.msra.mxu0 0.0
        %1368 = vmatprep.subr.mxu0 0.0
        %1369 = vmatpush1.msra.mxu0 0.0
        %1370 = vmatprep.subr.mxu0 0.0
        %1371 = vmatpush1.msra.mxu0 0.0
        %1372 = vmatprep.subr.mxu0 0.0
        %1373 = vmatpush1.msra.mxu0 0.0
        %1374 = vmatprep.subr.mxu0 0.0
        %1375 = vmatpush1.msra.mxu0 0.0
        %1376 = vmatprep.subr.mxu0 0.0
        %1377 = vmatpush1.msra.mxu0 0.0
        %1378 = vmatprep.subr.mxu0 0.0
        %1379 = vmatpush1.msra.mxu0 0.0
        %1380 = vmatprep.subr.mxu0 0.0
        %1381 = vmatpush1.msra.mxu0 0.0
        %1382 = vmatprep.subr.mxu0 0.0
        %1383 = vmatpush1.msra.mxu0 0.0
        %1384 = vmatprep.subr.mxu0 0.0
        %1385 = vmatpush1.msra.mxu0 0.0
        %1386 = vmatprep.subr.mxu0 0.0
        %1387 = vmatpush1.msra.mxu0 0.0
        %1388 = vmatprep.subr.mxu0 0.0
        %1389 = vmatpush1.msra.mxu0 0.0
        %1390 = vmatprep.subr.mxu0 0.0
        %1391 = vmatpush1.msra.mxu0 0.0
        %1392 = vmatprep.subr.mxu0 0.0
        %1393 = vmatpush1.msra.mxu0 0.0
        %1394 = vmatprep.subr.mxu0 0.0
        %1395 = vmatpush1.msra.mxu0 0.0
        %1396 = vmatprep.subr.mxu0 0.0
        %1397 = vmatpush1.msra.mxu0 0.0
        %1398 = vmatprep.subr.mxu0 0.0
        %1399 = vmatpush1.msra.mxu0 0.0
        %1400 = vmatprep.subr.mxu0 0.0
        %1401 = vmatpush1.msra.mxu0 0.0
        %1402 = vmatprep.subr.mxu0 0.0
        %1403 = vmatpush1.msra.mxu0 0.0
        %1404 = vmatprep.subr.mxu0 0.0
        %1405 = vmatpush1.msra.mxu0 0.0
        %1406 = vmatprep.subr.mxu0 0.0
        %1407 = vmatpush1.msra.mxu0 0.0
        %1408 = vmatprep.mubr.f32.mxu0 0.0
        %1409 = vmatmul.mubr.f32.gmra.mrb[0].mxu0 %v1342
        %v1410 = vpop.f32.mrb[0].mxu0
        %v1411 = vadd.f32 0.0, %v1410
        %v1412 = vpop.f32.mrb[0].mxu0
        %1413 = vdwg.mxu0
        %1414 = vrot.lane.b32.xlu0 %v414, 96
        %v1415 = vpop.permute.xlu0 %1414
        %v1418 = vsel %vm1189, %v1227, 0
        %1420 = vmatprep.subr.mxu0 0.0
        %1421 = vmatpush1.msra.mxu0 %v1415
        %1422 = vmatprep.subr.mxu0 0.0
        %1423 = vmatpush1.msra.mxu0 0.0
        %1424 = vmatprep.subr.mxu0 0.0
        %1425 = vmatpush1.msra.mxu0 0.0
        %1426 = vmatprep.subr.mxu0 0.0
        %1427 = vmatpush1.msra.mxu0 0.0
        %1428 = vmatprep.subr.mxu0 0.0
        %1429 = vmatpush1.msra.mxu0 0.0
        %1430 = vmatprep.subr.mxu0 0.0
        %1431 = vmatpush1.msra.mxu0 0.0
        %1432 = vmatprep.subr.mxu0 0.0
        %1433 = vmatpush1.msra.mxu0 0.0
        %1434 = vmatprep.subr.mxu0 0.0
        %1435 = vmatpush1.msra.mxu0 0.0
        %1436 = vmatprep.subr.mxu0 0.0
        %1437 = vmatpush1.msra.mxu0 0.0
        %1438 = vmatprep.subr.mxu0 0.0
        %1439 = vmatpush1.msra.mxu0 0.0
        %1440 = vmatprep.subr.mxu0 0.0
        %1441 = vmatpush1.msra.mxu0 0.0
        %1442 = vmatprep.subr.mxu0 0.0
        %1443 = vmatpush1.msra.mxu0 0.0
        %1444 = vmatprep.subr.mxu0 0.0
        %1445 = vmatpush1.msra.mxu0 0.0
        %1446 = vmatprep.subr.mxu0 0.0
        %1447 = vmatpush1.msra.mxu0 0.0
        %1448 = vmatprep.subr.mxu0 0.0
        %1449 = vmatpush1.msra.mxu0 0.0
        %1450 = vmatprep.subr.mxu0 0.0
        %1451 = vmatpush1.msra.mxu0 0.0
        %1452 = vmatprep.subr.mxu0 0.0
        %1453 = vmatpush1.msra.mxu0 0.0
        %1454 = vmatprep.subr.mxu0 0.0
        %1455 = vmatpush1.msra.mxu0 0.0
        %1456 = vmatprep.subr.mxu0 0.0
        %1457 = vmatpush1.msra.mxu0 0.0
        %1458 = vmatprep.subr.mxu0 0.0
        %1459 = vmatpush1.msra.mxu0 0.0
        %1460 = vmatprep.subr.mxu0 0.0
        %1461 = vmatpush1.msra.mxu0 0.0
        %1462 = vmatprep.subr.mxu0 0.0
        %1463 = vmatpush1.msra.mxu0 0.0
        %1464 = vmatprep.subr.mxu0 0.0
        %1465 = vmatpush1.msra.mxu0 0.0
        %1466 = vmatprep.subr.mxu0 0.0
        %1467 = vmatpush1.msra.mxu0 0.0
        %1468 = vmatprep.subr.mxu0 0.0
        %1469 = vmatpush1.msra.mxu0 0.0
        %1470 = vmatprep.subr.mxu0 0.0
        %1471 = vmatpush1.msra.mxu0 0.0
        %1472 = vmatprep.subr.mxu0 0.0
        %1473 = vmatpush1.msra.mxu0 0.0
        %1474 = vmatprep.subr.mxu0 0.0
        %1475 = vmatpush1.msra.mxu0 0.0
        %1476 = vmatprep.subr.mxu0 0.0
        %1477 = vmatpush1.msra.mxu0 0.0
        %1478 = vmatprep.subr.mxu0 0.0
        %1479 = vmatpush1.msra.mxu0 0.0
        %1480 = vmatprep.subr.mxu0 0.0
        %1481 = vmatpush1.msra.mxu0 0.0
        %1482 = vmatprep.subr.mxu0 0.0
        %1483 = vmatpush1.msra.mxu0 0.0
        %1484 = vmatprep.mubr.f32.mxu0 0.0
        %1485 = vmatmul.mubr.f32.gmra.mrb[0].mxu0 %v1418
        %v1486 = vpop.f32.mrb[0].mxu0
        %v1487 = vadd.f32 0.0, %v1486
        %v1488 = vpop.f32.mrb[0].mxu0
        %1489 = vdwg.mxu0
        %1490 = vrot.lane.b32.xlu0 %v419, 96
        %v1491 = vpop.permute.xlu0 %1490
        %v1494 = vsel %vm1189, %v1229, 0
        %1496 = vmatprep.subr.mxu0 0.0
        %1497 = vmatpush1.msra.mxu0 %v1491
        %1498 = vmatprep.subr.mxu0 0.0
        %1499 = vmatpush1.msra.mxu0 0.0
        %1500 = vmatprep.subr.mxu0 0.0
        %1501 = vmatpush1.msra.mxu0 0.0
        %1502 = vmatprep.subr.mxu0 0.0
        %1503 = vmatpush1.msra.mxu0 0.0
        %1504 = vmatprep.subr.mxu0 0.0
        %1505 = vmatpush1.msra.mxu0 0.0
        %1506 = vmatprep.subr.mxu0 0.0
        %1507 = vmatpush1.msra.mxu0 0.0
        %1508 = vmatprep.subr.mxu0 0.0
        %1509 = vmatpush1.msra.mxu0 0.0
        %1510 = vmatprep.subr.mxu0 0.0
        %1511 = vmatpush1.msra.mxu0 0.0
        %1512 = vmatprep.subr.mxu0 0.0
        %1513 = vmatpush1.msra.mxu0 0.0
        %1514 = vmatprep.subr.mxu0 0.0
        %1515 = vmatpush1.msra.mxu0 0.0
        %1516 = vmatprep.subr.mxu0 0.0
        %1517 = vmatpush1.msra.mxu0 0.0
        %1518 = vmatprep.subr.mxu0 0.0
        %1519 = vmatpush1.msra.mxu0 0.0
        %1520 = vmatprep.subr.mxu0 0.0
        %1521 = vmatpush1.msra.mxu0 0.0
        %1522 = vmatprep.subr.mxu0 0.0
        %1523 = vmatpush1.msra.mxu0 0.0
        %1524 = vmatprep.subr.mxu0 0.0
        %1525 = vmatpush1.msra.mxu0 0.0
        %1526 = vmatprep.subr.mxu0 0.0
        %1527 = vmatpush1.msra.mxu0 0.0
        %1528 = vmatprep.subr.mxu0 0.0
        %1529 = vmatpush1.msra.mxu0 0.0
        %1530 = vmatprep.subr.mxu0 0.0
        %1531 = vmatpush1.msra.mxu0 0.0
        %1532 = vmatprep.subr.mxu0 0.0
        %1533 = vmatpush1.msra.mxu0 0.0
        %1534 = vmatprep.subr.mxu0 0.0
        %1535 = vmatpush1.msra.mxu0 0.0
        %1536 = vmatprep.subr.mxu0 0.0
        %1537 = vmatpush1.msra.mxu0 0.0
        %1538 = vmatprep.subr.mxu0 0.0
        %1539 = vmatpush1.msra.mxu0 0.0
        %1540 = vmatprep.subr.mxu0 0.0
        %1541 = vmatpush1.msra.mxu0 0.0
        %1542 = vmatprep.subr.mxu0 0.0
        %1543 = vmatpush1.msra.mxu0 0.0
        %1544 = vmatprep.subr.mxu0 0.0
        %1545 = vmatpush1.msra.mxu0 0.0
        %1546 = vmatprep.subr.mxu0 0.0
        %1547 = vmatpush1.msra.mxu0 0.0
        %1548 = vmatprep.subr.mxu0 0.0
        %1549 = vmatpush1.msra.mxu0 0.0
        %1550 = vmatprep.subr.mxu0 0.0
        %1551 = vmatpush1.msra.mxu0 0.0
        %1552 = vmatprep.subr.mxu0 0.0
        %1553 = vmatpush1.msra.mxu0 0.0
        %1554 = vmatprep.subr.mxu0 0.0
        %1555 = vmatpush1.msra.mxu0 0.0
        %1556 = vmatprep.subr.mxu0 0.0
        %1557 = vmatpush1.msra.mxu0 0.0
        %1558 = vmatprep.subr.mxu0 0.0
        %1559 = vmatpush1.msra.mxu0 0.0
        %1560 = vmatprep.mubr.f32.mxu0 0.0
        %1561 = vmatmul.mubr.f32.gmra.mrb[0].mxu0 %v1494
        %v1562 = vpop.f32.mrb[0].mxu0
        %v1563 = vadd.f32 0.0, %v1562
        %v1564 = vpop.f32.mrb[0].mxu0
        %1565 = vdwg.mxu0
        %1566 = vrot.lane.b32.xlu0 %v489, 96
        %v1567 = vpop.permute.xlu0 %1566
        %v1570 = vsel %vm1189, %v1231, 0
        %1572 = vmatprep.subr.mxu0 0.0
        %1573 = vmatpush1.msra.mxu0 %v1567
        %1574 = vmatprep.subr.mxu0 0.0
        %1575 = vmatpush1.msra.mxu0 0.0
        %1576 = vmatprep.subr.mxu0 0.0
        %1577 = vmatpush1.msra.mxu0 0.0
        %1578 = vmatprep.subr.mxu0 0.0
        %1579 = vmatpush1.msra.mxu0 0.0
        %1580 = vmatprep.subr.mxu0 0.0
        %1581 = vmatpush1.msra.mxu0 0.0
        %1582 = vmatprep.subr.mxu0 0.0
        %1583 = vmatpush1.msra.mxu0 0.0
        %1584 = vmatprep.subr.mxu0 0.0
        %1585 = vmatpush1.msra.mxu0 0.0
        %1586 = vmatprep.subr.mxu0 0.0
        %1587 = vmatpush1.msra.mxu0 0.0
        %1588 = vmatprep.subr.mxu0 0.0
        %1589 = vmatpush1.msra.mxu0 0.0
        %1590 = vmatprep.subr.mxu0 0.0
        %1591 = vmatpush1.msra.mxu0 0.0
        %1592 = vmatprep.subr.mxu0 0.0
        %1593 = vmatpush1.msra.mxu0 0.0
        %1594 = vmatprep.subr.mxu0 0.0
        %1595 = vmatpush1.msra.mxu0 0.0
        %1596 = vmatprep.subr.mxu0 0.0
        %1597 = vmatpush1.msra.mxu0 0.0
        %1598 = vmatprep.subr.mxu0 0.0
        %1599 = vmatpush1.msra.mxu0 0.0
        %1600 = vmatprep.subr.mxu0 0.0
        %1601 = vmatpush1.msra.mxu0 0.0
        %1602 = vmatprep.subr.mxu0 0.0
        %1603 = vmatpush1.msra.mxu0 0.0
        %1604 = vmatprep.subr.mxu0 0.0
        %1605 = vmatpush1.msra.mxu0 0.0
        %1606 = vmatprep.subr.mxu0 0.0
        %1607 = vmatpush1.msra.mxu0 0.0
        %1608 = vmatprep.subr.mxu0 0.0
        %1609 = vmatpush1.msra.mxu0 0.0
        %1610 = vmatprep.subr.mxu0 0.0
        %1611 = vmatpush1.msra.mxu0 0.0
        %1612 = vmatprep.subr.mxu0 0.0
        %1613 = vmatpush1.msra.mxu0 0.0
        %1614 = vmatprep.subr.mxu0 0.0
        %1615 = vmatpush1.msra.mxu0 0.0
        %1616 = vmatprep.subr.mxu0 0.0
        %1617 = vmatpush1.msra.mxu0 0.0
        %1618 = vmatprep.subr.mxu0 0.0
        %1619 = vmatpush1.msra.mxu0 0.0
        %1620 = vmatprep.subr.mxu0 0.0
        %1621 = vmatpush1.msra.mxu0 0.0
        %1622 = vmatprep.subr.mxu0 0.0
        %1623 = vmatpush1.msra.mxu0 0.0
        %1624 = vmatprep.subr.mxu0 0.0
        %1625 = vmatpush1.msra.mxu0 0.0
        %1626 = vmatprep.subr.mxu0 0.0
        %1627 = vmatpush1.msra.mxu0 0.0
        %1628 = vmatprep.subr.mxu0 0.0
        %1629 = vmatpush1.msra.mxu0 0.0
        %1630 = vmatprep.subr.mxu0 0.0
        %1631 = vmatpush1.msra.mxu0 0.0
        %1632 = vmatprep.subr.mxu0 0.0
        %1633 = vmatpush1.msra.mxu0 0.0
        %1634 = vmatprep.subr.mxu0 0.0
        %1635 = vmatpush1.msra.mxu0 0.0
        %1636 = vmatprep.mubr.f32.mxu0 0.0
        %1637 = vmatmul.mubr.f32.gmra.mrb[0].mxu0 %v1570
        %v1638 = vpop.f32.mrb[0].mxu0
        %v1639 = vadd.f32 0.0, %v1638
        %v1640 = vpop.f32.mrb[0].mxu0
        %1641 = vdwg.mxu0
        %1642 = vrot.lane.b32.xlu0 %v494, 96
        %v1643 = vpop.permute.xlu0 %1642
        %v1646 = vsel %vm1189, %v1233, 0
        %1648 = vmatprep.subr.mxu0 0.0
        %1649 = vmatpush1.msra.mxu0 %v1643
        %1650 = vmatprep.subr.mxu0 0.0
        %1651 = vmatpush1.msra.mxu0 0.0
        %1652 = vmatprep.subr.mxu0 0.0
        %1653 = vmatpush1.msra.mxu0 0.0
        %1654 = vmatprep.subr.mxu0 0.0
        %1655 = vmatpush1.msra.mxu0 0.0
        %1656 = vmatprep.subr.mxu0 0.0
        %1657 = vmatpush1.msra.mxu0 0.0
        %1658 = vmatprep.subr.mxu0 0.0
        %1659 = vmatpush1.msra.mxu0 0.0
        %1660 = vmatprep.subr.mxu0 0.0
        %1661 = vmatpush1.msra.mxu0 0.0
        %1662 = vmatprep.subr.mxu0 0.0
        %1663 = vmatpush1.msra.mxu0 0.0
        %1664 = vmatprep.subr.mxu0 0.0
        %1665 = vmatpush1.msra.mxu0 0.0
        %1666 = vmatprep.subr.mxu0 0.0
        %1667 = vmatpush1.msra.mxu0 0.0
        %1668 = vmatprep.subr.mxu0 0.0
        %1669 = vmatpush1.msra.mxu0 0.0
        %1670 = vmatprep.subr.mxu0 0.0
        %1671 = vmatpush1.msra.mxu0 0.0
        %1672 = vmatprep.subr.mxu0 0.0
        %1673 = vmatpush1.msra.mxu0 0.0
        %1674 = vmatprep.subr.mxu0 0.0
        %1675 = vmatpush1.msra.mxu0 0.0
        %1676 = vmatprep.subr.mxu0 0.0
        %1677 = vmatpush1.msra.mxu0 0.0
        %1678 = vmatprep.subr.mxu0 0.0
        %1679 = vmatpush1.msra.mxu0 0.0
        %1680 = vmatprep.subr.mxu0 0.0
        %1681 = vmatpush1.msra.mxu0 0.0
        %1682 = vmatprep.subr.mxu0 0.0
        %1683 = vmatpush1.msra.mxu0 0.0
        %1684 = vmatprep.subr.mxu0 0.0
        %1685 = vmatpush1.msra.mxu0 0.0
        %1686 = vmatprep.subr.mxu0 0.0
        %1687 = vmatpush1.msra.mxu0 0.0
        %1688 = vmatprep.subr.mxu0 0.0
        %1689 = vmatpush1.msra.mxu0 0.0
        %1690 = vmatprep.subr.mxu0 0.0
        %1691 = vmatpush1.msra.mxu0 0.0
        %1692 = vmatprep.subr.mxu0 0.0
        %1693 = vmatpush1.msra.mxu0 0.0
        %1694 = vmatprep.subr.mxu0 0.0
        %1695 = vmatpush1.msra.mxu0 0.0
        %1696 = vmatprep.subr.mxu0 0.0
        %1697 = vmatpush1.msra.mxu0 0.0
        %1698 = vmatprep.subr.mxu0 0.0
        %1699 = vmatpush1.msra.mxu0 0.0
        %1700 = vmatprep.subr.mxu0 0.0
        %1701 = vmatpush1.msra.mxu0 0.0
        %1702 = vmatprep.subr.mxu0 0.0
        %1703 = vmatpush1.msra.mxu0 0.0
        %1704 = vmatprep.subr.mxu0 0.0
        %1705 = vmatpush1.msra.mxu0 0.0
        %1706 = vmatprep.subr.mxu0 0.0
        %1707 = vmatpush1.msra.mxu0 0.0
        %1708 = vmatprep.subr.mxu0 0.0
        %1709 = vmatpush1.msra.mxu0 0.0
        %1710 = vmatprep.subr.mxu0 0.0
        %1711 = vmatpush1.msra.mxu0 0.0
        %1712 = vmatprep.mubr.f32.mxu0 0.0
        %1713 = vmatmul.mubr.f32.gmra.mrb[0].mxu0 %v1646
        %v1714 = vpop.f32.mrb[0].mxu0
        %v1715 = vadd.f32 0.0, %v1714
        %v1716 = vpop.f32.mrb[0].mxu0
        %1717 = vdwg.mxu0
        %1718 = vrot.lane.b32.xlu0 %v564, 96
        %v1719 = vpop.permute.xlu0 %1718
        %v1722 = vsel %vm1189, %v1235, 0
        %1724 = vmatprep.subr.mxu0 0.0
        %1725 = vmatpush1.msra.mxu0 %v1719
        %1726 = vmatprep.subr.mxu0 0.0
        %1727 = vmatpush1.msra.mxu0 0.0
        %1728 = vmatprep.subr.mxu0 0.0
        %1729 = vmatpush1.msra.mxu0 0.0
        %1730 = vmatprep.subr.mxu0 0.0
        %1731 = vmatpush1.msra.mxu0 0.0
        %1732 = vmatprep.subr.mxu0 0.0
        %1733 = vmatpush1.msra.mxu0 0.0
        %1734 = vmatprep.subr.mxu0 0.0
        %1735 = vmatpush1.msra.mxu0 0.0
        %1736 = vmatprep.subr.mxu0 0.0
        %1737 = vmatpush1.msra.mxu0 0.0
        %1738 = vmatprep.subr.mxu0 0.0
        %1739 = vmatpush1.msra.mxu0 0.0
        %1740 = vmatprep.subr.mxu0 0.0
        %1741 = vmatpush1.msra.mxu0 0.0
        %1742 = vmatprep.subr.mxu0 0.0
        %1743 = vmatpush1.msra.mxu0 0.0
        %1744 = vmatprep.subr.mxu0 0.0
        %1745 = vmatpush1.msra.mxu0 0.0
        %1746 = vmatprep.subr.mxu0 0.0
        %1747 = vmatpush1.msra.mxu0 0.0
        %1748 = vmatprep.subr.mxu0 0.0
        %1749 = vmatpush1.msra.mxu0 0.0
        %1750 = vmatprep.subr.mxu0 0.0
        %1751 = vmatpush1.msra.mxu0 0.0
        %1752 = vmatprep.subr.mxu0 0.0
        %1753 = vmatpush1.msra.mxu0 0.0
        %1754 = vmatprep.subr.mxu0 0.0
        %1755 = vmatpush1.msra.mxu0 0.0
        %1756 = vmatprep.subr.mxu0 0.0
        %1757 = vmatpush1.msra.mxu0 0.0
        %1758 = vmatprep.subr.mxu0 0.0
        %1759 = vmatpush1.msra.mxu0 0.0
        %1760 = vmatprep.subr.mxu0 0.0
        %1761 = vmatpush1.msra.mxu0 0.0
        %1762 = vmatprep.subr.mxu0 0.0
        %1763 = vmatpush1.msra.mxu0 0.0
        %1764 = vmatprep.subr.mxu0 0.0
        %1765 = vmatpush1.msra.mxu0 0.0
        %1766 = vmatprep.subr.mxu0 0.0
        %1767 = vmatpush1.msra.mxu0 0.0
        %1768 = vmatprep.subr.mxu0 0.0
        %1769 = vmatpush1.msra.mxu0 0.0
        %1770 = vmatprep.subr.mxu0 0.0
        %1771 = vmatpush1.msra.mxu0 0.0
        %1772 = vmatprep.subr.mxu0 0.0
        %1773 = vmatpush1.msra.mxu0 0.0
        %1774 = vmatprep.subr.mxu0 0.0
        %1775 = vmatpush1.msra.mxu0 0.0
        %1776 = vmatprep.subr.mxu0 0.0
        %1777 = vmatpush1.msra.mxu0 0.0
        %1778 = vmatprep.subr.mxu0 0.0
        %1779 = vmatpush1.msra.mxu0 0.0
        %1780 = vmatprep.subr.mxu0 0.0
        %1781 = vmatpush1.msra.mxu0 0.0
        %1782 = vmatprep.subr.mxu0 0.0
        %1783 = vmatpush1.msra.mxu0 0.0
        %1784 = vmatprep.subr.mxu0 0.0
        %1785 = vmatpush1.msra.mxu0 0.0
        %1786 = vmatprep.subr.mxu0 0.0
        %1787 = vmatpush1.msra.mxu0 0.0
        %1788 = vmatprep.mubr.f32.mxu0 0.0
        %1789 = vmatmul.mubr.f32.gmra.mrb[0].mxu0 %v1722
        %v1790 = vpop.f32.mrb[0].mxu0
        %v1791 = vadd.f32 0.0, %v1790
        %v1792 = vpop.f32.mrb[0].mxu0
        %1793 = vdwg.mxu0
        %1794 = vrot.lane.b32.xlu0 %v569, 96
        %v1795 = vpop.permute.xlu0 %1794
        %v1798 = vsel %vm1189, %v1237, 0
        %1800 = vmatprep.subr.mxu0 0.0
        %1801 = vmatpush1.msra.mxu0 %v1795
        %1802 = vmatprep.subr.mxu0 0.0
        %1803 = vmatpush1.msra.mxu0 0.0
        %1804 = vmatprep.subr.mxu0 0.0
        %1805 = vmatpush1.msra.mxu0 0.0
        %1806 = vmatprep.subr.mxu0 0.0
        %1807 = vmatpush1.msra.mxu0 0.0
        %1808 = vmatprep.subr.mxu0 0.0
        %1809 = vmatpush1.msra.mxu0 0.0
        %1810 = vmatprep.subr.mxu0 0.0
        %1811 = vmatpush1.msra.mxu0 0.0
        %1812 = vmatprep.subr.mxu0 0.0
        %1813 = vmatpush1.msra.mxu0 0.0
        %1814 = vmatprep.subr.mxu0 0.0
        %1815 = vmatpush1.msra.mxu0 0.0
        %1816 = vmatprep.subr.mxu0 0.0
        %1817 = vmatpush1.msra.mxu0 0.0
        %1818 = vmatprep.subr.mxu0 0.0
        %1819 = vmatpush1.msra.mxu0 0.0
        %1820 = vmatprep.subr.mxu0 0.0
        %1821 = vmatpush1.msra.mxu0 0.0
        %1822 = vmatprep.subr.mxu0 0.0
        %1823 = vmatpush1.msra.mxu0 0.0
        %1824 = vmatprep.subr.mxu0 0.0
        %1825 = vmatpush1.msra.mxu0 0.0
        %1826 = vmatprep.subr.mxu0 0.0
        %1827 = vmatpush1.msra.mxu0 0.0
        %1828 = vmatprep.subr.mxu0 0.0
        %1829 = vmatpush1.msra.mxu0 0.0
        %1830 = vmatprep.subr.mxu0 0.0
        %1831 = vmatpush1.msra.mxu0 0.0
        %1832 = vmatprep.subr.mxu0 0.0
        %1833 = vmatpush1.msra.mxu0 0.0
        %1834 = vmatprep.subr.mxu0 0.0
        %1835 = vmatpush1.msra.mxu0 0.0
        %1836 = vmatprep.subr.mxu0 0.0
        %1837 = vmatpush1.msra.mxu0 0.0
        %1838 = vmatprep.subr.mxu0 0.0
        %1839 = vmatpush1.msra.mxu0 0.0
        %1840 = vmatprep.subr.mxu0 0.0
        %1841 = vmatpush1.msra.mxu0 0.0
        %1842 = vmatprep.subr.mxu0 0.0
        %1843 = vmatpush1.msra.mxu0 0.0
        %1844 = vmatprep.subr.mxu0 0.0
        %1845 = vmatpush1.msra.mxu0 0.0
        %1846 = vmatprep.subr.mxu0 0.0
        %1847 = vmatpush1.msra.mxu0 0.0
        %1848 = vmatprep.subr.mxu0 0.0
        %1849 = vmatpush1.msra.mxu0 0.0
        %1850 = vmatprep.subr.mxu0 0.0
        %1851 = vmatpush1.msra.mxu0 0.0
        %1852 = vmatprep.subr.mxu0 0.0
        %1853 = vmatpush1.msra.mxu0 0.0
        %1854 = vmatprep.subr.mxu0 0.0
        %1855 = vmatpush1.msra.mxu0 0.0
        %1856 = vmatprep.subr.mxu0 0.0
        %1857 = vmatpush1.msra.mxu0 0.0
        %1858 = vmatprep.subr.mxu0 0.0
        %1859 = vmatpush1.msra.mxu0 0.0
        %1860 = vmatprep.subr.mxu0 0.0
        %1861 = vmatpush1.msra.mxu0 0.0
        %1862 = vmatprep.subr.mxu0 0.0
        %1863 = vmatpush1.msra.mxu0 0.0
        %1864 = vmatprep.mubr.f32.mxu0 0.0
        %1865 = vmatmul.mubr.f32.gmra.mrb[0].mxu0 %v1798
        %v1866 = vpop.f32.mrb[0].mxu0
        %v1867 = vadd.f32 0.0, %v1866
        %v1868 = vpop.f32.mrb[0].mxu0
        %1869 = vdwg.mxu0
        %v1870 = vrcp.pop %v1240
        %v1871 = vrcp.pop %v1243
        %v1872 = vrcp.pop %v1246
        %v1873 = vrcp.pop %v1249
        %v1874 = vrcp.pop %v1252
        %v1875 = vrcp.pop %v1255
        %v1876 = vrcp.pop %v1258
        %v1877 = vrcp.pop %v1261
        %v1878 = vmul.f32 %v1335, %v1870
        %v1879 = vmul.f32 %v1411, %v1871
        %v1880 = vmul.f32 %v1487, %v1872
        %v1881 = vmul.f32 %v1563, %v1873
        %v1882 = vmul.f32 %v1639, %v1874
        %v1883 = vmul.f32 %v1715, %v1875
        %v1884 = vmul.f32 %v1791, %v1876
        %v1885 = vmul.f32 %v1867, %v1877
        %v1886 = vld [vmem:[#allocation7] sm:$0xff]
        %v1887 = vld [vmem:[#allocation7 + $0x8] sm:$0xff]
        %v1888 = vld [vmem:[#allocation7 + $0x10] sm:$0xff]
        %v1889 = vld [vmem:[#allocation7 + $0x18] sm:$0xff]
        %v1890 = vld [vmem:[#allocation7 + $0x20] sm:$0xff]
        %v1891 = vld [vmem:[#allocation7 + $0x28] sm:$0xff]
        %v1892 = vld [vmem:[#allocation7 + $0x30] sm:$0xff]
        %v1893 = vld [vmem:[#allocation7 + $0x38] sm:$0xff]
        %v1895 = vsel %vm575, %v1878, 0
        %v1898 = vsel %vm575, %v1879, 0
        %1900 = vmatprep.subr.mxu0 0.0
        %1901 = vmatpush1.msra.mxu0 %v1886
        %1902 = vmatprep.subr.mxu0 0.0
        %1903 = vmatpush1.msra.mxu0 %v1887
        %1904 = vmatprep.subr.mxu0 0.0
        %1905 = vmatpush1.msra.mxu0 0.0
        %1906 = vmatprep.subr.mxu0 0.0
        %1907 = vmatpush1.msra.mxu0 0.0
        %1908 = vmatprep.subr.mxu0 0.0
        %1909 = vmatpush1.msra.mxu0 0.0
        %1910 = vmatprep.subr.mxu0 0.0
        %1911 = vmatpush1.msra.mxu0 0.0
        %1912 = vmatprep.subr.mxu0 0.0
        %1913 = vmatpush1.msra.mxu0 0.0
        %1914 = vmatprep.subr.mxu0 0.0
        %1915 = vmatpush1.msra.mxu0 0.0
        %1916 = vmatprep.subr.mxu0 0.0
        %1917 = vmatpush1.msra.mxu0 0.0
        %1918 = vmatprep.subr.mxu0 0.0
        %1919 = vmatpush1.msra.mxu0 0.0
        %1920 = vmatprep.subr.mxu0 0.0
        %1921 = vmatpush1.msra.mxu0 0.0
        %1922 = vmatprep.subr.mxu0 0.0
        %1923 = vmatpush1.msra.mxu0 0.0
        %1924 = vmatprep.subr.mxu0 0.0
        %1925 = vmatpush1.msra.mxu0 0.0
        %1926 = vmatprep.subr.mxu0 0.0
        %1927 = vmatpush1.msra.mxu0 0.0
        %1928 = vmatprep.subr.mxu0 0.0
        %1929 = vmatpush1.msra.mxu0 0.0
        %1930 = vmatprep.subr.mxu0 0.0
        %1931 = vmatpush1.msra.mxu0 0.0
        %1932 = vmatprep.subr.mxu0 0.0
        %1933 = vmatpush1.msra.mxu0 0.0
        %1934 = vmatprep.subr.mxu0 0.0
        %1935 = vmatpush1.msra.mxu0 0.0
        %1936 = vmatprep.subr.mxu0 0.0
        %1937 = vmatpush1.msra.mxu0 0.0
        %1938 = vmatprep.subr.mxu0 0.0
        %1939 = vmatpush1.msra.mxu0 0.0
        %1940 = vmatprep.subr.mxu0 0.0
        %1941 = vmatpush1.msra.mxu0 0.0
        %1942 = vmatprep.subr.mxu0 0.0
        %1943 = vmatpush1.msra.mxu0 0.0
        %1944 = vmatprep.subr.mxu0 0.0
        %1945 = vmatpush1.msra.mxu0 0.0
        %1946 = vmatprep.subr.mxu0 0.0
        %1947 = vmatpush1.msra.mxu0 0.0
        %1948 = vmatprep.subr.mxu0 0.0
        %1949 = vmatpush1.msra.mxu0 0.0
        %1950 = vmatprep.subr.mxu0 0.0
        %1951 = vmatpush1.msra.mxu0 0.0
        %1952 = vmatprep.subr.mxu0 0.0
        %1953 = vmatpush1.msra.mxu0 0.0
        %1954 = vmatprep.subr.mxu0 0.0
        %1955 = vmatpush1.msra.mxu0 0.0
        %1956 = vmatprep.subr.mxu0 0.0
        %1957 = vmatpush1.msra.mxu0 0.0
        %1958 = vmatprep.subr.mxu0 0.0
        %1959 = vmatpush1.msra.mxu0 0.0
        %1960 = vmatprep.subr.mxu0 0.0
        %1961 = vmatpush1.msra.mxu0 0.0
        %1962 = vmatprep.subr.mxu0 0.0
        %1963 = vmatpush1.msra.mxu0 0.0
        %1964 = vmatprep.mubr.f32.mxu0 0.0
        %1965 = vmatmul.mubr.f32.gmra.mrb[0].mxu0 %v1895
        %v1966 = vpop.f32.mrb[0].mxu0
        %v1967 = vadd.f32 0.0, %v1966
        %v1968 = vpop.f32.mrb[0].mxu0
        %1969 = vmatprep.mubr.f32.mxu0 0.0
        %1970 = vmatmul.mubr.f32.gmra.mrb[0].mxu0 %v1898
        %v1971 = vpop.f32.mrb[0].mxu0
        %v1972 = vadd.f32 0.0, %v1971
        %v1973 = vpop.f32.mrb[0].mxu0
        %1974 = vdwg.mxu0
        %v1976 = vsel %vm575, %v1880, 0
        %v1979 = vsel %vm575, %v1881, 0
        %1981 = vmatprep.subr.mxu0 0.0
        %1982 = vmatpush1.msra.mxu0 %v1888
        %1983 = vmatprep.subr.mxu0 0.0
        %1984 = vmatpush1.msra.mxu0 %v1889
        %1985 = vmatprep.subr.mxu0 0.0
        %1986 = vmatpush1.msra.mxu0 0.0
        %1987 = vmatprep.subr.mxu0 0.0
        %1988 = vmatpush1.msra.mxu0 0.0
        %1989 = vmatprep.subr.mxu0 0.0
        %1990 = vmatpush1.msra.mxu0 0.0
        %1991 = vmatprep.subr.mxu0 0.0
        %1992 = vmatpush1.msra.mxu0 0.0
        %1993 = vmatprep.subr.mxu0 0.0
        %1994 = vmatpush1.msra.mxu0 0.0
        %1995 = vmatprep.subr.mxu0 0.0
        %1996 = vmatpush1.msra.mxu0 0.0
        %1997 = vmatprep.subr.mxu0 0.0
        %1998 = vmatpush1.msra.mxu0 0.0
        %1999 = vmatprep.subr.mxu0 0.0
        %2000 = vmatpush1.msra.mxu0 0.0
        %2001 = vmatprep.subr.mxu0 0.0
        %2002 = vmatpush1.msra.mxu0 0.0
        %2003 = vmatprep.subr.mxu0 0.0
        %2004 = vmatpush1.msra.mxu0 0.0
        %2005 = vmatprep.subr.mxu0 0.0
        %2006 = vmatpush1.msra.mxu0 0.0
        %2007 = vmatprep.subr.mxu0 0.0
        %2008 = vmatpush1.msra.mxu0 0.0
        %2009 = vmatprep.subr.mxu0 0.0
        %2010 = vmatpush1.msra.mxu0 0.0
        %2011 = vmatprep.subr.mxu0 0.0
        %2012 = vmatpush1.msra.mxu0 0.0
        %2013 = vmatprep.subr.mxu0 0.0
        %2014 = vmatpush1.msra.mxu0 0.0
        %2015 = vmatprep.subr.mxu0 0.0
        %2016 = vmatpush1.msra.mxu0 0.0
        %2017 = vmatprep.subr.mxu0 0.0
        %2018 = vmatpush1.msra.mxu0 0.0
        %2019 = vmatprep.subr.mxu0 0.0
        %2020 = vmatpush1.msra.mxu0 0.0
        %2021 = vmatprep.subr.mxu0 0.0
        %2022 = vmatpush1.msra.mxu0 0.0
        %2023 = vmatprep.subr.mxu0 0.0
        %2024 = vmatpush1.msra.mxu0 0.0
        %2025 = vmatprep.subr.mxu0 0.0
        %2026 = vmatpush1.msra.mxu0 0.0
        %2027 = vmatprep.subr.mxu0 0.0
        %2028 = vmatpush1.msra.mxu0 0.0
        %2029 = vmatprep.subr.mxu0 0.0
        %2030 = vmatpush1.msra.mxu0 0.0
        %2031 = vmatprep.subr.mxu0 0.0
        %2032 = vmatpush1.msra.mxu0 0.0
        %2033 = vmatprep.subr.mxu0 0.0
        %2034 = vmatpush1.msra.mxu0 0.0
        %2035 = vmatprep.subr.mxu0 0.0
        %2036 = vmatpush1.msra.mxu0 0.0
        %2037 = vmatprep.subr.mxu0 0.0
        %2038 = vmatpush1.msra.mxu0 0.0
        %2039 = vmatprep.subr.mxu0 0.0
        %2040 = vmatpush1.msra.mxu0 0.0
        %2041 = vmatprep.subr.mxu0 0.0
        %2042 = vmatpush1.msra.mxu0 0.0
        %2043 = vmatprep.subr.mxu0 0.0
        %2044 = vmatpush1.msra.mxu0 0.0
        %2045 = vmatprep.mubr.f32.mxu0 0.0
        %2046 = vmatmul.mubr.f32.gmra.mrb[0].mxu0 %v1976
        %v2047 = vpop.f32.mrb[0].mxu0
        %v2048 = vadd.f32 0.0, %v2047
        %v2049 = vpop.f32.mrb[0].mxu0
        %2050 = vmatprep.mubr.f32.mxu0 0.0
        %2051 = vmatmul.mubr.f32.gmra.mrb[0].mxu0 %v1979
        %v2052 = vpop.f32.mrb[0].mxu0
        %v2053 = vadd.f32 0.0, %v2052
        %v2054 = vpop.f32.mrb[0].mxu0
        %2055 = vdwg.mxu0
        %v2057 = vsel %vm575, %v1882, 0
        %v2060 = vsel %vm575, %v1883, 0
        %2062 = vmatprep.subr.mxu0 0.0
        %2063 = vmatpush1.msra.mxu0 %v1890
        %2064 = vmatprep.subr.mxu0 0.0
        %2065 = vmatpush1.msra.mxu0 %v1891
        %2066 = vmatprep.subr.mxu0 0.0
        %2067 = vmatpush1.msra.mxu0 0.0
        %2068 = vmatprep.subr.mxu0 0.0
        %2069 = vmatpush1.msra.mxu0 0.0
        %2070 = vmatprep.subr.mxu0 0.0
        %2071 = vmatpush1.msra.mxu0 0.0
        %2072 = vmatprep.subr.mxu0 0.0
        %2073 = vmatpush1.msra.mxu0 0.0
        %2074 = vmatprep.subr.mxu0 0.0
        %2075 = vmatpush1.msra.mxu0 0.0
        %2076 = vmatprep.subr.mxu0 0.0
        %2077 = vmatpush1.msra.mxu0 0.0
        %2078 = vmatprep.subr.mxu0 0.0
        %2079 = vmatpush1.msra.mxu0 0.0
        %2080 = vmatprep.subr.mxu0 0.0
        %2081 = vmatpush1.msra.mxu0 0.0
        %2082 = vmatprep.subr.mxu0 0.0
        %2083 = vmatpush1.msra.mxu0 0.0
        %2084 = vmatprep.subr.mxu0 0.0
        %2085 = vmatpush1.msra.mxu0 0.0
        %2086 = vmatprep.subr.mxu0 0.0
        %2087 = vmatpush1.msra.mxu0 0.0
        %2088 = vmatprep.subr.mxu0 0.0
        %2089 = vmatpush1.msra.mxu0 0.0
        %2090 = vmatprep.subr.mxu0 0.0
        %2091 = vmatpush1.msra.mxu0 0.0
        %2092 = vmatprep.subr.mxu0 0.0
        %2093 = vmatpush1.msra.mxu0 0.0
        %2094 = vmatprep.subr.mxu0 0.0
        %2095 = vmatpush1.msra.mxu0 0.0
        %2096 = vmatprep.subr.mxu0 0.0
        %2097 = vmatpush1.msra.mxu0 0.0
        %2098 = vmatprep.subr.mxu0 0.0
        %2099 = vmatpush1.msra.mxu0 0.0
        %2100 = vmatprep.subr.mxu0 0.0
        %2101 = vmatpush1.msra.mxu0 0.0
        %2102 = vmatprep.subr.mxu0 0.0
        %2103 = vmatpush1.msra.mxu0 0.0
        %2104 = vmatprep.subr.mxu0 0.0
        %2105 = vmatpush1.msra.mxu0 0.0
        %2106 = vmatprep.subr.mxu0 0.0
        %2107 = vmatpush1.msra.mxu0 0.0
        %2108 = vmatprep.subr.mxu0 0.0
        %2109 = vmatpush1.msra.mxu0 0.0
        %2110 = vmatprep.subr.mxu0 0.0
        %2111 = vmatpush1.msra.mxu0 0.0
        %2112 = vmatprep.subr.mxu0 0.0
        %2113 = vmatpush1.msra.mxu0 0.0
        %2114 = vmatprep.subr.mxu0 0.0
        %2115 = vmatpush1.msra.mxu0 0.0
        %2116 = vmatprep.subr.mxu0 0.0
        %2117 = vmatpush1.msra.mxu0 0.0
        %2118 = vmatprep.subr.mxu0 0.0
        %2119 = vmatpush1.msra.mxu0 0.0
        %2120 = vmatprep.subr.mxu0 0.0
        %2121 = vmatpush1.msra.mxu0 0.0
        %2122 = vmatprep.subr.mxu0 0.0
        %2123 = vmatpush1.msra.mxu0 0.0
        %2124 = vmatprep.subr.mxu0 0.0
        %2125 = vmatpush1.msra.mxu0 0.0
        %2126 = vmatprep.mubr.f32.mxu0 0.0
        %2127 = vmatmul.mubr.f32.gmra.mrb[0].mxu0 %v2057
        %v2128 = vpop.f32.mrb[0].mxu0
        %v2129 = vadd.f32 0.0, %v2128
        %v2130 = vpop.f32.mrb[0].mxu0
        %2131 = vmatprep.mubr.f32.mxu0 0.0
        %2132 = vmatmul.mubr.f32.gmra.mrb[0].mxu0 %v2060
        %v2133 = vpop.f32.mrb[0].mxu0
        %v2134 = vadd.f32 0.0, %v2133
        %v2135 = vpop.f32.mrb[0].mxu0
        %2136 = vdwg.mxu0
        %v2138 = vsel %vm575, %v1884, 0
        %v2141 = vsel %vm575, %v1885, 0
        %2143 = vmatprep.subr.mxu0 0.0
        %2144 = vmatpush1.msra.mxu0 %v1892
        %2145 = vmatprep.subr.mxu0 0.0
        %2146 = vmatpush1.msra.mxu0 %v1893
        %2147 = vmatprep.subr.mxu0 0.0
        %2148 = vmatpush1.msra.mxu0 0.0
        %2149 = vmatprep.subr.mxu0 0.0
        %2150 = vmatpush1.msra.mxu0 0.0
        %2151 = vmatprep.subr.mxu0 0.0
        %2152 = vmatpush1.msra.mxu0 0.0
        %2153 = vmatprep.subr.mxu0 0.0
        %2154 = vmatpush1.msra.mxu0 0.0
        %2155 = vmatprep.subr.mxu0 0.0
        %2156 = vmatpush1.msra.mxu0 0.0
        %2157 = vmatprep.subr.mxu0 0.0
        %2158 = vmatpush1.msra.mxu0 0.0
        %2159 = vmatprep.subr.mxu0 0.0
        %2160 = vmatpush1.msra.mxu0 0.0
        %2161 = vmatprep.subr.mxu0 0.0
        %2162 = vmatpush1.msra.mxu0 0.0
        %2163 = vmatprep.subr.mxu0 0.0
        %2164 = vmatpush1.msra.mxu0 0.0
        %2165 = vmatprep.subr.mxu0 0.0
        %2166 = vmatpush1.msra.mxu0 0.0
        %2167 = vmatprep.subr.mxu0 0.0
        %2168 = vmatpush1.msra.mxu0 0.0
        %2169 = vmatprep.subr.mxu0 0.0
        %2170 = vmatpush1.msra.mxu0 0.0
        %2171 = vmatprep.subr.mxu0 0.0
        %2172 = vmatpush1.msra.mxu0 0.0
        %2173 = vmatprep.subr.mxu0 0.0
        %2174 = vmatpush1.msra.mxu0 0.0
        %2175 = vmatprep.subr.mxu0 0.0
        %2176 = vmatpush1.msra.mxu0 0.0
        %2177 = vmatprep.subr.mxu0 0.0
        %2178 = vmatpush1.msra.mxu0 0.0
        %2179 = vmatprep.subr.mxu0 0.0
        %2180 = vmatpush1.msra.mxu0 0.0
        %2181 = vmatprep.subr.mxu0 0.0
        %2182 = vmatpush1.msra.mxu0 0.0
        %2183 = vmatprep.subr.mxu0 0.0
        %2184 = vmatpush1.msra.mxu0 0.0
        %2185 = vmatprep.subr.mxu0 0.0
        %2186 = vmatpush1.msra.mxu0 0.0
        %2187 = vmatprep.subr.mxu0 0.0
        %2188 = vmatpush1.msra.mxu0 0.0
        %2189 = vmatprep.subr.mxu0 0.0
        %2190 = vmatpush1.msra.mxu0 0.0
        %2191 = vmatprep.subr.mxu0 0.0
        %2192 = vmatpush1.msra.mxu0 0.0
        %2193 = vmatprep.subr.mxu0 0.0
        %2194 = vmatpush1.msra.mxu0 0.0
        %2195 = vmatprep.subr.mxu0 0.0
        %2196 = vmatpush1.msra.mxu0 0.0
        %2197 = vmatprep.subr.mxu0 0.0
        %2198 = vmatpush1.msra.mxu0 0.0
        %2199 = vmatprep.subr.mxu0 0.0
        %2200 = vmatpush1.msra.mxu0 0.0
        %2201 = vmatprep.subr.mxu0 0.0
        %2202 = vmatpush1.msra.mxu0 0.0
        %2203 = vmatprep.subr.mxu0 0.0
        %2204 = vmatpush1.msra.mxu0 0.0
        %2205 = vmatprep.subr.mxu0 0.0
        %2206 = vmatpush1.msra.mxu0 0.0
        %2207 = vmatprep.mubr.f32.mxu0 0.0
        %2208 = vmatmul.mubr.f32.gmra.mrb[0].mxu0 %v2138
        %v2209 = vpop.f32.mrb[0].mxu0
        %v2210 = vadd.f32 0.0, %v2209
        %v2211 = vpop.f32.mrb[0].mxu0
        %2212 = vmatprep.mubr.f32.mxu0 0.0
        %2213 = vmatmul.mubr.f32.gmra.mrb[0].mxu0 %v2141
        %v2214 = vpop.f32.mrb[0].mxu0
        %v2215 = vadd.f32 0.0, %v2214
        %v2216 = vpop.f32.mrb[0].mxu0
        %2217 = vdwg.mxu0
        %v2218 = vadd.f32 %v1967, %v2048
        %v2219 = vadd.f32 %v1972, %v2053
        %v2220 = vadd.f32 %v2218, %v2129
        %v2221 = vadd.f32 %v2219, %v2134
        %v2222 = vadd.f32 %v2220, %v2210
        %v2223 = vadd.f32 %v2221, %v2215
        %v2224 = vld [vmem:[%s3] sm:$0x1]
        %v2226 = vlaneseq
        %v2227 = vshrl.u32 %v2226, 7
        %v2228 = vsub.s32 0, %v2227
        %v2229 = vrot.slane %v2224, %v2228
        %v2231 = vadd.f32 %v2222, %v2229
        %v2232 = vadd.f32 %v2223, %v2229
        %2233 = vst.msk [vmem:[%s244] sm:$0xff] %vm265, %v2231
        %2234 = vst.msk [vmem:[%s244 + $0x8] sm:$0xff] %vm265, %v2232
        %s2235 = sand.u32 %s119, 1
        %s2236 = scalar_lea.sflag [#allocation4], %s2235
        %s2237 = sand.u32 %s119, 1
        %s2238 = smul.addr %s2237, 16
        %s2239 = scalar_lea.vmem [#allocation8], %s2238
        // Predicated region
        $region49: #{tpu_custom_call.1} parent=35 // pred_check
          %p2240 = pneg %p129
        $region50: #{tpu_custom_call.1} parent=35 // pred_check_branch
          %2242 = sbr.rel (%p2240) target = $region52
        $region51: #{tpu_custom_call.1} parent=35 // pred_region
          %s2243 = smul.u32 2, %s22
          %s2245 = ssub.s32 256, 256
          %2246 = vsyncadd %s2236, %s2245
          %s2247 = smul.addr %s2243, 128
          %s2248 = scalar_lea.hbm %s4, %s2247
          %s2249 = sshll.u32 %s2239, 4
          %s2250 = int_to_ptr.vmem [resolvable:$true] %s2249
          %2255 = dma.vmem_to_hbm [thread:$0]  %s2250, 256, %s2248, %s2236, 128, 128, 8
        $region52: #{tpu_custom_call.1} parent=35 // pred_fallthru
          _
      $region36: #{tpu_custom_call.1} parent=5 // pred_fallthru
        _
      %p2256 = scmp.le.s32.totalorder 2, %s17
      // Predicated region
      $region53: #{tpu_custom_call.1} parent=5 // pred_check
        %p2257 = pneg %p2256
      $region54: #{tpu_custom_call.1} parent=5 // pred_check_branch
        %2259 = sbr.rel (%p2257) target = $region56
      $region55: #{tpu_custom_call.1} parent=5 // pred_region
        %s2260 = ssub.s32 %s17, 2
        // Predicated region
        $region57: #{tpu_custom_call.1} parent=55 // pred_check
          %p2261 = pneg %p135
        $region58: #{tpu_custom_call.1} parent=55 // pred_check_branch
          %2263 = sbr.rel (%p2261) target = $region60
        $region59: #{tpu_custom_call.1} parent=55 // pred_region
          %s2264 = sand.u32 %s120, 1
          %s2265 = scalar_lea.sflag [#allocation4], %s2264
          %s2266 = sand.u32 %s120, 1
          %s2267 = smul.addr %s2266, 16
          %s2268 = scalar_lea.vmem [#allocation8], %s2267
          %2269 = dma.done %s2265, 256
        $region60: #{tpu_custom_call.1} parent=55 // pred_fallthru
          _
      $region56: #{tpu_custom_call.1} parent=5 // pred_fallthru
        _
    $region6: #{tpu_custom_call.1} parent=1 // loop_footer
      %s21 = sadd.s32 1, %s17
    $region7: #{tpu_custom_call.1} parent=1 // loop_footer_branch
      %16 = sbr.rel target = $region3
    $region8: #{tpu_custom_call.1} parent=1 // loop_exit
      _
    %2270 = vsyncpa [#allocation3], 1
    %s2271 = scalar_lea.sflag [#allocation3], 1
    %2272 = vsyncpa %s2271, 1
    %2273 = vsyncpa [#allocation6], 1
    %2274 = vsyncpa [#allocation4], 1
    %s2275 = scalar_lea.sflag [#allocation4], 1
    %2276 = vsyncpa %s2275, 1

</llo_original>
